<compile_context>
chip_gen: v7x
topology: tpu7x:2x2x1
jax: 0.10.0
libtpu: 0.0.40
codegen_flags: <defaults>
</compile_context>

<pallas_src>
import numpy as np
import jax
import jax.numpy as jnp
from jax.experimental import pallas as pl
from jax.experimental.pallas import tpu as pltpu


K = 3  # conv kernel size fixed by the module


# ---------------------------------------------------------------------------
# Host-side tiny constants (O(H^2 + W^2), a few KiB at most)
# ---------------------------------------------------------------------------
def _border_masks(n_ch, hh, ww):
    """0/1 validity masks for the 3x3 SAME conv on a channel-stacked (n_ch*hh, ww)
    image.  rmask[dy, r, 0]==0 on rows that a vertical shift by (dy-1) fills with
    zero padding (or with a neighbouring channel after the roll); cmask likewise
    for columns."""
    rmask = np.zeros((K, n_ch * hh, 1), np.float32)
    cmask = np.zeros((K, 1, ww), np.float32)
    for dy in range(K):
        for r in range(n_ch * hh):
            h = r % hh
            rmask[dy, r, 0] = 1.0 if 0 <= h + dy - 1 < hh else 0.0
    for dx in range(K):
        for w in range(ww):
            cmask[dx, 0, w] = 1.0 if 0 <= w + dx - 1 < ww else 0.0
    return jnp.asarray(rmask), jnp.asarray(cmask)


def _subsample_selectors(n_ch, hh, ww):
    """Stride-2 subsampling matrices for the 2x2 max-pool.
    sel_w: (ww, ww//2) keeps even columns; sel_h: (n_ch*hh//2, n_ch*hh) keeps even
    rows inside every channel block (block-diagonal)."""
    h2, w2 = hh // 2, ww // 2
    sel_w = np.zeros((ww, w2), np.float32)
    for j in range(w2):
        sel_w[2 * j, j] = 1.0
    sel_h = np.zeros((n_ch * h2, n_ch * hh), np.float32)
    for c in range(n_ch):
        for i in range(h2):
            sel_h[c * h2 + i, c * hh + 2 * i] = 1.0
    return jnp.asarray(sel_w), jnp.asarray(sel_h)


# ---------------------------------------------------------------------------
# Kernel
# ---------------------------------------------------------------------------
def _make_kernel(B, Cin, C1, H, W, neg_slope):
    H2, W2 = H // 2, W // 2

    def leaky(v):
        return jnp.where(v > 0, v, neg_slope * v)

    def shifted(img, dy, dx, nrows, ncols):
        """out[r, w] = img[r + dy - 1, w + dx - 1] (wrapped; wrap killed by masks)."""
        out = img
        sr = (1 - dy) % nrows
        if sr:
            out = pltpu.roll(out, shift=sr, axis=0)
        sc = (1 - dx) % ncols
        if sc:
            out = pltpu.roll(out, shift=sc, axis=1)
        return out

    def kernel(x_ref, w1_ref, w2_ref, rm1_ref, cm1_ref, rm2_ref, cm2_ref,
               sw1_ref, sh1_ref, sw2_ref, sh2_ref, o_ref):
        f32 = jnp.float32

        # ---- hoisted once per grid step: weight scalars (SMEM) + per-tap masks
        def widx(co, ci, dy, dx, cin):      # OIHW row-major flatten
            return ((co * cin + ci) * K + dy) * K + dx

        w1 = [[[[w1_ref[widx(co, ci, dy, dx, Cin)] for dx in range(K)]
                for dy in range(K)] for ci in range(Cin)] for co in range(C1)]
        w2 = [[[[w2_ref[widx(co, ci, dy, dx, C1)] for dx in range(K)]
                for dy in range(K)] for ci in range(C1)] for co in range(1)]

        def tap_masks(rm_ref, cm_ref):
            masks = []
            for dy in range(K):
                for dx in range(K):
                    if dy == 1 and dx == 1:
                        masks.append(None)                 # centre tap: no border
                    elif dy == 1:
                        masks.append(cm_ref[dx])           # (1, ncols)
                    elif dx == 1:
                        masks.append(rm_ref[dy])           # (nrows, 1)
                    else:
                        masks.append(rm_ref[dy] * cm_ref[dx])
            return masks

        masks1 = tap_masks(rm1_ref, cm1_ref)
        masks2 = tap_masks(rm2_ref, cm2_ref)
        sw1, sh1 = sw1_ref[...], sh1_ref[...]
        sw2, sh2 = sw2_ref[...], sh2_ref[...]

        def conv3x3(src, w, cin, cout, hh, ncols, masks):
            """Direct 3x3 SAME conv on a channel-stacked (cin*hh, ncols) map.
            Shifts: whole-array rolls (XLU) + 0/1 border masks (VPU);
            channel contraction: cin*cout*9 scalar-broadcast FMAs (VPU)."""
            acc = [jnp.zeros((hh, ncols), f32) for _ in range(cout)]
            nrows = cin * hh
            for dy in range(K):
                for dx in range(K):
                    t = dy * K + dx
                    xt = shifted(src, dy, dx, nrows, ncols)
                    if masks[t] is not None:
                        xt = xt * masks[t]
                    for ci in range(cin):
                        xc = xt[ci * hh:(ci + 1) * hh, :]   # 8-aligned sublane slice
                        for co in range(cout):
                            acc[co] = acc[co] + w[co][ci][dy][dx] * xc
            return acc

        def maxpool2x2(y, sel_h, sel_w, nrows, ncols):
            """2x2/2 max-pool of a channel-stacked (nrows, ncols) map: neighbour max
            via rolls, stride-2 subsampling via tiny one-hot matmuls."""
            m = jnp.maximum(y, pltpu.roll(y, shift=ncols - 1, axis=1))   # + right nbr
            m = jnp.maximum(m, pltpu.roll(m, shift=nrows - 1, axis=0))   # + lower nbr
            m = jnp.dot(m, sel_w, preferred_element_type=jnp.float32)    # even cols
            return jnp.dot(sel_h, m, preferred_element_type=jnp.float32)  # even rows

        for b in range(B):                                  # static unroll over samples
            x = x_ref[b].astype(f32)                        # (Cin*H, W)
            y1 = leaky(jnp.concatenate(
                conv3x3(x, w1, Cin, C1, H, W, masks1), axis=0))       # (C1*H, W)
            p1 = maxpool2x2(y1, sh1, sw1, C1 * H, W)                  # (C1*H2, W2)
            y2 = leaky(conv3x3(p1, w2, C1, 1, H2, W2, masks2)[0])     # (H2, W2)
            p2 = maxpool2x2(y2, sh2, sw2, H2, W2)                     # (H4, W4)
            o_ref[b] = p2.astype(o_ref.dtype)

    return kernel


# ---------------------------------------------------------------------------
# Wrapper
# ---------------------------------------------------------------------------
def downsample(x_nchw, w1_oihw, w2_oihw, *, neg_slope=0.2):
    """x: (N, Cin, H, W) f32; w1: (Cin//4, Cin, 3, 3); w2: (1, Cin//4, 3, 3).
    Returns (N, 1, H//4, W//4) f32, matching the PyTorch DownSample module."""
    N, Cin, H, W = x_nchw.shape
    C1 = w1_oihw.shape[0]
    assert w1_oihw.shape == (C1, Cin, K, K) and w2_oihw.shape == (1, C1, K, K)
    assert H % 4 == 0 and W % 4 == 0, "two 2x2/2 max-pools need H, W divisible by 4"

    H2, W2, H4, W4 = H // 2, W // 2, H // 4, W // 4

    # free metadata reshape (no transpose / pad / extra HBM pass over x)
    x2d = x_nchw.reshape(N, Cin * H, W).astype(jnp.float32)
    w1_flat = w1_oihw.reshape(-1).astype(jnp.float32)       # OIHW order, SMEM scalars
    w2_flat = w2_oihw.reshape(-1).astype(jnp.float32)

    rmask1, cmask1 = _border_masks(Cin, H, W)
    rmask2, cmask2 = _border_masks(C1, H2, W2)
    selw1, selh1 = _subsample_selectors(C1, H, W)
    selw2, selh2 = _subsample_selectors(1, H2, W2)

    # samples per grid step: amortize per-step overhead for big N, keep grid >= 2
    B = 1
    for cand in (8, 4, 2):
        if N % cand == 0 and N // cand >= 2:
            B = cand
            break

    kernel = _make_kernel(B, Cin, C1, H, W, neg_slope)

    flops = N * (2 * K * K * Cin * C1 * H * W                    # conv1
                 + 2 * K * K * C1 * 1 * H2 * W2                  # conv2
                 + 2 * C1 * H * W * W2 + 2 * (C1 * H2) * (C1 * H) * W2   # pool1 subsample
                 + 2 * H2 * W2 * W4 + 2 * H4 * H2 * W4)                  # pool2 subsample
    bytes_accessed = 4 * (x2d.size + w1_flat.size + w2_flat.size + N * H4 * W4
                          + rmask1.size + cmask1.size + rmask2.size + cmask2.size
                          + selw1.size + selh1.size + selw2.size + selh2.size)

    out = pl.pallas_call(
        kernel,
        out_shape=jax.ShapeDtypeStruct((N, H4, W4), jnp.float32),
        grid=(N // B,),
        in_specs=[
            pl.BlockSpec((B, Cin * H, W), lambda i: (i, 0, 0)),                 # x
            pl.BlockSpec((C1 * Cin * K * K,), lambda i: (0,),
                         memory_space=pltpu.MemorySpace.SMEM),                  # w1
            pl.BlockSpec((1 * C1 * K * K,), lambda i: (0,),
                         memory_space=pltpu.MemorySpace.SMEM),                  # w2
            pl.BlockSpec((K, Cin * H, 1), lambda i: (0, 0, 0)),                 # rmask1
            pl.BlockSpec((K, 1, W), lambda i: (0, 0, 0)),                       # cmask1
            pl.BlockSpec((K, C1 * H2, 1), lambda i: (0, 0, 0)),                 # rmask2
            pl.BlockSpec((K, 1, W2), lambda i: (0, 0, 0)),                      # cmask2
            pl.BlockSpec((W, W2), lambda i: (0, 0)),                            # selw1
            pl.BlockSpec((C1 * H2, C1 * H), lambda i: (0, 0)),                  # selh1
            pl.BlockSpec((W2, W4), lambda i: (0, 0)),                           # selw2
            pl.BlockSpec((H4, H2), lambda i: (0, 0)),                           # selh2
        ],
        out_specs=pl.BlockSpec((B, H4, W4), lambda i: (i, 0, 0)),
        compiler_params=pltpu.CompilerParams(dimension_semantics=("parallel",)),
        cost_estimate=pl.CostEstimate(flops=int(flops), transcendentals=0,
                                      bytes_accessed=int(bytes_accessed)),
    )(x2d, w1_flat, w2_flat, rmask1, cmask1, rmask2, cmask2,
      selw1, selh1, selw2, selh2)

    # (N, H4, W4) -> (N, 1, H4, W4): free metadata reshape outside the kernel
    return out.reshape(N, 1, H4, W4)


# ---------------------------------------------------------------------------
# Pure-JAX reference mimicking the PyTorch module (correctness check)
# ---------------------------------------------------------------------------
def _reference(x, w1, w2, neg_slope=0.2):
    def conv(v, w):
        return jax.lax.conv_general_dilated(
            v, w, window_strides=(1, 1), padding=((1, 1), (1, 1)),
            dimension_numbers=("NCHW", "OIHW", "NCHW"))

    def lrelu(v):
        return jnp.where(v > 0, v, neg_slope * v)

    def pool(v):
        return jax.lax.reduce_window(v, -jnp.inf, jax.lax.max,
                                     (1, 1, 2, 2), (1, 1, 2, 2), "VALID")

    y = pool(lrelu(conv(x, w1)))
    y = pool(lrelu(conv(y, w2)))
    return y


if __name__ == "__main__":
    key = jax.random.PRNGKey(0)
    kx, k1, k2 = jax.random.split(key, 3)

    N, Cin, H, W = 2, 8, 16, 16
    C1 = Cin // 4  # DownSample: Conv2d(in_channels, in_channels // 4, ...)

    x = jax.random.normal(kx, (N, Cin, H, W), dtype=jnp.float32)
    w1 = 0.2 * jax.random.normal(k1, (C1, Cin, 3, 3), dtype=jnp.float32)  # conv1, bias=False
    w2 = 0.2 * jax.random.normal(k2, (1, C1, 3, 3), dtype=jnp.float32)    # conv2, bias=False

    out = jax.block_until_ready(downsample(x, w1, w2))

    ref = _reference(x, w1, w2)
    assert out.shape == (N, 1, H // 4, W // 4)
    assert jnp.allclose(out, ref, rtol=1e-4, atol=1e-4), "mismatch vs reference"

    print("KERNEL_OK")
</pallas_src>

<mosaic_0001>
module attributes {stable_mosaic.version = 11 : i64} {
  func.func @kernel(%arg0: i32, %arg1: memref<1x128x16xf32, #tpu.memory_space<vmem>>, %arg2: memref<144xf32, #tpu.memory_space<smem>>, %arg3: memref<18xf32, #tpu.memory_space<smem>>, %arg4: memref<3x128x1xf32, #tpu.memory_space<vmem>>, %arg5: memref<3x1x16xf32, #tpu.memory_space<vmem>>, %arg6: memref<3x16x1xf32, #tpu.memory_space<vmem>>, %arg7: memref<3x1x8xf32, #tpu.memory_space<vmem>>, %arg8: memref<16x8xf32, #tpu.memory_space<vmem>>, %arg9: memref<16x32xf32, #tpu.memory_space<vmem>>, %arg10: memref<8x4xf32, #tpu.memory_space<vmem>>, %arg11: memref<4x8xf32, #tpu.memory_space<vmem>>, %arg12: memref<1x4x4xf32, #tpu.memory_space<vmem>>) attributes {dimension_semantics = [#tpu.dimension_semantics<parallel>], iteration_bounds = array<i64: 2>, scalar_prefetch = 0 : i64, scratch_operands = 0 : i64, tpu.core_type = #tpu.core_type<tc>, window_params = [{transform_indices = @transform_0, window_bounds = array<i64: 1, 128, 16>}, {transform_indices = @transform_1, window_bounds = array<i64: 144>}, {transform_indices = @transform_2, window_bounds = array<i64: 18>}, {pipeline_mode = #tpu.pipeline_mode<synchronous>, transform_indices = @transform_3, window_bounds = array<i64: 3, 128, 1>}, {pipeline_mode = #tpu.pipeline_mode<synchronous>, transform_indices = @transform_4, window_bounds = array<i64: 3, 1, 16>}, {pipeline_mode = #tpu.pipeline_mode<synchronous>, transform_indices = @transform_5, window_bounds = array<i64: 3, 16, 1>}, {pipeline_mode = #tpu.pipeline_mode<synchronous>, transform_indices = @transform_6, window_bounds = array<i64: 3, 1, 8>}, {pipeline_mode = #tpu.pipeline_mode<synchronous>, transform_indices = @transform_7, window_bounds = array<i64: 16, 8>}, {pipeline_mode = #tpu.pipeline_mode<synchronous>, transform_indices = @transform_8, window_bounds = array<i64: 16, 32>}, {pipeline_mode = #tpu.pipeline_mode<synchronous>, transform_indices = @transform_9, window_bounds = array<i64: 8, 4>}, {pipeline_mode = #tpu.pipeline_mode<synchronous>, transform_indices = @transform_10, window_bounds = array<i64: 4, 8>}, {transform_indices = @transform_11, window_bounds = array<i64: 1, 4, 4>}]} {
    %c0 = arith.constant 0 : index
    %0 = memref.load %arg2[%c0] : memref<144xf32, #tpu.memory_space<smem>>
    %c1 = arith.constant 1 : index
    %1 = memref.load %arg2[%c1] : memref<144xf32, #tpu.memory_space<smem>>
    %c2 = arith.constant 2 : index
    %2 = memref.load %arg2[%c2] : memref<144xf32, #tpu.memory_space<smem>>
    %c3 = arith.constant 3 : index
    %3 = memref.load %arg2[%c3] : memref<144xf32, #tpu.memory_space<smem>>
    %c4 = arith.constant 4 : index
    %4 = memref.load %arg2[%c4] : memref<144xf32, #tpu.memory_space<smem>>
    %c5 = arith.constant 5 : index
    %5 = memref.load %arg2[%c5] : memref<144xf32, #tpu.memory_space<smem>>
    %c6 = arith.constant 6 : index
    %6 = memref.load %arg2[%c6] : memref<144xf32, #tpu.memory_space<smem>>
    %c7 = arith.constant 7 : index
    %7 = memref.load %arg2[%c7] : memref<144xf32, #tpu.memory_space<smem>>
    %c8 = arith.constant 8 : index
    %8 = memref.load %arg2[%c8] : memref<144xf32, #tpu.memory_space<smem>>
    %c9 = arith.constant 9 : index
    %9 = memref.load %arg2[%c9] : memref<144xf32, #tpu.memory_space<smem>>
    %c10 = arith.constant 10 : index
    %10 = memref.load %arg2[%c10] : memref<144xf32, #tpu.memory_space<smem>>
    %c11 = arith.constant 11 : index
    %11 = memref.load %arg2[%c11] : memref<144xf32, #tpu.memory_space<smem>>
    %c12 = arith.constant 12 : index
    %12 = memref.load %arg2[%c12] : memref<144xf32, #tpu.memory_space<smem>>
    %c13 = arith.constant 13 : index
    %13 = memref.load %arg2[%c13] : memref<144xf32, #tpu.memory_space<smem>>
    %c14 = arith.constant 14 : index
    %14 = memref.load %arg2[%c14] : memref<144xf32, #tpu.memory_space<smem>>
    %c15 = arith.constant 15 : index
    %15 = memref.load %arg2[%c15] : memref<144xf32, #tpu.memory_space<smem>>
    %c16 = arith.constant 16 : index
    %16 = memref.load %arg2[%c16] : memref<144xf32, #tpu.memory_space<smem>>
    %c17 = arith.constant 17 : index
    %17 = memref.load %arg2[%c17] : memref<144xf32, #tpu.memory_space<smem>>
    %c18 = arith.constant 18 : index
    %18 = memref.load %arg2[%c18] : memref<144xf32, #tpu.memory_space<smem>>
    %c19 = arith.constant 19 : index
    %19 = memref.load %arg2[%c19] : memref<144xf32, #tpu.memory_space<smem>>
    %c20 = arith.constant 20 : index
    %20 = memref.load %arg2[%c20] : memref<144xf32, #tpu.memory_space<smem>>
    %c21 = arith.constant 21 : index
    %21 = memref.load %arg2[%c21] : memref<144xf32, #tpu.memory_space<smem>>
    %c22 = arith.constant 22 : index
    %22 = memref.load %arg2[%c22] : memref<144xf32, #tpu.memory_space<smem>>
    %c23 = arith.constant 23 : index
    %23 = memref.load %arg2[%c23] : memref<144xf32, #tpu.memory_space<smem>>
    %c24 = arith.constant 24 : index
    %24 = memref.load %arg2[%c24] : memref<144xf32, #tpu.memory_space<smem>>
    %c25 = arith.constant 25 : index
    %25 = memref.load %arg2[%c25] : memref<144xf32, #tpu.memory_space<smem>>
    %c26 = arith.constant 26 : index
    %26 = memref.load %arg2[%c26] : memref<144xf32, #tpu.memory_space<smem>>
    %c27 = arith.constant 27 : index
    %27 = memref.load %arg2[%c27] : memref<144xf32, #tpu.memory_space<smem>>
    %c28 = arith.constant 28 : index
    %28 = memref.load %arg2[%c28] : memref<144xf32, #tpu.memory_space<smem>>
    %c29 = arith.constant 29 : index
    %29 = memref.load %arg2[%c29] : memref<144xf32, #tpu.memory_space<smem>>
    %c30 = arith.constant 30 : index
    %30 = memref.load %arg2[%c30] : memref<144xf32, #tpu.memory_space<smem>>
    %c31 = arith.constant 31 : index
    %31 = memref.load %arg2[%c31] : memref<144xf32, #tpu.memory_space<smem>>
    %c32 = arith.constant 32 : index
    %32 = memref.load %arg2[%c32] : memref<144xf32, #tpu.memory_space<smem>>
    %c33 = arith.constant 33 : index
    %33 = memref.load %arg2[%c33] : memref<144xf32, #tpu.memory_space<smem>>
    %c34 = arith.constant 34 : index
    %34 = memref.load %arg2[%c34] : memref<144xf32, #tpu.memory_space<smem>>
    %c35 = arith.constant 35 : index
    %35 = memref.load %arg2[%c35] : memref<144xf32, #tpu.memory_space<smem>>
    %c36 = arith.constant 36 : index
    %36 = memref.load %arg2[%c36] : memref<144xf32, #tpu.memory_space<smem>>
    %c37 = arith.constant 37 : index
    %37 = memref.load %arg2[%c37] : memref<144xf32, #tpu.memory_space<smem>>
    %c38 = arith.constant 38 : index
    %38 = memref.load %arg2[%c38] : memref<144xf32, #tpu.memory_space<smem>>
    %c39 = arith.constant 39 : index
    %39 = memref.load %arg2[%c39] : memref<144xf32, #tpu.memory_space<smem>>
    %c40 = arith.constant 40 : index
    %40 = memref.load %arg2[%c40] : memref<144xf32, #tpu.memory_space<smem>>
    %c41 = arith.constant 41 : index
    %41 = memref.load %arg2[%c41] : memref<144xf32, #tpu.memory_space<smem>>
    %c42 = arith.constant 42 : index
    %42 = memref.load %arg2[%c42] : memref<144xf32, #tpu.memory_space<smem>>
    %c43 = arith.constant 43 : index
    %43 = memref.load %arg2[%c43] : memref<144xf32, #tpu.memory_space<smem>>
    %c44 = arith.constant 44 : index
    %44 = memref.load %arg2[%c44] : memref<144xf32, #tpu.memory_space<smem>>
    %c45 = arith.constant 45 : index
    %45 = memref.load %arg2[%c45] : memref<144xf32, #tpu.memory_space<smem>>
    %c46 = arith.constant 46 : index
    %46 = memref.load %arg2[%c46] : memref<144xf32, #tpu.memory_space<smem>>
    %c47 = arith.constant 47 : index
    %47 = memref.load %arg2[%c47] : memref<144xf32, #tpu.memory_space<smem>>
    %c48 = arith.constant 48 : index
    %48 = memref.load %arg2[%c48] : memref<144xf32, #tpu.memory_space<smem>>
    %c49 = arith.constant 49 : index
    %49 = memref.load %arg2[%c49] : memref<144xf32, #tpu.memory_space<smem>>
    %c50 = arith.constant 50 : index
    %50 = memref.load %arg2[%c50] : memref<144xf32, #tpu.memory_space<smem>>
    %c51 = arith.constant 51 : index
    %51 = memref.load %arg2[%c51] : memref<144xf32, #tpu.memory_space<smem>>
    %c52 = arith.constant 52 : index
    %52 = memref.load %arg2[%c52] : memref<144xf32, #tpu.memory_space<smem>>
    %c53 = arith.constant 53 : index
    %53 = memref.load %arg2[%c53] : memref<144xf32, #tpu.memory_space<smem>>
    %c54 = arith.constant 54 : index
    %54 = memref.load %arg2[%c54] : memref<144xf32, #tpu.memory_space<smem>>
    %c55 = arith.constant 55 : index
    %55 = memref.load %arg2[%c55] : memref<144xf32, #tpu.memory_space<smem>>
    %c56 = arith.constant 56 : index
    %56 = memref.load %arg2[%c56] : memref<144xf32, #tpu.memory_space<smem>>
    %c57 = arith.constant 57 : index
    %57 = memref.load %arg2[%c57] : memref<144xf32, #tpu.memory_space<smem>>
    %c58 = arith.constant 58 : index
    %58 = memref.load %arg2[%c58] : memref<144xf32, #tpu.memory_space<smem>>
    %c59 = arith.constant 59 : index
    %59 = memref.load %arg2[%c59] : memref<144xf32, #tpu.memory_space<smem>>
    %c60 = arith.constant 60 : index
    %60 = memref.load %arg2[%c60] : memref<144xf32, #tpu.memory_space<smem>>
    %c61 = arith.constant 61 : index
    %61 = memref.load %arg2[%c61] : memref<144xf32, #tpu.memory_space<smem>>
    %c62 = arith.constant 62 : index
    %62 = memref.load %arg2[%c62] : memref<144xf32, #tpu.memory_space<smem>>
    %c63 = arith.constant 63 : index
    %63 = memref.load %arg2[%c63] : memref<144xf32, #tpu.memory_space<smem>>
    %c64 = arith.constant 64 : index
    %64 = memref.load %arg2[%c64] : memref<144xf32, #tpu.memory_space<smem>>
    %c65 = arith.constant 65 : index
    %65 = memref.load %arg2[%c65] : memref<144xf32, #tpu.memory_space<smem>>
    %c66 = arith.constant 66 : index
    %66 = memref.load %arg2[%c66] : memref<144xf32, #tpu.memory_space<smem>>
    %c67 = arith.constant 67 : index
    %67 = memref.load %arg2[%c67] : memref<144xf32, #tpu.memory_space<smem>>
    %c68 = arith.constant 68 : index
    %68 = memref.load %arg2[%c68] : memref<144xf32, #tpu.memory_space<smem>>
    %c69 = arith.constant 69 : index
    %69 = memref.load %arg2[%c69] : memref<144xf32, #tpu.memory_space<smem>>
    %c70 = arith.constant 70 : index
    %70 = memref.load %arg2[%c70] : memref<144xf32, #tpu.memory_space<smem>>
    %c71 = arith.constant 71 : index
    %71 = memref.load %arg2[%c71] : memref<144xf32, #tpu.memory_space<smem>>
    %c72 = arith.constant 72 : index
    %72 = memref.load %arg2[%c72] : memref<144xf32, #tpu.memory_space<smem>>
    %c73 = arith.constant 73 : index
    %73 = memref.load %arg2[%c73] : memref<144xf32, #tpu.memory_space<smem>>
    %c74 = arith.constant 74 : index
    %74 = memref.load %arg2[%c74] : memref<144xf32, #tpu.memory_space<smem>>
    %c75 = arith.constant 75 : index
    %75 = memref.load %arg2[%c75] : memref<144xf32, #tpu.memory_space<smem>>
    %c76 = arith.constant 76 : index
    %76 = memref.load %arg2[%c76] : memref<144xf32, #tpu.memory_space<smem>>
    %c77 = arith.constant 77 : index
    %77 = memref.load %arg2[%c77] : memref<144xf32, #tpu.memory_space<smem>>
    %c78 = arith.constant 78 : index
    %78 = memref.load %arg2[%c78] : memref<144xf32, #tpu.memory_space<smem>>
    %c79 = arith.constant 79 : index
    %79 = memref.load %arg2[%c79] : memref<144xf32, #tpu.memory_space<smem>>
    %c80 = arith.constant 80 : index
    %80 = memref.load %arg2[%c80] : memref<144xf32, #tpu.memory_space<smem>>
    %c81 = arith.constant 81 : index
    %81 = memref.load %arg2[%c81] : memref<144xf32, #tpu.memory_space<smem>>
    %c82 = arith.constant 82 : index
    %82 = memref.load %arg2[%c82] : memref<144xf32, #tpu.memory_space<smem>>
    %c83 = arith.constant 83 : index
    %83 = memref.load %arg2[%c83] : memref<144xf32, #tpu.memory_space<smem>>
    %c84 = arith.constant 84 : index
    %84 = memref.load %arg2[%c84] : memref<144xf32, #tpu.memory_space<smem>>
    %c85 = arith.constant 85 : index
    %85 = memref.load %arg2[%c85] : memref<144xf32, #tpu.memory_space<smem>>
    %c86 = arith.constant 86 : index
    %86 = memref.load %arg2[%c86] : memref<144xf32, #tpu.memory_space<smem>>
    %c87 = arith.constant 87 : index
    %87 = memref.load %arg2[%c87] : memref<144xf32, #tpu.memory_space<smem>>
    %c88 = arith.constant 88 : index
    %88 = memref.load %arg2[%c88] : memref<144xf32, #tpu.memory_space<smem>>
    %c89 = arith.constant 89 : index
    %89 = memref.load %arg2[%c89] : memref<144xf32, #tpu.memory_space<smem>>
    %c90 = arith.constant 90 : index
    %90 = memref.load %arg2[%c90] : memref<144xf32, #tpu.memory_space<smem>>
    %c91 = arith.constant 91 : index
    %91 = memref.load %arg2[%c91] : memref<144xf32, #tpu.memory_space<smem>>
    %c92 = arith.constant 92 : index
    %92 = memref.load %arg2[%c92] : memref<144xf32, #tpu.memory_space<smem>>
    %c93 = arith.constant 93 : index
    %93 = memref.load %arg2[%c93] : memref<144xf32, #tpu.memory_space<smem>>
    %c94 = arith.constant 94 : index
    %94 = memref.load %arg2[%c94] : memref<144xf32, #tpu.memory_space<smem>>
    %c95 = arith.constant 95 : index
    %95 = memref.load %arg2[%c95] : memref<144xf32, #tpu.memory_space<smem>>
    %c96 = arith.constant 96 : index
    %96 = memref.load %arg2[%c96] : memref<144xf32, #tpu.memory_space<smem>>
    %c97 = arith.constant 97 : index
    %97 = memref.load %arg2[%c97] : memref<144xf32, #tpu.memory_space<smem>>
    %c98 = arith.constant 98 : index
    %98 = memref.load %arg2[%c98] : memref<144xf32, #tpu.memory_space<smem>>
    %c99 = arith.constant 99 : index
    %99 = memref.load %arg2[%c99] : memref<144xf32, #tpu.memory_space<smem>>
    %c100 = arith.constant 100 : index
    %100 = memref.load %arg2[%c100] : memref<144xf32, #tpu.memory_space<smem>>
    %c101 = arith.constant 101 : index
    %101 = memref.load %arg2[%c101] : memref<144xf32, #tpu.memory_space<smem>>
    %c102 = arith.constant 102 : index
    %102 = memref.load %arg2[%c102] : memref<144xf32, #tpu.memory_space<smem>>
    %c103 = arith.constant 103 : index
    %103 = memref.load %arg2[%c103] : memref<144xf32, #tpu.memory_space<smem>>
    %c104 = arith.constant 104 : index
    %104 = memref.load %arg2[%c104] : memref<144xf32, #tpu.memory_space<smem>>
    %c105 = arith.constant 105 : index
    %105 = memref.load %arg2[%c105] : memref<144xf32, #tpu.memory_space<smem>>
    %c106 = arith.constant 106 : index
    %106 = memref.load %arg2[%c106] : memref<144xf32, #tpu.memory_space<smem>>
    %c107 = arith.constant 107 : index
    %107 = memref.load %arg2[%c107] : memref<144xf32, #tpu.memory_space<smem>>
    %c108 = arith.constant 108 : index
    %108 = memref.load %arg2[%c108] : memref<144xf32, #tpu.memory_space<smem>>
    %c109 = arith.constant 109 : index
    %109 = memref.load %arg2[%c109] : memref<144xf32, #tpu.memory_space<smem>>
    %c110 = arith.constant 110 : index
    %110 = memref.load %arg2[%c110] : memref<144xf32, #tpu.memory_space<smem>>
    %c111 = arith.constant 111 : index
    %111 = memref.load %arg2[%c111] : memref<144xf32, #tpu.memory_space<smem>>
    %c112 = arith.constant 112 : index
    %112 = memref.load %arg2[%c112] : memref<144xf32, #tpu.memory_space<smem>>
    %c113 = arith.constant 113 : index
    %113 = memref.load %arg2[%c113] : memref<144xf32, #tpu.memory_space<smem>>
    %c114 = arith.constant 114 : index
    %114 = memref.load %arg2[%c114] : memref<144xf32, #tpu.memory_space<smem>>
    %c115 = arith.constant 115 : index
    %115 = memref.load %arg2[%c115] : memref<144xf32, #tpu.memory_space<smem>>
    %c116 = arith.constant 116 : index
    %116 = memref.load %arg2[%c116] : memref<144xf32, #tpu.memory_space<smem>>
    %c117 = arith.constant 117 : index
    %117 = memref.load %arg2[%c117] : memref<144xf32, #tpu.memory_space<smem>>
    %c118 = arith.constant 118 : index
    %118 = memref.load %arg2[%c118] : memref<144xf32, #tpu.memory_space<smem>>
    %c119 = arith.constant 119 : index
    %119 = memref.load %arg2[%c119] : memref<144xf32, #tpu.memory_space<smem>>
    %c120 = arith.constant 120 : index
    %120 = memref.load %arg2[%c120] : memref<144xf32, #tpu.memory_space<smem>>
    %c121 = arith.constant 121 : index
    %121 = memref.load %arg2[%c121] : memref<144xf32, #tpu.memory_space<smem>>
    %c122 = arith.constant 122 : index
    %122 = memref.load %arg2[%c122] : memref<144xf32, #tpu.memory_space<smem>>
    %c123 = arith.constant 123 : index
    %123 = memref.load %arg2[%c123] : memref<144xf32, #tpu.memory_space<smem>>
    %c124 = arith.constant 124 : index
    %124 = memref.load %arg2[%c124] : memref<144xf32, #tpu.memory_space<smem>>
    %c125 = arith.constant 125 : index
    %125 = memref.load %arg2[%c125] : memref<144xf32, #tpu.memory_space<smem>>
    %c126 = arith.constant 126 : index
    %126 = memref.load %arg2[%c126] : memref<144xf32, #tpu.memory_space<smem>>
    %c127 = arith.constant 127 : index
    %127 = memref.load %arg2[%c127] : memref<144xf32, #tpu.memory_space<smem>>
    %c128 = arith.constant 128 : index
    %128 = memref.load %arg2[%c128] : memref<144xf32, #tpu.memory_space<smem>>
    %c129 = arith.constant 129 : index
    %129 = memref.load %arg2[%c129] : memref<144xf32, #tpu.memory_space<smem>>
    %c130 = arith.constant 130 : index
    %130 = memref.load %arg2[%c130] : memref<144xf32, #tpu.memory_space<smem>>
    %c131 = arith.constant 131 : index
    %131 = memref.load %arg2[%c131] : memref<144xf32, #tpu.memory_space<smem>>
    %c132 = arith.constant 132 : index
    %132 = memref.load %arg2[%c132] : memref<144xf32, #tpu.memory_space<smem>>
    %c133 = arith.constant 133 : index
    %133 = memref.load %arg2[%c133] : memref<144xf32, #tpu.memory_space<smem>>
    %c134 = arith.constant 134 : index
    %134 = memref.load %arg2[%c134] : memref<144xf32, #tpu.memory_space<smem>>
    %c135 = arith.constant 135 : index
    %135 = memref.load %arg2[%c135] : memref<144xf32, #tpu.memory_space<smem>>
    %c136 = arith.constant 136 : index
    %136 = memref.load %arg2[%c136] : memref<144xf32, #tpu.memory_space<smem>>
    %c137 = arith.constant 137 : index
    %137 = memref.load %arg2[%c137] : memref<144xf32, #tpu.memory_space<smem>>
    %c138 = arith.constant 138 : index
    %138 = memref.load %arg2[%c138] : memref<144xf32, #tpu.memory_space<smem>>
    %c139 = arith.constant 139 : index
    %139 = memref.load %arg2[%c139] : memref<144xf32, #tpu.memory_space<smem>>
    %c140 = arith.constant 140 : index
    %140 = memref.load %arg2[%c140] : memref<144xf32, #tpu.memory_space<smem>>
    %c141 = arith.constant 141 : index
    %141 = memref.load %arg2[%c141] : memref<144xf32, #tpu.memory_space<smem>>
    %c142 = arith.constant 142 : index
    %142 = memref.load %arg2[%c142] : memref<144xf32, #tpu.memory_space<smem>>
    %c143 = arith.constant 143 : index
    %143 = memref.load %arg2[%c143] : memref<144xf32, #tpu.memory_space<smem>>
    %c0_0 = arith.constant 0 : index
    %144 = memref.load %arg3[%c0_0] : memref<18xf32, #tpu.memory_space<smem>>
    %c1_1 = arith.constant 1 : index
    %145 = memref.load %arg3[%c1_1] : memref<18xf32, #tpu.memory_space<smem>>
    %c2_2 = arith.constant 2 : index
    %146 = memref.load %arg3[%c2_2] : memref<18xf32, #tpu.memory_space<smem>>
    %c3_3 = arith.constant 3 : index
    %147 = memref.load %arg3[%c3_3] : memref<18xf32, #tpu.memory_space<smem>>
    %c4_4 = arith.constant 4 : index
    %148 = memref.load %arg3[%c4_4] : memref<18xf32, #tpu.memory_space<smem>>
    %c5_5 = arith.constant 5 : index
    %149 = memref.load %arg3[%c5_5] : memref<18xf32, #tpu.memory_space<smem>>
    %c6_6 = arith.constant 6 : index
    %150 = memref.load %arg3[%c6_6] : memref<18xf32, #tpu.memory_space<smem>>
    %c7_7 = arith.constant 7 : index
    %151 = memref.load %arg3[%c7_7] : memref<18xf32, #tpu.memory_space<smem>>
    %c8_8 = arith.constant 8 : index
    %152 = memref.load %arg3[%c8_8] : memref<18xf32, #tpu.memory_space<smem>>
    %c9_9 = arith.constant 9 : index
    %153 = memref.load %arg3[%c9_9] : memref<18xf32, #tpu.memory_space<smem>>
    %c10_10 = arith.constant 10 : index
    %154 = memref.load %arg3[%c10_10] : memref<18xf32, #tpu.memory_space<smem>>
    %c11_11 = arith.constant 11 : index
    %155 = memref.load %arg3[%c11_11] : memref<18xf32, #tpu.memory_space<smem>>
    %c12_12 = arith.constant 12 : index
    %156 = memref.load %arg3[%c12_12] : memref<18xf32, #tpu.memory_space<smem>>
    %c13_13 = arith.constant 13 : index
    %157 = memref.load %arg3[%c13_13] : memref<18xf32, #tpu.memory_space<smem>>
    %c14_14 = arith.constant 14 : index
    %158 = memref.load %arg3[%c14_14] : memref<18xf32, #tpu.memory_space<smem>>
    %c15_15 = arith.constant 15 : index
    %159 = memref.load %arg3[%c15_15] : memref<18xf32, #tpu.memory_space<smem>>
    %c16_16 = arith.constant 16 : index
    %160 = memref.load %arg3[%c16_16] : memref<18xf32, #tpu.memory_space<smem>>
    %c17_17 = arith.constant 17 : index
    %161 = memref.load %arg3[%c17_17] : memref<18xf32, #tpu.memory_space<smem>>
    %c0_18 = arith.constant 0 : index
    %c0_19 = arith.constant 0 : index
    %c0_20 = arith.constant 0 : index
    %162 = vector.load %arg4[%c0_18, %c0_19, %c0_20] : memref<3x128x1xf32, #tpu.memory_space<vmem>>, vector<1x128x1xf32>
    %163 = vector.shape_cast %162 : vector<1x128x1xf32> to vector<128x1xf32>
    %c0_21 = arith.constant 0 : index
    %c0_22 = arith.constant 0 : index
    %c0_23 = arith.constant 0 : index
    %164 = vector.load %arg5[%c0_21, %c0_22, %c0_23] : memref<3x1x16xf32, #tpu.memory_space<vmem>>, vector<1x1x16xf32>
    %165 = vector.shape_cast %164 : vector<1x1x16xf32> to vector<1x16xf32>
    %166 = vector.broadcast %163 : vector<128x1xf32> to vector<128x16xf32>
    %167 = vector.broadcast %165 : vector<1x16xf32> to vector<128x16xf32>
    %168 = arith.mulf %166, %167 : vector<128x16xf32>
    %c0_24 = arith.constant 0 : index
    %c0_25 = arith.constant 0 : index
    %c0_26 = arith.constant 0 : index
    %169 = vector.load %arg4[%c0_24, %c0_25, %c0_26] : memref<3x128x1xf32, #tpu.memory_space<vmem>>, vector<1x128x1xf32>
    %170 = vector.shape_cast %169 : vector<1x128x1xf32> to vector<128x1xf32>
    %c0_27 = arith.constant 0 : index
    %c0_28 = arith.constant 0 : index
    %c0_29 = arith.constant 0 : index
    %171 = vector.load %arg4[%c0_27, %c0_28, %c0_29] : memref<3x128x1xf32, #tpu.memory_space<vmem>>, vector<1x128x1xf32>
    %172 = vector.shape_cast %171 : vector<1x128x1xf32> to vector<128x1xf32>
    %c2_30 = arith.constant 2 : index
    %c0_31 = arith.constant 0 : index
    %c0_32 = arith.constant 0 : index
    %173 = vector.load %arg5[%c2_30, %c0_31, %c0_32] : memref<3x1x16xf32, #tpu.memory_space<vmem>>, vector<1x1x16xf32>
    %174 = vector.shape_cast %173 : vector<1x1x16xf32> to vector<1x16xf32>
    %175 = vector.broadcast %172 : vector<128x1xf32> to vector<128x16xf32>
    %176 = vector.broadcast %174 : vector<1x16xf32> to vector<128x16xf32>
    %177 = arith.mulf %175, %176 : vector<128x16xf32>
    %c0_33 = arith.constant 0 : index
    %c0_34 = arith.constant 0 : index
    %c0_35 = arith.constant 0 : index
    %178 = vector.load %arg5[%c0_33, %c0_34, %c0_35] : memref<3x1x16xf32, #tpu.memory_space<vmem>>, vector<1x1x16xf32>
    %179 = vector.shape_cast %178 : vector<1x1x16xf32> to vector<1x16xf32>
    %c2_36 = arith.constant 2 : index
    %c0_37 = arith.constant 0 : index
    %c0_38 = arith.constant 0 : index
    %180 = vector.load %arg5[%c2_36, %c0_37, %c0_38] : memref<3x1x16xf32, #tpu.memory_space<vmem>>, vector<1x1x16xf32>
    %181 = vector.shape_cast %180 : vector<1x1x16xf32> to vector<1x16xf32>
    %c2_39 = arith.constant 2 : index
    %c0_40 = arith.constant 0 : index
    %c0_41 = arith.constant 0 : index
    %182 = vector.load %arg4[%c2_39, %c0_40, %c0_41] : memref<3x128x1xf32, #tpu.memory_space<vmem>>, vector<1x128x1xf32>
    %183 = vector.shape_cast %182 : vector<1x128x1xf32> to vector<128x1xf32>
    %c0_42 = arith.constant 0 : index
    %c0_43 = arith.constant 0 : index
    %c0_44 = arith.constant 0 : index
    %184 = vector.load %arg5[%c0_42, %c0_43, %c0_44] : memref<3x1x16xf32, #tpu.memory_space<vmem>>, vector<1x1x16xf32>
    %185 = vector.shape_cast %184 : vector<1x1x16xf32> to vector<1x16xf32>
    %186 = vector.broadcast %183 : vector<128x1xf32> to vector<128x16xf32>
    %187 = vector.broadcast %185 : vector<1x16xf32> to vector<128x16xf32>
    %188 = arith.mulf %186, %187 : vector<128x16xf32>
    %c2_45 = arith.constant 2 : index
    %c0_46 = arith.constant 0 : index
    %c0_47 = arith.constant 0 : index
    %189 = vector.load %arg4[%c2_45, %c0_46, %c0_47] : memref<3x128x1xf32, #tpu.memory_space<vmem>>, vector<1x128x1xf32>
    %190 = vector.shape_cast %189 : vector<1x128x1xf32> to vector<128x1xf32>
    %c2_48 = arith.constant 2 : index
    %c0_49 = arith.constant 0 : index
    %c0_50 = arith.constant 0 : index
    %191 = vector.load %arg4[%c2_48, %c0_49, %c0_50] : memref<3x128x1xf32, #tpu.memory_space<vmem>>, vector<1x128x1xf32>
    %192 = vector.shape_cast %191 : vector<1x128x1xf32> to vector<128x1xf32>
    %c2_51 = arith.constant 2 : index
    %c0_52 = arith.constant 0 : index
    %c0_53 = arith.constant 0 : index
    %193 = vector.load %arg5[%c2_51, %c0_52, %c0_53] : memref<3x1x16xf32, #tpu.memory_space<vmem>>, vector<1x1x16xf32>
    %194 = vector.shape_cast %193 : vector<1x1x16xf32> to vector<1x16xf32>
    %195 = vector.broadcast %192 : vector<128x1xf32> to vector<128x16xf32>
    %196 = vector.broadcast %194 : vector<1x16xf32> to vector<128x16xf32>
    %197 = arith.mulf %195, %196 : vector<128x16xf32>
    %c0_54 = arith.constant 0 : index
    %c0_55 = arith.constant 0 : index
    %c0_56 = arith.constant 0 : index
    %198 = vector.load %arg6[%c0_54, %c0_55, %c0_56] : memref<3x16x1xf32, #tpu.memory_space<vmem>>, vector<1x16x1xf32>
    %199 = vector.shape_cast %198 : vector<1x16x1xf32> to vector<16x1xf32>
    %c0_57 = arith.constant 0 : index
    %c0_58 = arith.constant 0 : index
    %c0_59 = arith.constant 0 : index
    %200 = vector.load %arg7[%c0_57, %c0_58, %c0_59] : memref<3x1x8xf32, #tpu.memory_space<vmem>>, vector<1x1x8xf32>
    %201 = vector.shape_cast %200 : vector<1x1x8xf32> to vector<1x8xf32>
    %202 = vector.broadcast %199 : vector<16x1xf32> to vector<16x8xf32>
    %203 = vector.broadcast %201 : vector<1x8xf32> to vector<16x8xf32>
    %204 = arith.mulf %202, %203 : vector<16x8xf32>
    %c0_60 = arith.constant 0 : index
    %c0_61 = arith.constant 0 : index
    %c0_62 = arith.constant 0 : index
    %205 = vector.load %arg6[%c0_60, %c0_61, %c0_62] : memref<3x16x1xf32, #tpu.memory_space<vmem>>, vector<1x16x1xf32>
    %206 = vector.shape_cast %205 : vector<1x16x1xf32> to vector<16x1xf32>
    %c0_63 = arith.constant 0 : index
    %c0_64 = arith.constant 0 : index
    %c0_65 = arith.constant 0 : index
    %207 = vector.load %arg6[%c0_63, %c0_64, %c0_65] : memref<3x16x1xf32, #tpu.memory_space<vmem>>, vector<1x16x1xf32>
    %208 = vector.shape_cast %207 : vector<1x16x1xf32> to vector<16x1xf32>
    %c2_66 = arith.constant 2 : index
    %c0_67 = arith.constant 0 : index
    %c0_68 = arith.constant 0 : index
    %209 = vector.load %arg7[%c2_66, %c0_67, %c0_68] : memref<3x1x8xf32, #tpu.memory_space<vmem>>, vector<1x1x8xf32>
    %210 = vector.shape_cast %209 : vector<1x1x8xf32> to vector<1x8xf32>
    %211 = vector.broadcast %208 : vector<16x1xf32> to vector<16x8xf32>
    %212 = vector.broadcast %210 : vector<1x8xf32> to vector<16x8xf32>
    %213 = arith.mulf %211, %212 : vector<16x8xf32>
    %c0_69 = arith.constant 0 : index
    %c0_70 = arith.constant 0 : index
    %c0_71 = arith.constant 0 : index
    %214 = vector.load %arg7[%c0_69, %c0_70, %c0_71] : memref<3x1x8xf32, #tpu.memory_space<vmem>>, vector<1x1x8xf32>
    %215 = vector.shape_cast %214 : vector<1x1x8xf32> to vector<1x8xf32>
    %c2_72 = arith.constant 2 : index
    %c0_73 = arith.constant 0 : index
    %c0_74 = arith.constant 0 : index
    %216 = vector.load %arg7[%c2_72, %c0_73, %c0_74] : memref<3x1x8xf32, #tpu.memory_space<vmem>>, vector<1x1x8xf32>
    %217 = vector.shape_cast %216 : vector<1x1x8xf32> to vector<1x8xf32>
    %c2_75 = arith.constant 2 : index
    %c0_76 = arith.constant 0 : index
    %c0_77 = arith.constant 0 : index
    %218 = vector.load %arg6[%c2_75, %c0_76, %c0_77] : memref<3x16x1xf32, #tpu.memory_space<vmem>>, vector<1x16x1xf32>
    %219 = vector.shape_cast %218 : vector<1x16x1xf32> to vector<16x1xf32>
    %c0_78 = arith.constant 0 : index
    %c0_79 = arith.constant 0 : index
    %c0_80 = arith.constant 0 : index
    %220 = vector.load %arg7[%c0_78, %c0_79, %c0_80] : memref<3x1x8xf32, #tpu.memory_space<vmem>>, vector<1x1x8xf32>
    %221 = vector.shape_cast %220 : vector<1x1x8xf32> to vector<1x8xf32>
    %222 = vector.broadcast %219 : vector<16x1xf32> to vector<16x8xf32>
    %223 = vector.broadcast %221 : vector<1x8xf32> to vector<16x8xf32>
    %224 = arith.mulf %222, %223 : vector<16x8xf32>
    %c2_81 = arith.constant 2 : index
    %c0_82 = arith.constant 0 : index
    %c0_83 = arith.constant 0 : index
    %225 = vector.load %arg6[%c2_81, %c0_82, %c0_83] : memref<3x16x1xf32, #tpu.memory_space<vmem>>, vector<1x16x1xf32>
    %226 = vector.shape_cast %225 : vector<1x16x1xf32> to vector<16x1xf32>
    %c2_84 = arith.constant 2 : index
    %c0_85 = arith.constant 0 : index
    %c0_86 = arith.constant 0 : index
    %227 = vector.load %arg6[%c2_84, %c0_85, %c0_86] : memref<3x16x1xf32, #tpu.memory_space<vmem>>, vector<1x16x1xf32>
    %228 = vector.shape_cast %227 : vector<1x16x1xf32> to vector<16x1xf32>
    %c2_87 = arith.constant 2 : index
    %c0_88 = arith.constant 0 : index
    %c0_89 = arith.constant 0 : index
    %229 = vector.load %arg7[%c2_87, %c0_88, %c0_89] : memref<3x1x8xf32, #tpu.memory_space<vmem>>, vector<1x1x8xf32>
    %230 = vector.shape_cast %229 : vector<1x1x8xf32> to vector<1x8xf32>
    %231 = vector.broadcast %228 : vector<16x1xf32> to vector<16x8xf32>
    %232 = vector.broadcast %230 : vector<1x8xf32> to vector<16x8xf32>
    %233 = arith.mulf %231, %232 : vector<16x8xf32>
    %c0_90 = arith.constant 0 : index
    %c0_91 = arith.constant 0 : index
    %234 = vector.load %arg8[%c0_90, %c0_91] : memref<16x8xf32, #tpu.memory_space<vmem>>, vector<16x8xf32>
    %c0_92 = arith.constant 0 : index
    %c0_93 = arith.constant 0 : index
    %235 = vector.load %arg9[%c0_92, %c0_93] : memref<16x32xf32, #tpu.memory_space<vmem>>, vector<16x32xf32>
    %c0_94 = arith.constant 0 : index
    %c0_95 = arith.constant 0 : index
    %236 = vector.load %arg10[%c0_94, %c0_95] : memref<8x4xf32, #tpu.memory_space<vmem>>, vector<8x4xf32>
    %c0_96 = arith.constant 0 : index
    %c0_97 = arith.constant 0 : index
    %237 = vector.load %arg11[%c0_96, %c0_97] : memref<4x8xf32, #tpu.memory_space<vmem>>, vector<4x8xf32>
    %c0_98 = arith.constant 0 : index
    %c0_99 = arith.constant 0 : index
    %c0_100 = arith.constant 0 : index
    %238 = vector.load %arg1[%c0_98, %c0_99, %c0_100] : memref<1x128x16xf32, #tpu.memory_space<vmem>>, vector<1x128x16xf32>
    %239 = vector.shape_cast %238 : vector<1x128x16xf32> to vector<128x16xf32>
    %cst = arith.constant 0.000000e+00 : f32
    %240 = vector.broadcast %cst : f32 to vector<16x16xf32>
    %cst_101 = arith.constant 0.000000e+00 : f32
    %241 = vector.broadcast %cst_101 : f32 to vector<16x16xf32>
    %c1_i32 = arith.constant 1 : i32
    %242 = tpu.dynamic_rotate %239 by %c1_i32 dim 0 : vector<128x16xf32>, i32 -> vector<128x16xf32>
    %c1_i32_102 = arith.constant 1 : i32
    %243 = tpu.dynamic_rotate %242 by %c1_i32_102 dim 1 : vector<128x16xf32>, i32 -> vector<128x16xf32>
    %244 = arith.mulf %243, %168 : vector<128x16xf32>
    %245 = vector.extract_strided_slice %244 {offsets = [0, 0], sizes = [16, 16], strides = [1, 1]} : vector<128x16xf32> to vector<16x16xf32>
    %246 = vector.broadcast %0 : f32 to vector<16x16xf32>
    %247 = arith.mulf %246, %245 : vector<16x16xf32>
    %248 = arith.addf %240, %247 : vector<16x16xf32>
    %249 = vector.broadcast %72 : f32 to vector<16x16xf32>
    %250 = arith.mulf %249, %245 : vector<16x16xf32>
    %251 = arith.addf %241, %250 : vector<16x16xf32>
    %252 = vector.extract_strided_slice %244 {offsets = [16, 0], sizes = [16, 16], strides = [1, 1]} : vector<128x16xf32> to vector<16x16xf32>
    %253 = vector.broadcast %9 : f32 to vector<16x16xf32>
    %254 = arith.mulf %253, %252 : vector<16x16xf32>
    %255 = arith.addf %248, %254 : vector<16x16xf32>
    %256 = vector.broadcast %81 : f32 to vector<16x16xf32>
    %257 = arith.mulf %256, %252 : vector<16x16xf32>
    %258 = arith.addf %251, %257 : vector<16x16xf32>
    %259 = vector.extract_strided_slice %244 {offsets = [32, 0], sizes = [16, 16], strides = [1, 1]} : vector<128x16xf32> to vector<16x16xf32>
    %260 = vector.broadcast %18 : f32 to vector<16x16xf32>
    %261 = arith.mulf %260, %259 : vector<16x16xf32>
    %262 = arith.addf %255, %261 : vector<16x16xf32>
    %263 = vector.broadcast %90 : f32 to vector<16x16xf32>
    %264 = arith.mulf %263, %259 : vector<16x16xf32>
    %265 = arith.addf %258, %264 : vector<16x16xf32>
    %266 = vector.extract_strided_slice %244 {offsets = [48, 0], sizes = [16, 16], strides = [1, 1]} : vector<128x16xf32> to vector<16x16xf32>
    %267 = vector.broadcast %27 : f32 to vector<16x16xf32>
    %268 = arith.mulf %267, %266 : vector<16x16xf32>
    %269 = arith.addf %262, %268 : vector<16x16xf32>
    %270 = vector.broadcast %99 : f32 to vector<16x16xf32>
    %271 = arith.mulf %270, %266 : vector<16x16xf32>
    %272 = arith.addf %265, %271 : vector<16x16xf32>
    %273 = vector.extract_strided_slice %244 {offsets = [64, 0], sizes = [16, 16], strides = [1, 1]} : vector<128x16xf32> to vector<16x16xf32>
    %274 = vector.broadcast %36 : f32 to vector<16x16xf32>
    %275 = arith.mulf %274, %273 : vector<16x16xf32>
    %276 = arith.addf %269, %275 : vector<16x16xf32>
    %277 = vector.broadcast %108 : f32 to vector<16x16xf32>
    %278 = arith.mulf %277, %273 : vector<16x16xf32>
    %279 = arith.addf %272, %278 : vector<16x16xf32>
    %280 = vector.extract_strided_slice %244 {offsets = [80, 0], sizes = [16, 16], strides = [1, 1]} : vector<128x16xf32> to vector<16x16xf32>
    %281 = vector.broadcast %45 : f32 to vector<16x16xf32>
    %282 = arith.mulf %281, %280 : vector<16x16xf32>
    %283 = arith.addf %276, %282 : vector<16x16xf32>
    %284 = vector.broadcast %117 : f32 to vector<16x16xf32>
    %285 = arith.mulf %284, %280 : vector<16x16xf32>
    %286 = arith.addf %279, %285 : vector<16x16xf32>
    %287 = vector.extract_strided_slice %244 {offsets = [96, 0], sizes = [16, 16], strides = [1, 1]} : vector<128x16xf32> to vector<16x16xf32>
    %288 = vector.broadcast %54 : f32 to vector<16x16xf32>
    %289 = arith.mulf %288, %287 : vector<16x16xf32>
    %290 = arith.addf %283, %289 : vector<16x16xf32>
    %291 = vector.broadcast %126 : f32 to vector<16x16xf32>
    %292 = arith.mulf %291, %287 : vector<16x16xf32>
    %293 = arith.addf %286, %292 : vector<16x16xf32>
    %294 = vector.extract_strided_slice %244 {offsets = [112, 0], sizes = [16, 16], strides = [1, 1]} : vector<128x16xf32> to vector<16x16xf32>
    %295 = vector.broadcast %63 : f32 to vector<16x16xf32>
    %296 = arith.mulf %295, %294 : vector<16x16xf32>
    %297 = arith.addf %290, %296 : vector<16x16xf32>
    %298 = vector.broadcast %135 : f32 to vector<16x16xf32>
    %299 = arith.mulf %298, %294 : vector<16x16xf32>
    %300 = arith.addf %293, %299 : vector<16x16xf32>
    %c1_i32_103 = arith.constant 1 : i32
    %301 = tpu.dynamic_rotate %239 by %c1_i32_103 dim 0 : vector<128x16xf32>, i32 -> vector<128x16xf32>
    %302 = vector.broadcast %170 : vector<128x1xf32> to vector<128x16xf32>
    %303 = arith.mulf %301, %302 : vector<128x16xf32>
    %304 = vector.extract_strided_slice %303 {offsets = [0, 0], sizes = [16, 16], strides = [1, 1]} : vector<128x16xf32> to vector<16x16xf32>
    %305 = vector.broadcast %1 : f32 to vector<16x16xf32>
    %306 = arith.mulf %305, %304 : vector<16x16xf32>
    %307 = arith.addf %297, %306 : vector<16x16xf32>
    %308 = vector.broadcast %73 : f32 to vector<16x16xf32>
    %309 = arith.mulf %308, %304 : vector<16x16xf32>
    %310 = arith.addf %300, %309 : vector<16x16xf32>
    %311 = vector.extract_strided_slice %303 {offsets = [16, 0], sizes = [16, 16], strides = [1, 1]} : vector<128x16xf32> to vector<16x16xf32>
    %312 = vector.broadcast %10 : f32 to vector<16x16xf32>
    %313 = arith.mulf %312, %311 : vector<16x16xf32>
    %314 = arith.addf %307, %313 : vector<16x16xf32>
    %315 = vector.broadcast %82 : f32 to vector<16x16xf32>
    %316 = arith.mulf %315, %311 : vector<16x16xf32>
    %317 = arith.addf %310, %316 : vector<16x16xf32>
    %318 = vector.extract_strided_slice %303 {offsets = [32, 0], sizes = [16, 16], strides = [1, 1]} : vector<128x16xf32> to vector<16x16xf32>
    %319 = vector.broadcast %19 : f32 to vector<16x16xf32>
    %320 = arith.mulf %319, %318 : vector<16x16xf32>
    %321 = arith.addf %314, %320 : vector<16x16xf32>
    %322 = vector.broadcast %91 : f32 to vector<16x16xf32>
    %323 = arith.mulf %322, %318 : vector<16x16xf32>
    %324 = arith.addf %317, %323 : vector<16x16xf32>
    %325 = vector.extract_strided_slice %303 {offsets = [48, 0], sizes = [16, 16], strides = [1, 1]} : vector<128x16xf32> to vector<16x16xf32>
    %326 = vector.broadcast %28 : f32 to vector<16x16xf32>
    %327 = arith.mulf %326, %325 : vector<16x16xf32>
    %328 = arith.addf %321, %327 : vector<16x16xf32>
    %329 = vector.broadcast %100 : f32 to vector<16x16xf32>
    %330 = arith.mulf %329, %325 : vector<16x16xf32>
    %331 = arith.addf %324, %330 : vector<16x16xf32>
    %332 = vector.extract_strided_slice %303 {offsets = [64, 0], sizes = [16, 16], strides = [1, 1]} : vector<128x16xf32> to vector<16x16xf32>
    %333 = vector.broadcast %37 : f32 to vector<16x16xf32>
    %334 = arith.mulf %333, %332 : vector<16x16xf32>
    %335 = arith.addf %328, %334 : vector<16x16xf32>
    %336 = vector.broadcast %109 : f32 to vector<16x16xf32>
    %337 = arith.mulf %336, %332 : vector<16x16xf32>
    %338 = arith.addf %331, %337 : vector<16x16xf32>
    %339 = vector.extract_strided_slice %303 {offsets = [80, 0], sizes = [16, 16], strides = [1, 1]} : vector<128x16xf32> to vector<16x16xf32>
    %340 = vector.broadcast %46 : f32 to vector<16x16xf32>
    %341 = arith.mulf %340, %339 : vector<16x16xf32>
    %342 = arith.addf %335, %341 : vector<16x16xf32>
    %343 = vector.broadcast %118 : f32 to vector<16x16xf32>
    %344 = arith.mulf %343, %339 : vector<16x16xf32>
    %345 = arith.addf %338, %344 : vector<16x16xf32>
    %346 = vector.extract_strided_slice %303 {offsets = [96, 0], sizes = [16, 16], strides = [1, 1]} : vector<128x16xf32> to vector<16x16xf32>
    %347 = vector.broadcast %55 : f32 to vector<16x16xf32>
    %348 = arith.mulf %347, %346 : vector<16x16xf32>
    %349 = arith.addf %342, %348 : vector<16x16xf32>
    %350 = vector.broadcast %127 : f32 to vector<16x16xf32>
    %351 = arith.mulf %350, %346 : vector<16x16xf32>
    %352 = arith.addf %345, %351 : vector<16x16xf32>
    %353 = vector.extract_strided_slice %303 {offsets = [112, 0], sizes = [16, 16], strides = [1, 1]} : vector<128x16xf32> to vector<16x16xf32>
    %354 = vector.broadcast %64 : f32 to vector<16x16xf32>
    %355 = arith.mulf %354, %353 : vector<16x16xf32>
    %356 = arith.addf %349, %355 : vector<16x16xf32>
    %357 = vector.broadcast %136 : f32 to vector<16x16xf32>
    %358 = arith.mulf %357, %353 : vector<16x16xf32>
    %359 = arith.addf %352, %358 : vector<16x16xf32>
    %c1_i32_104 = arith.constant 1 : i32
    %360 = tpu.dynamic_rotate %239 by %c1_i32_104 dim 0 : vector<128x16xf32>, i32 -> vector<128x16xf32>
    %c15_i32 = arith.constant 15 : i32
    %361 = tpu.dynamic_rotate %360 by %c15_i32 dim 1 : vector<128x16xf32>, i32 -> vector<128x16xf32>
    %362 = arith.mulf %361, %177 : vector<128x16xf32>
    %363 = vector.extract_strided_slice %362 {offsets = [0, 0], sizes = [16, 16], strides = [1, 1]} : vector<128x16xf32> to vector<16x16xf32>
    %364 = vector.broadcast %2 : f32 to vector<16x16xf32>
    %365 = arith.mulf %364, %363 : vector<16x16xf32>
    %366 = arith.addf %356, %365 : vector<16x16xf32>
    %367 = vector.broadcast %74 : f32 to vector<16x16xf32>
    %368 = arith.mulf %367, %363 : vector<16x16xf32>
    %369 = arith.addf %359, %368 : vector<16x16xf32>
    %370 = vector.extract_strided_slice %362 {offsets = [16, 0], sizes = [16, 16], strides = [1, 1]} : vector<128x16xf32> to vector<16x16xf32>
    %371 = vector.broadcast %11 : f32 to vector<16x16xf32>
    %372 = arith.mulf %371, %370 : vector<16x16xf32>
    %373 = arith.addf %366, %372 : vector<16x16xf32>
    %374 = vector.broadcast %83 : f32 to vector<16x16xf32>
    %375 = arith.mulf %374, %370 : vector<16x16xf32>
    %376 = arith.addf %369, %375 : vector<16x16xf32>
    %377 = vector.extract_strided_slice %362 {offsets = [32, 0], sizes = [16, 16], strides = [1, 1]} : vector<128x16xf32> to vector<16x16xf32>
    %378 = vector.broadcast %20 : f32 to vector<16x16xf32>
    %379 = arith.mulf %378, %377 : vector<16x16xf32>
    %380 = arith.addf %373, %379 : vector<16x16xf32>
    %381 = vector.broadcast %92 : f32 to vector<16x16xf32>
    %382 = arith.mulf %381, %377 : vector<16x16xf32>
    %383 = arith.addf %376, %382 : vector<16x16xf32>
    %384 = vector.extract_strided_slice %362 {offsets = [48, 0], sizes = [16, 16], strides = [1, 1]} : vector<128x16xf32> to vector<16x16xf32>
    %385 = vector.broadcast %29 : f32 to vector<16x16xf32>
    %386 = arith.mulf %385, %384 : vector<16x16xf32>
    %387 = arith.addf %380, %386 : vector<16x16xf32>
    %388 = vector.broadcast %101 : f32 to vector<16x16xf32>
    %389 = arith.mulf %388, %384 : vector<16x16xf32>
    %390 = arith.addf %383, %389 : vector<16x16xf32>
    %391 = vector.extract_strided_slice %362 {offsets = [64, 0], sizes = [16, 16], strides = [1, 1]} : vector<128x16xf32> to vector<16x16xf32>
    %392 = vector.broadcast %38 : f32 to vector<16x16xf32>
    %393 = arith.mulf %392, %391 : vector<16x16xf32>
    %394 = arith.addf %387, %393 : vector<16x16xf32>
    %395 = vector.broadcast %110 : f32 to vector<16x16xf32>
    %396 = arith.mulf %395, %391 : vector<16x16xf32>
    %397 = arith.addf %390, %396 : vector<16x16xf32>
    %398 = vector.extract_strided_slice %362 {offsets = [80, 0], sizes = [16, 16], strides = [1, 1]} : vector<128x16xf32> to vector<16x16xf32>
    %399 = vector.broadcast %47 : f32 to vector<16x16xf32>
    %400 = arith.mulf %399, %398 : vector<16x16xf32>
    %401 = arith.addf %394, %400 : vector<16x16xf32>
    %402 = vector.broadcast %119 : f32 to vector<16x16xf32>
    %403 = arith.mulf %402, %398 : vector<16x16xf32>
    %404 = arith.addf %397, %403 : vector<16x16xf32>
    %405 = vector.extract_strided_slice %362 {offsets = [96, 0], sizes = [16, 16], strides = [1, 1]} : vector<128x16xf32> to vector<16x16xf32>
    %406 = vector.broadcast %56 : f32 to vector<16x16xf32>
    %407 = arith.mulf %406, %405 : vector<16x16xf32>
    %408 = arith.addf %401, %407 : vector<16x16xf32>
    %409 = vector.broadcast %128 : f32 to vector<16x16xf32>
    %410 = arith.mulf %409, %405 : vector<16x16xf32>
    %411 = arith.addf %404, %410 : vector<16x16xf32>
    %412 = vector.extract_strided_slice %362 {offsets = [112, 0], sizes = [16, 16], strides = [1, 1]} : vector<128x16xf32> to vector<16x16xf32>
    %413 = vector.broadcast %65 : f32 to vector<16x16xf32>
    %414 = arith.mulf %413, %412 : vector<16x16xf32>
    %415 = arith.addf %408, %414 : vector<16x16xf32>
    %416 = vector.broadcast %137 : f32 to vector<16x16xf32>
    %417 = arith.mulf %416, %412 : vector<16x16xf32>
    %418 = arith.addf %411, %417 : vector<16x16xf32>
    %c1_i32_105 = arith.constant 1 : i32
    %419 = tpu.dynamic_rotate %239 by %c1_i32_105 dim 1 : vector<128x16xf32>, i32 -> vector<128x16xf32>
    %420 = vector.broadcast %179 : vector<1x16xf32> to vector<128x16xf32>
    %421 = arith.mulf %419, %420 : vector<128x16xf32>
    %422 = vector.extract_strided_slice %421 {offsets = [0, 0], sizes = [16, 16], strides = [1, 1]} : vector<128x16xf32> to vector<16x16xf32>
    %423 = vector.broadcast %3 : f32 to vector<16x16xf32>
    %424 = arith.mulf %423, %422 : vector<16x16xf32>
    %425 = arith.addf %415, %424 : vector<16x16xf32>
    %426 = vector.broadcast %75 : f32 to vector<16x16xf32>
    %427 = arith.mulf %426, %422 : vector<16x16xf32>
    %428 = arith.addf %418, %427 : vector<16x16xf32>
    %429 = vector.extract_strided_slice %421 {offsets = [16, 0], sizes = [16, 16], strides = [1, 1]} : vector<128x16xf32> to vector<16x16xf32>
    %430 = vector.broadcast %12 : f32 to vector<16x16xf32>
    %431 = arith.mulf %430, %429 : vector<16x16xf32>
    %432 = arith.addf %425, %431 : vector<16x16xf32>
    %433 = vector.broadcast %84 : f32 to vector<16x16xf32>
    %434 = arith.mulf %433, %429 : vector<16x16xf32>
    %435 = arith.addf %428, %434 : vector<16x16xf32>
    %436 = vector.extract_strided_slice %421 {offsets = [32, 0], sizes = [16, 16], strides = [1, 1]} : vector<128x16xf32> to vector<16x16xf32>
    %437 = vector.broadcast %21 : f32 to vector<16x16xf32>
    %438 = arith.mulf %437, %436 : vector<16x16xf32>
    %439 = arith.addf %432, %438 : vector<16x16xf32>
    %440 = vector.broadcast %93 : f32 to vector<16x16xf32>
    %441 = arith.mulf %440, %436 : vector<16x16xf32>
    %442 = arith.addf %435, %441 : vector<16x16xf32>
    %443 = vector.extract_strided_slice %421 {offsets = [48, 0], sizes = [16, 16], strides = [1, 1]} : vector<128x16xf32> to vector<16x16xf32>
    %444 = vector.broadcast %30 : f32 to vector<16x16xf32>
    %445 = arith.mulf %444, %443 : vector<16x16xf32>
    %446 = arith.addf %439, %445 : vector<16x16xf32>
    %447 = vector.broadcast %102 : f32 to vector<16x16xf32>
    %448 = arith.mulf %447, %443 : vector<16x16xf32>
    %449 = arith.addf %442, %448 : vector<16x16xf32>
    %450 = vector.extract_strided_slice %421 {offsets = [64, 0], sizes = [16, 16], strides = [1, 1]} : vector<128x16xf32> to vector<16x16xf32>
    %451 = vector.broadcast %39 : f32 to vector<16x16xf32>
    %452 = arith.mulf %451, %450 : vector<16x16xf32>
    %453 = arith.addf %446, %452 : vector<16x16xf32>
    %454 = vector.broadcast %111 : f32 to vector<16x16xf32>
    %455 = arith.mulf %454, %450 : vector<16x16xf32>
    %456 = arith.addf %449, %455 : vector<16x16xf32>
    %457 = vector.extract_strided_slice %421 {offsets = [80, 0], sizes = [16, 16], strides = [1, 1]} : vector<128x16xf32> to vector<16x16xf32>
    %458 = vector.broadcast %48 : f32 to vector<16x16xf32>
    %459 = arith.mulf %458, %457 : vector<16x16xf32>
    %460 = arith.addf %453, %459 : vector<16x16xf32>
    %461 = vector.broadcast %120 : f32 to vector<16x16xf32>
    %462 = arith.mulf %461, %457 : vector<16x16xf32>
    %463 = arith.addf %456, %462 : vector<16x16xf32>
    %464 = vector.extract_strided_slice %421 {offsets = [96, 0], sizes = [16, 16], strides = [1, 1]} : vector<128x16xf32> to vector<16x16xf32>
    %465 = vector.broadcast %57 : f32 to vector<16x16xf32>
    %466 = arith.mulf %465, %464 : vector<16x16xf32>
    %467 = arith.addf %460, %466 : vector<16x16xf32>
    %468 = vector.broadcast %129 : f32 to vector<16x16xf32>
    %469 = arith.mulf %468, %464 : vector<16x16xf32>
    %470 = arith.addf %463, %469 : vector<16x16xf32>
    %471 = vector.extract_strided_slice %421 {offsets = [112, 0], sizes = [16, 16], strides = [1, 1]} : vector<128x16xf32> to vector<16x16xf32>
    %472 = vector.broadcast %66 : f32 to vector<16x16xf32>
    %473 = arith.mulf %472, %471 : vector<16x16xf32>
    %474 = arith.addf %467, %473 : vector<16x16xf32>
    %475 = vector.broadcast %138 : f32 to vector<16x16xf32>
    %476 = arith.mulf %475, %471 : vector<16x16xf32>
    %477 = arith.addf %470, %476 : vector<16x16xf32>
    %478 = vector.extract_strided_slice %239 {offsets = [0, 0], sizes = [16, 16], strides = [1, 1]} : vector<128x16xf32> to vector<16x16xf32>
    %479 = vector.broadcast %4 : f32 to vector<16x16xf32>
    %480 = arith.mulf %479, %478 : vector<16x16xf32>
    %481 = arith.addf %474, %480 : vector<16x16xf32>
    %482 = vector.broadcast %76 : f32 to vector<16x16xf32>
    %483 = arith.mulf %482, %478 : vector<16x16xf32>
    %484 = arith.addf %477, %483 : vector<16x16xf32>
    %485 = vector.extract_strided_slice %239 {offsets = [16, 0], sizes = [16, 16], strides = [1, 1]} : vector<128x16xf32> to vector<16x16xf32>
    %486 = vector.broadcast %13 : f32 to vector<16x16xf32>
    %487 = arith.mulf %486, %485 : vector<16x16xf32>
    %488 = arith.addf %481, %487 : vector<16x16xf32>
    %489 = vector.broadcast %85 : f32 to vector<16x16xf32>
    %490 = arith.mulf %489, %485 : vector<16x16xf32>
    %491 = arith.addf %484, %490 : vector<16x16xf32>
    %492 = vector.extract_strided_slice %239 {offsets = [32, 0], sizes = [16, 16], strides = [1, 1]} : vector<128x16xf32> to vector<16x16xf32>
    %493 = vector.broadcast %22 : f32 to vector<16x16xf32>
    %494 = arith.mulf %493, %492 : vector<16x16xf32>
    %495 = arith.addf %488, %494 : vector<16x16xf32>
    %496 = vector.broadcast %94 : f32 to vector<16x16xf32>
    %497 = arith.mulf %496, %492 : vector<16x16xf32>
    %498 = arith.addf %491, %497 : vector<16x16xf32>
    %499 = vector.extract_strided_slice %239 {offsets = [48, 0], sizes = [16, 16], strides = [1, 1]} : vector<128x16xf32> to vector<16x16xf32>
    %500 = vector.broadcast %31 : f32 to vector<16x16xf32>
    %501 = arith.mulf %500, %499 : vector<16x16xf32>
    %502 = arith.addf %495, %501 : vector<16x16xf32>
    %503 = vector.broadcast %103 : f32 to vector<16x16xf32>
    %504 = arith.mulf %503, %499 : vector<16x16xf32>
    %505 = arith.addf %498, %504 : vector<16x16xf32>
    %506 = vector.extract_strided_slice %239 {offsets = [64, 0], sizes = [16, 16], strides = [1, 1]} : vector<128x16xf32> to vector<16x16xf32>
    %507 = vector.broadcast %40 : f32 to vector<16x16xf32>
    %508 = arith.mulf %507, %506 : vector<16x16xf32>
    %509 = arith.addf %502, %508 : vector<16x16xf32>
    %510 = vector.broadcast %112 : f32 to vector<16x16xf32>
    %511 = arith.mulf %510, %506 : vector<16x16xf32>
    %512 = arith.addf %505, %511 : vector<16x16xf32>
    %513 = vector.extract_strided_slice %239 {offsets = [80, 0], sizes = [16, 16], strides = [1, 1]} : vector<128x16xf32> to vector<16x16xf32>
    %514 = vector.broadcast %49 : f32 to vector<16x16xf32>
    %515 = arith.mulf %514, %513 : vector<16x16xf32>
    %516 = arith.addf %509, %515 : vector<16x16xf32>
    %517 = vector.broadcast %121 : f32 to vector<16x16xf32>
    %518 = arith.mulf %517, %513 : vector<16x16xf32>
    %519 = arith.addf %512, %518 : vector<16x16xf32>
    %520 = vector.extract_strided_slice %239 {offsets = [96, 0], sizes = [16, 16], strides = [1, 1]} : vector<128x16xf32> to vector<16x16xf32>
    %521 = vector.broadcast %58 : f32 to vector<16x16xf32>
    %522 = arith.mulf %521, %520 : vector<16x16xf32>
    %523 = arith.addf %516, %522 : vector<16x16xf32>
    %524 = vector.broadcast %130 : f32 to vector<16x16xf32>
    %525 = arith.mulf %524, %520 : vector<16x16xf32>
    %526 = arith.addf %519, %525 : vector<16x16xf32>
    %527 = vector.extract_strided_slice %239 {offsets = [112, 0], sizes = [16, 16], strides = [1, 1]} : vector<128x16xf32> to vector<16x16xf32>
    %528 = vector.broadcast %67 : f32 to vector<16x16xf32>
    %529 = arith.mulf %528, %527 : vector<16x16xf32>
    %530 = arith.addf %523, %529 : vector<16x16xf32>
    %531 = vector.broadcast %139 : f32 to vector<16x16xf32>
    %532 = arith.mulf %531, %527 : vector<16x16xf32>
    %533 = arith.addf %526, %532 : vector<16x16xf32>
    %c15_i32_106 = arith.constant 15 : i32
    %534 = tpu.dynamic_rotate %239 by %c15_i32_106 dim 1 : vector<128x16xf32>, i32 -> vector<128x16xf32>
    %535 = vector.broadcast %181 : vector<1x16xf32> to vector<128x16xf32>
    %536 = arith.mulf %534, %535 : vector<128x16xf32>
    %537 = vector.extract_strided_slice %536 {offsets = [0, 0], sizes = [16, 16], strides = [1, 1]} : vector<128x16xf32> to vector<16x16xf32>
    %538 = vector.broadcast %5 : f32 to vector<16x16xf32>
    %539 = arith.mulf %538, %537 : vector<16x16xf32>
    %540 = arith.addf %530, %539 : vector<16x16xf32>
    %541 = vector.broadcast %77 : f32 to vector<16x16xf32>
    %542 = arith.mulf %541, %537 : vector<16x16xf32>
    %543 = arith.addf %533, %542 : vector<16x16xf32>
    %544 = vector.extract_strided_slice %536 {offsets = [16, 0], sizes = [16, 16], strides = [1, 1]} : vector<128x16xf32> to vector<16x16xf32>
    %545 = vector.broadcast %14 : f32 to vector<16x16xf32>
    %546 = arith.mulf %545, %544 : vector<16x16xf32>
    %547 = arith.addf %540, %546 : vector<16x16xf32>
    %548 = vector.broadcast %86 : f32 to vector<16x16xf32>
    %549 = arith.mulf %548, %544 : vector<16x16xf32>
    %550 = arith.addf %543, %549 : vector<16x16xf32>
    %551 = vector.extract_strided_slice %536 {offsets = [32, 0], sizes = [16, 16], strides = [1, 1]} : vector<128x16xf32> to vector<16x16xf32>
    %552 = vector.broadcast %23 : f32 to vector<16x16xf32>
    %553 = arith.mulf %552, %551 : vector<16x16xf32>
    %554 = arith.addf %547, %553 : vector<16x16xf32>
    %555 = vector.broadcast %95 : f32 to vector<16x16xf32>
    %556 = arith.mulf %555, %551 : vector<16x16xf32>
    %557 = arith.addf %550, %556 : vector<16x16xf32>
    %558 = vector.extract_strided_slice %536 {offsets = [48, 0], sizes = [16, 16], strides = [1, 1]} : vector<128x16xf32> to vector<16x16xf32>
    %559 = vector.broadcast %32 : f32 to vector<16x16xf32>
    %560 = arith.mulf %559, %558 : vector<16x16xf32>
    %561 = arith.addf %554, %560 : vector<16x16xf32>
    %562 = vector.broadcast %104 : f32 to vector<16x16xf32>
    %563 = arith.mulf %562, %558 : vector<16x16xf32>
    %564 = arith.addf %557, %563 : vector<16x16xf32>
    %565 = vector.extract_strided_slice %536 {offsets = [64, 0], sizes = [16, 16], strides = [1, 1]} : vector<128x16xf32> to vector<16x16xf32>
    %566 = vector.broadcast %41 : f32 to vector<16x16xf32>
    %567 = arith.mulf %566, %565 : vector<16x16xf32>
    %568 = arith.addf %561, %567 : vector<16x16xf32>
    %569 = vector.broadcast %113 : f32 to vector<16x16xf32>
    %570 = arith.mulf %569, %565 : vector<16x16xf32>
    %571 = arith.addf %564, %570 : vector<16x16xf32>
    %572 = vector.extract_strided_slice %536 {offsets = [80, 0], sizes = [16, 16], strides = [1, 1]} : vector<128x16xf32> to vector<16x16xf32>
    %573 = vector.broadcast %50 : f32 to vector<16x16xf32>
    %574 = arith.mulf %573, %572 : vector<16x16xf32>
    %575 = arith.addf %568, %574 : vector<16x16xf32>
    %576 = vector.broadcast %122 : f32 to vector<16x16xf32>
    %577 = arith.mulf %576, %572 : vector<16x16xf32>
    %578 = arith.addf %571, %577 : vector<16x16xf32>
    %579 = vector.extract_strided_slice %536 {offsets = [96, 0], sizes = [16, 16], strides = [1, 1]} : vector<128x16xf32> to vector<16x16xf32>
    %580 = vector.broadcast %59 : f32 to vector<16x16xf32>
    %581 = arith.mulf %580, %579 : vector<16x16xf32>
    %582 = arith.addf %575, %581 : vector<16x16xf32>
    %583 = vector.broadcast %131 : f32 to vector<16x16xf32>
    %584 = arith.mulf %583, %579 : vector<16x16xf32>
    %585 = arith.addf %578, %584 : vector<16x16xf32>
    %586 = vector.extract_strided_slice %536 {offsets = [112, 0], sizes = [16, 16], strides = [1, 1]} : vector<128x16xf32> to vector<16x16xf32>
    %587 = vector.broadcast %68 : f32 to vector<16x16xf32>
    %588 = arith.mulf %587, %586 : vector<16x16xf32>
    %589 = arith.addf %582, %588 : vector<16x16xf32>
    %590 = vector.broadcast %140 : f32 to vector<16x16xf32>
    %591 = arith.mulf %590, %586 : vector<16x16xf32>
    %592 = arith.addf %585, %591 : vector<16x16xf32>
    %c127_i32 = arith.constant 127 : i32
    %593 = tpu.dynamic_rotate %239 by %c127_i32 dim 0 : vector<128x16xf32>, i32 -> vector<128x16xf32>
    %c1_i32_107 = arith.constant 1 : i32
    %594 = tpu.dynamic_rotate %593 by %c1_i32_107 dim 1 : vector<128x16xf32>, i32 -> vector<128x16xf32>
    %595 = arith.mulf %594, %188 : vector<128x16xf32>
    %596 = vector.extract_strided_slice %595 {offsets = [0, 0], sizes = [16, 16], strides = [1, 1]} : vector<128x16xf32> to vector<16x16xf32>
    %597 = vector.broadcast %6 : f32 to vector<16x16xf32>
    %598 = arith.mulf %597, %596 : vector<16x16xf32>
    %599 = arith.addf %589, %598 : vector<16x16xf32>
    %600 = vector.broadcast %78 : f32 to vector<16x16xf32>
    %601 = arith.mulf %600, %596 : vector<16x16xf32>
    %602 = arith.addf %592, %601 : vector<16x16xf32>
    %603 = vector.extract_strided_slice %595 {offsets = [16, 0], sizes = [16, 16], strides = [1, 1]} : vector<128x16xf32> to vector<16x16xf32>
    %604 = vector.broadcast %15 : f32 to vector<16x16xf32>
    %605 = arith.mulf %604, %603 : vector<16x16xf32>
    %606 = arith.addf %599, %605 : vector<16x16xf32>
    %607 = vector.broadcast %87 : f32 to vector<16x16xf32>
    %608 = arith.mulf %607, %603 : vector<16x16xf32>
    %609 = arith.addf %602, %608 : vector<16x16xf32>
    %610 = vector.extract_strided_slice %595 {offsets = [32, 0], sizes = [16, 16], strides = [1, 1]} : vector<128x16xf32> to vector<16x16xf32>
    %611 = vector.broadcast %24 : f32 to vector<16x16xf32>
    %612 = arith.mulf %611, %610 : vector<16x16xf32>
    %613 = arith.addf %606, %612 : vector<16x16xf32>
    %614 = vector.broadcast %96 : f32 to vector<16x16xf32>
    %615 = arith.mulf %614, %610 : vector<16x16xf32>
    %616 = arith.addf %609, %615 : vector<16x16xf32>
    %617 = vector.extract_strided_slice %595 {offsets = [48, 0], sizes = [16, 16], strides = [1, 1]} : vector<128x16xf32> to vector<16x16xf32>
    %618 = vector.broadcast %33 : f32 to vector<16x16xf32>
    %619 = arith.mulf %618, %617 : vector<16x16xf32>
    %620 = arith.addf %613, %619 : vector<16x16xf32>
    %621 = vector.broadcast %105 : f32 to vector<16x16xf32>
    %622 = arith.mulf %621, %617 : vector<16x16xf32>
    %623 = arith.addf %616, %622 : vector<16x16xf32>
    %624 = vector.extract_strided_slice %595 {offsets = [64, 0], sizes = [16, 16], strides = [1, 1]} : vector<128x16xf32> to vector<16x16xf32>
    %625 = vector.broadcast %42 : f32 to vector<16x16xf32>
    %626 = arith.mulf %625, %624 : vector<16x16xf32>
    %627 = arith.addf %620, %626 : vector<16x16xf32>
    %628 = vector.broadcast %114 : f32 to vector<16x16xf32>
    %629 = arith.mulf %628, %624 : vector<16x16xf32>
    %630 = arith.addf %623, %629 : vector<16x16xf32>
    %631 = vector.extract_strided_slice %595 {offsets = [80, 0], sizes = [16, 16], strides = [1, 1]} : vector<128x16xf32> to vector<16x16xf32>
    %632 = vector.broadcast %51 : f32 to vector<16x16xf32>
    %633 = arith.mulf %632, %631 : vector<16x16xf32>
    %634 = arith.addf %627, %633 : vector<16x16xf32>
    %635 = vector.broadcast %123 : f32 to vector<16x16xf32>
    %636 = arith.mulf %635, %631 : vector<16x16xf32>
    %637 = arith.addf %630, %636 : vector<16x16xf32>
    %638 = vector.extract_strided_slice %595 {offsets = [96, 0], sizes = [16, 16], strides = [1, 1]} : vector<128x16xf32> to vector<16x16xf32>
    %639 = vector.broadcast %60 : f32 to vector<16x16xf32>
    %640 = arith.mulf %639, %638 : vector<16x16xf32>
    %641 = arith.addf %634, %640 : vector<16x16xf32>
    %642 = vector.broadcast %132 : f32 to vector<16x16xf32>
    %643 = arith.mulf %642, %638 : vector<16x16xf32>
    %644 = arith.addf %637, %643 : vector<16x16xf32>
    %645 = vector.extract_strided_slice %595 {offsets = [112, 0], sizes = [16, 16], strides = [1, 1]} : vector<128x16xf32> to vector<16x16xf32>
    %646 = vector.broadcast %69 : f32 to vector<16x16xf32>
    %647 = arith.mulf %646, %645 : vector<16x16xf32>
    %648 = arith.addf %641, %647 : vector<16x16xf32>
    %649 = vector.broadcast %141 : f32 to vector<16x16xf32>
    %650 = arith.mulf %649, %645 : vector<16x16xf32>
    %651 = arith.addf %644, %650 : vector<16x16xf32>
    %c127_i32_108 = arith.constant 127 : i32
    %652 = tpu.dynamic_rotate %239 by %c127_i32_108 dim 0 : vector<128x16xf32>, i32 -> vector<128x16xf32>
    %653 = vector.broadcast %190 : vector<128x1xf32> to vector<128x16xf32>
    %654 = arith.mulf %652, %653 : vector<128x16xf32>
    %655 = vector.extract_strided_slice %654 {offsets = [0, 0], sizes = [16, 16], strides = [1, 1]} : vector<128x16xf32> to vector<16x16xf32>
    %656 = vector.broadcast %7 : f32 to vector<16x16xf32>
    %657 = arith.mulf %656, %655 : vector<16x16xf32>
    %658 = arith.addf %648, %657 : vector<16x16xf32>
    %659 = vector.broadcast %79 : f32 to vector<16x16xf32>
    %660 = arith.mulf %659, %655 : vector<16x16xf32>
    %661 = arith.addf %651, %660 : vector<16x16xf32>
    %662 = vector.extract_strided_slice %654 {offsets = [16, 0], sizes = [16, 16], strides = [1, 1]} : vector<128x16xf32> to vector<16x16xf32>
    %663 = vector.broadcast %16 : f32 to vector<16x16xf32>
    %664 = arith.mulf %663, %662 : vector<16x16xf32>
    %665 = arith.addf %658, %664 : vector<16x16xf32>
    %666 = vector.broadcast %88 : f32 to vector<16x16xf32>
    %667 = arith.mulf %666, %662 : vector<16x16xf32>
    %668 = arith.addf %661, %667 : vector<16x16xf32>
    %669 = vector.extract_strided_slice %654 {offsets = [32, 0], sizes = [16, 16], strides = [1, 1]} : vector<128x16xf32> to vector<16x16xf32>
    %670 = vector.broadcast %25 : f32 to vector<16x16xf32>
    %671 = arith.mulf %670, %669 : vector<16x16xf32>
    %672 = arith.addf %665, %671 : vector<16x16xf32>
    %673 = vector.broadcast %97 : f32 to vector<16x16xf32>
    %674 = arith.mulf %673, %669 : vector<16x16xf32>
    %675 = arith.addf %668, %674 : vector<16x16xf32>
    %676 = vector.extract_strided_slice %654 {offsets = [48, 0], sizes = [16, 16], strides = [1, 1]} : vector<128x16xf32> to vector<16x16xf32>
    %677 = vector.broadcast %34 : f32 to vector<16x16xf32>
    %678 = arith.mulf %677, %676 : vector<16x16xf32>
    %679 = arith.addf %672, %678 : vector<16x16xf32>
    %680 = vector.broadcast %106 : f32 to vector<16x16xf32>
    %681 = arith.mulf %680, %676 : vector<16x16xf32>
    %682 = arith.addf %675, %681 : vector<16x16xf32>
    %683 = vector.extract_strided_slice %654 {offsets = [64, 0], sizes = [16, 16], strides = [1, 1]} : vector<128x16xf32> to vector<16x16xf32>
    %684 = vector.broadcast %43 : f32 to vector<16x16xf32>
    %685 = arith.mulf %684, %683 : vector<16x16xf32>
    %686 = arith.addf %679, %685 : vector<16x16xf32>
    %687 = vector.broadcast %115 : f32 to vector<16x16xf32>
    %688 = arith.mulf %687, %683 : vector<16x16xf32>
    %689 = arith.addf %682, %688 : vector<16x16xf32>
    %690 = vector.extract_strided_slice %654 {offsets = [80, 0], sizes = [16, 16], strides = [1, 1]} : vector<128x16xf32> to vector<16x16xf32>
    %691 = vector.broadcast %52 : f32 to vector<16x16xf32>
    %692 = arith.mulf %691, %690 : vector<16x16xf32>
    %693 = arith.addf %686, %692 : vector<16x16xf32>
    %694 = vector.broadcast %124 : f32 to vector<16x16xf32>
    %695 = arith.mulf %694, %690 : vector<16x16xf32>
    %696 = arith.addf %689, %695 : vector<16x16xf32>
    %697 = vector.extract_strided_slice %654 {offsets = [96, 0], sizes = [16, 16], strides = [1, 1]} : vector<128x16xf32> to vector<16x16xf32>
    %698 = vector.broadcast %61 : f32 to vector<16x16xf32>
    %699 = arith.mulf %698, %697 : vector<16x16xf32>
    %700 = arith.addf %693, %699 : vector<16x16xf32>
    %701 = vector.broadcast %133 : f32 to vector<16x16xf32>
    %702 = arith.mulf %701, %697 : vector<16x16xf32>
    %703 = arith.addf %696, %702 : vector<16x16xf32>
    %704 = vector.extract_strided_slice %654 {offsets = [112, 0], sizes = [16, 16], strides = [1, 1]} : vector<128x16xf32> to vector<16x16xf32>
    %705 = vector.broadcast %70 : f32 to vector<16x16xf32>
    %706 = arith.mulf %705, %704 : vector<16x16xf32>
    %707 = arith.addf %700, %706 : vector<16x16xf32>
    %708 = vector.broadcast %142 : f32 to vector<16x16xf32>
    %709 = arith.mulf %708, %704 : vector<16x16xf32>
    %710 = arith.addf %703, %709 : vector<16x16xf32>
    %c127_i32_109 = arith.constant 127 : i32
    %711 = tpu.dynamic_rotate %239 by %c127_i32_109 dim 0 : vector<128x16xf32>, i32 -> vector<128x16xf32>
    %c15_i32_110 = arith.constant 15 : i32
    %712 = tpu.dynamic_rotate %711 by %c15_i32_110 dim 1 : vector<128x16xf32>, i32 -> vector<128x16xf32>
    %713 = arith.mulf %712, %197 : vector<128x16xf32>
    %714 = vector.extract_strided_slice %713 {offsets = [0, 0], sizes = [16, 16], strides = [1, 1]} : vector<128x16xf32> to vector<16x16xf32>
    %715 = vector.broadcast %8 : f32 to vector<16x16xf32>
    %716 = arith.mulf %715, %714 : vector<16x16xf32>
    %717 = arith.addf %707, %716 : vector<16x16xf32>
    %718 = vector.broadcast %80 : f32 to vector<16x16xf32>
    %719 = arith.mulf %718, %714 : vector<16x16xf32>
    %720 = arith.addf %710, %719 : vector<16x16xf32>
    %721 = vector.extract_strided_slice %713 {offsets = [16, 0], sizes = [16, 16], strides = [1, 1]} : vector<128x16xf32> to vector<16x16xf32>
    %722 = vector.broadcast %17 : f32 to vector<16x16xf32>
    %723 = arith.mulf %722, %721 : vector<16x16xf32>
    %724 = arith.addf %717, %723 : vector<16x16xf32>
    %725 = vector.broadcast %89 : f32 to vector<16x16xf32>
    %726 = arith.mulf %725, %721 : vector<16x16xf32>
    %727 = arith.addf %720, %726 : vector<16x16xf32>
    %728 = vector.extract_strided_slice %713 {offsets = [32, 0], sizes = [16, 16], strides = [1, 1]} : vector<128x16xf32> to vector<16x16xf32>
    %729 = vector.broadcast %26 : f32 to vector<16x16xf32>
    %730 = arith.mulf %729, %728 : vector<16x16xf32>
    %731 = arith.addf %724, %730 : vector<16x16xf32>
    %732 = vector.broadcast %98 : f32 to vector<16x16xf32>
    %733 = arith.mulf %732, %728 : vector<16x16xf32>
    %734 = arith.addf %727, %733 : vector<16x16xf32>
    %735 = vector.extract_strided_slice %713 {offsets = [48, 0], sizes = [16, 16], strides = [1, 1]} : vector<128x16xf32> to vector<16x16xf32>
    %736 = vector.broadcast %35 : f32 to vector<16x16xf32>
    %737 = arith.mulf %736, %735 : vector<16x16xf32>
    %738 = arith.addf %731, %737 : vector<16x16xf32>
    %739 = vector.broadcast %107 : f32 to vector<16x16xf32>
    %740 = arith.mulf %739, %735 : vector<16x16xf32>
    %741 = arith.addf %734, %740 : vector<16x16xf32>
    %742 = vector.extract_strided_slice %713 {offsets = [64, 0], sizes = [16, 16], strides = [1, 1]} : vector<128x16xf32> to vector<16x16xf32>
    %743 = vector.broadcast %44 : f32 to vector<16x16xf32>
    %744 = arith.mulf %743, %742 : vector<16x16xf32>
    %745 = arith.addf %738, %744 : vector<16x16xf32>
    %746 = vector.broadcast %116 : f32 to vector<16x16xf32>
    %747 = arith.mulf %746, %742 : vector<16x16xf32>
    %748 = arith.addf %741, %747 : vector<16x16xf32>
    %749 = vector.extract_strided_slice %713 {offsets = [80, 0], sizes = [16, 16], strides = [1, 1]} : vector<128x16xf32> to vector<16x16xf32>
    %750 = vector.broadcast %53 : f32 to vector<16x16xf32>
    %751 = arith.mulf %750, %749 : vector<16x16xf32>
    %752 = arith.addf %745, %751 : vector<16x16xf32>
    %753 = vector.broadcast %125 : f32 to vector<16x16xf32>
    %754 = arith.mulf %753, %749 : vector<16x16xf32>
    %755 = arith.addf %748, %754 : vector<16x16xf32>
    %756 = vector.extract_strided_slice %713 {offsets = [96, 0], sizes = [16, 16], strides = [1, 1]} : vector<128x16xf32> to vector<16x16xf32>
    %757 = vector.broadcast %62 : f32 to vector<16x16xf32>
    %758 = arith.mulf %757, %756 : vector<16x16xf32>
    %759 = arith.addf %752, %758 : vector<16x16xf32>
    %760 = vector.broadcast %134 : f32 to vector<16x16xf32>
    %761 = arith.mulf %760, %756 : vector<16x16xf32>
    %762 = arith.addf %755, %761 : vector<16x16xf32>
    %763 = vector.extract_strided_slice %713 {offsets = [112, 0], sizes = [16, 16], strides = [1, 1]} : vector<128x16xf32> to vector<16x16xf32>
    %764 = vector.broadcast %71 : f32 to vector<16x16xf32>
    %765 = arith.mulf %764, %763 : vector<16x16xf32>
    %766 = arith.addf %759, %765 : vector<16x16xf32>
    %767 = vector.broadcast %143 : f32 to vector<16x16xf32>
    %768 = arith.mulf %767, %763 : vector<16x16xf32>
    %769 = arith.addf %762, %768 : vector<16x16xf32>
    %770 = tpu.concatenate %766, %769 in 0 : vector<16x16xf32>, vector<16x16xf32> -> vector<32x16xf32>
    %cst_111 = arith.constant 0.000000e+00 : f32
    %771 = vector.broadcast %cst_111 : f32 to vector<32x16xf32>
    %772 = arith.cmpf ogt, %770, %771 : vector<32x16xf32>
    %cst_112 = arith.constant 2.000000e-01 : f32
    %773 = vector.broadcast %cst_112 : f32 to vector<32x16xf32>
    %774 = arith.mulf %773, %770 : vector<32x16xf32>
    %775 = arith.select %772, %770, %774 : vector<32x16xi1>, vector<32x16xf32>
    %c15_i32_113 = arith.constant 15 : i32
    %776 = tpu.dynamic_rotate %775 by %c15_i32_113 dim 1 : vector<32x16xf32>, i32 -> vector<32x16xf32>
    %777 = arith.maximumf %775, %776 : vector<32x16xf32>
    %c31_i32 = arith.constant 31 : i32
    %778 = tpu.dynamic_rotate %777 by %c31_i32 dim 0 : vector<32x16xf32>, i32 -> vector<32x16xf32>
    %779 = arith.maximumf %777, %778 : vector<32x16xf32>
    %cst_114 = arith.constant dense<0.000000e+00> : vector<32x8xf32>
    %780 = tpu.matmul %779, %234, %cst_114 {dimension_numbers = #tpu.dot_dimension_numbers<[1], [0], [0], [1], [0, 0, 1, 1], [], []>} : vector<32x16xf32>, vector<16x8xf32>, vector<32x8xf32> -> vector<32x8xf32>
    %cst_115 = arith.constant dense<0.000000e+00> : vector<16x8xf32>
    %781 = tpu.matmul %235, %780, %cst_115 {dimension_numbers = #tpu.dot_dimension_numbers<[1], [0], [0], [1], [0, 0, 1, 1], [], []>} : vector<16x32xf32>, vector<32x8xf32>, vector<16x8xf32> -> vector<16x8xf32>
    %cst_116 = arith.constant 0.000000e+00 : f32
    %782 = vector.broadcast %cst_116 : f32 to vector<8x8xf32>
    %c1_i32_117 = arith.constant 1 : i32
    %783 = tpu.dynamic_rotate %781 by %c1_i32_117 dim 0 : vector<16x8xf32>, i32 -> vector<16x8xf32>
    %c1_i32_118 = arith.constant 1 : i32
    %784 = tpu.dynamic_rotate %783 by %c1_i32_118 dim 1 : vector<16x8xf32>, i32 -> vector<16x8xf32>
    %785 = arith.mulf %784, %204 : vector<16x8xf32>
    %786 = vector.extract_strided_slice %785 {offsets = [0, 0], sizes = [8, 8], strides = [1, 1]} : vector<16x8xf32> to vector<8x8xf32>
    %787 = vector.broadcast %144 : f32 to vector<8x8xf32>
    %788 = arith.mulf %787, %786 : vector<8x8xf32>
    %789 = arith.addf %782, %788 : vector<8x8xf32>
    %790 = vector.extract_strided_slice %785 {offsets = [8, 0], sizes = [8, 8], strides = [1, 1]} : vector<16x8xf32> to vector<8x8xf32>
    %791 = vector.broadcast %153 : f32 to vector<8x8xf32>
    %792 = arith.mulf %791, %790 : vector<8x8xf32>
    %793 = arith.addf %789, %792 : vector<8x8xf32>
    %c1_i32_119 = arith.constant 1 : i32
    %794 = tpu.dynamic_rotate %781 by %c1_i32_119 dim 0 : vector<16x8xf32>, i32 -> vector<16x8xf32>
    %795 = vector.broadcast %206 : vector<16x1xf32> to vector<16x8xf32>
    %796 = arith.mulf %794, %795 : vector<16x8xf32>
    %797 = vector.extract_strided_slice %796 {offsets = [0, 0], sizes = [8, 8], strides = [1, 1]} : vector<16x8xf32> to vector<8x8xf32>
    %798 = vector.broadcast %145 : f32 to vector<8x8xf32>
    %799 = arith.mulf %798, %797 : vector<8x8xf32>
    %800 = arith.addf %793, %799 : vector<8x8xf32>
    %801 = vector.extract_strided_slice %796 {offsets = [8, 0], sizes = [8, 8], strides = [1, 1]} : vector<16x8xf32> to vector<8x8xf32>
    %802 = vector.broadcast %154 : f32 to vector<8x8xf32>
    %803 = arith.mulf %802, %801 : vector<8x8xf32>
    %804 = arith.addf %800, %803 : vector<8x8xf32>
    %c1_i32_120 = arith.constant 1 : i32
    %805 = tpu.dynamic_rotate %781 by %c1_i32_120 dim 0 : vector<16x8xf32>, i32 -> vector<16x8xf32>
    %c7_i32 = arith.constant 7 : i32
    %806 = tpu.dynamic_rotate %805 by %c7_i32 dim 1 : vector<16x8xf32>, i32 -> vector<16x8xf32>
    %807 = arith.mulf %806, %213 : vector<16x8xf32>
    %808 = vector.extract_strided_slice %807 {offsets = [0, 0], sizes = [8, 8], strides = [1, 1]} : vector<16x8xf32> to vector<8x8xf32>
    %809 = vector.broadcast %146 : f32 to vector<8x8xf32>
    %810 = arith.mulf %809, %808 : vector<8x8xf32>
    %811 = arith.addf %804, %810 : vector<8x8xf32>
    %812 = vector.extract_strided_slice %807 {offsets = [8, 0], sizes = [8, 8], strides = [1, 1]} : vector<16x8xf32> to vector<8x8xf32>
    %813 = vector.broadcast %155 : f32 to vector<8x8xf32>
    %814 = arith.mulf %813, %812 : vector<8x8xf32>
    %815 = arith.addf %811, %814 : vector<8x8xf32>
    %c1_i32_121 = arith.constant 1 : i32
    %816 = tpu.dynamic_rotate %781 by %c1_i32_121 dim 1 : vector<16x8xf32>, i32 -> vector<16x8xf32>
    %817 = vector.broadcast %215 : vector<1x8xf32> to vector<16x8xf32>
    %818 = arith.mulf %816, %817 : vector<16x8xf32>
    %819 = vector.extract_strided_slice %818 {offsets = [0, 0], sizes = [8, 8], strides = [1, 1]} : vector<16x8xf32> to vector<8x8xf32>
    %820 = vector.broadcast %147 : f32 to vector<8x8xf32>
    %821 = arith.mulf %820, %819 : vector<8x8xf32>
    %822 = arith.addf %815, %821 : vector<8x8xf32>
    %823 = vector.extract_strided_slice %818 {offsets = [8, 0], sizes = [8, 8], strides = [1, 1]} : vector<16x8xf32> to vector<8x8xf32>
    %824 = vector.broadcast %156 : f32 to vector<8x8xf32>
    %825 = arith.mulf %824, %823 : vector<8x8xf32>
    %826 = arith.addf %822, %825 : vector<8x8xf32>
    %827 = vector.extract_strided_slice %781 {offsets = [0, 0], sizes = [8, 8], strides = [1, 1]} : vector<16x8xf32> to vector<8x8xf32>
    %828 = vector.broadcast %148 : f32 to vector<8x8xf32>
    %829 = arith.mulf %828, %827 : vector<8x8xf32>
    %830 = arith.addf %826, %829 : vector<8x8xf32>
    %831 = vector.extract_strided_slice %781 {offsets = [8, 0], sizes = [8, 8], strides = [1, 1]} : vector<16x8xf32> to vector<8x8xf32>
    %832 = vector.broadcast %157 : f32 to vector<8x8xf32>
    %833 = arith.mulf %832, %831 : vector<8x8xf32>
    %834 = arith.addf %830, %833 : vector<8x8xf32>
    %c7_i32_122 = arith.constant 7 : i32
    %835 = tpu.dynamic_rotate %781 by %c7_i32_122 dim 1 : vector<16x8xf32>, i32 -> vector<16x8xf32>
    %836 = vector.broadcast %217 : vector<1x8xf32> to vector<16x8xf32>
    %837 = arith.mulf %835, %836 : vector<16x8xf32>
    %838 = vector.extract_strided_slice %837 {offsets = [0, 0], sizes = [8, 8], strides = [1, 1]} : vector<16x8xf32> to vector<8x8xf32>
    %839 = vector.broadcast %149 : f32 to vector<8x8xf32>
    %840 = arith.mulf %839, %838 : vector<8x8xf32>
    %841 = arith.addf %834, %840 : vector<8x8xf32>
    %842 = vector.extract_strided_slice %837 {offsets = [8, 0], sizes = [8, 8], strides = [1, 1]} : vector<16x8xf32> to vector<8x8xf32>
    %843 = vector.broadcast %158 : f32 to vector<8x8xf32>
    %844 = arith.mulf %843, %842 : vector<8x8xf32>
    %845 = arith.addf %841, %844 : vector<8x8xf32>
    %c15_i32_123 = arith.constant 15 : i32
    %846 = tpu.dynamic_rotate %781 by %c15_i32_123 dim 0 : vector<16x8xf32>, i32 -> vector<16x8xf32>
    %c1_i32_124 = arith.constant 1 : i32
    %847 = tpu.dynamic_rotate %846 by %c1_i32_124 dim 1 : vector<16x8xf32>, i32 -> vector<16x8xf32>
    %848 = arith.mulf %847, %224 : vector<16x8xf32>
    %849 = vector.extract_strided_slice %848 {offsets = [0, 0], sizes = [8, 8], strides = [1, 1]} : vector<16x8xf32> to vector<8x8xf32>
    %850 = vector.broadcast %150 : f32 to vector<8x8xf32>
    %851 = arith.mulf %850, %849 : vector<8x8xf32>
    %852 = arith.addf %845, %851 : vector<8x8xf32>
    %853 = vector.extract_strided_slice %848 {offsets = [8, 0], sizes = [8, 8], strides = [1, 1]} : vector<16x8xf32> to vector<8x8xf32>
    %854 = vector.broadcast %159 : f32 to vector<8x8xf32>
    %855 = arith.mulf %854, %853 : vector<8x8xf32>
    %856 = arith.addf %852, %855 : vector<8x8xf32>
    %c15_i32_125 = arith.constant 15 : i32
    %857 = tpu.dynamic_rotate %781 by %c15_i32_125 dim 0 : vector<16x8xf32>, i32 -> vector<16x8xf32>
    %858 = vector.broadcast %226 : vector<16x1xf32> to vector<16x8xf32>
    %859 = arith.mulf %857, %858 : vector<16x8xf32>
    %860 = vector.extract_strided_slice %859 {offsets = [0, 0], sizes = [8, 8], strides = [1, 1]} : vector<16x8xf32> to vector<8x8xf32>
    %861 = vector.broadcast %151 : f32 to vector<8x8xf32>
    %862 = arith.mulf %861, %860 : vector<8x8xf32>
    %863 = arith.addf %856, %862 : vector<8x8xf32>
    %864 = vector.extract_strided_slice %859 {offsets = [8, 0], sizes = [8, 8], strides = [1, 1]} : vector<16x8xf32> to vector<8x8xf32>
    %865 = vector.broadcast %160 : f32 to vector<8x8xf32>
    %866 = arith.mulf %865, %864 : vector<8x8xf32>
    %867 = arith.addf %863, %866 : vector<8x8xf32>
    %c15_i32_126 = arith.constant 15 : i32
    %868 = tpu.dynamic_rotate %781 by %c15_i32_126 dim 0 : vector<16x8xf32>, i32 -> vector<16x8xf32>
    %c7_i32_127 = arith.constant 7 : i32
    %869 = tpu.dynamic_rotate %868 by %c7_i32_127 dim 1 : vector<16x8xf32>, i32 -> vector<16x8xf32>
    %870 = arith.mulf %869, %233 : vector<16x8xf32>
    %871 = vector.extract_strided_slice %870 {offsets = [0, 0], sizes = [8, 8], strides = [1, 1]} : vector<16x8xf32> to vector<8x8xf32>
    %872 = vector.broadcast %152 : f32 to vector<8x8xf32>
    %873 = arith.mulf %872, %871 : vector<8x8xf32>
    %874 = arith.addf %867, %873 : vector<8x8xf32>
    %875 = vector.extract_strided_slice %870 {offsets = [8, 0], sizes = [8, 8], strides = [1, 1]} : vector<16x8xf32> to vector<8x8xf32>
    %876 = vector.broadcast %161 : f32 to vector<8x8xf32>
    %877 = arith.mulf %876, %875 : vector<8x8xf32>
    %878 = arith.addf %874, %877 : vector<8x8xf32>
    %cst_128 = arith.constant 0.000000e+00 : f32
    %879 = vector.broadcast %cst_128 : f32 to vector<8x8xf32>
    %880 = arith.cmpf ogt, %878, %879 : vector<8x8xf32>
    %cst_129 = arith.constant 2.000000e-01 : f32
    %881 = vector.broadcast %cst_129 : f32 to vector<8x8xf32>
    %882 = arith.mulf %881, %878 : vector<8x8xf32>
    %883 = arith.select %880, %878, %882 : vector<8x8xi1>, vector<8x8xf32>
    %c7_i32_130 = arith.constant 7 : i32
    %884 = tpu.dynamic_rotate %883 by %c7_i32_130 dim 1 : vector<8x8xf32>, i32 -> vector<8x8xf32>
    %885 = arith.maximumf %883, %884 : vector<8x8xf32>
    %c7_i32_131 = arith.constant 7 : i32
    %886 = tpu.dynamic_rotate %885 by %c7_i32_131 dim 0 : vector<8x8xf32>, i32 -> vector<8x8xf32>
    %887 = arith.maximumf %885, %886 : vector<8x8xf32>
    %cst_132 = arith.constant dense<0.000000e+00> : vector<8x4xf32>
    %888 = tpu.matmul %887, %236, %cst_132 {dimension_numbers = #tpu.dot_dimension_numbers<[1], [0], [0], [1], [0, 0, 1, 1], [], []>} : vector<8x8xf32>, vector<8x4xf32>, vector<8x4xf32> -> vector<8x4xf32>
    %cst_133 = arith.constant dense<0.000000e+00> : vector<4x4xf32>
    %889 = tpu.matmul %237, %888, %cst_133 {dimension_numbers = #tpu.dot_dimension_numbers<[1], [0], [0], [1], [0, 0, 1, 1], [], []>} : vector<4x8xf32>, vector<8x4xf32>, vector<4x4xf32> -> vector<4x4xf32>
    %c0_134 = arith.constant 0 : index
    %c0_135 = arith.constant 0 : index
    %c0_136 = arith.constant 0 : index
    %890 = vector.load %arg12[%c0_134, %c0_135, %c0_136] : memref<1x4x4xf32, #tpu.memory_space<vmem>>, vector<1x4x4xf32>
    %891 = vector.shape_cast %890 : vector<1x4x4xf32> to vector<4x4xf32>
    %892 = vector.shape_cast %889 : vector<4x4xf32> to vector<1x4x4xf32>
    tpu.vector_store %arg12[%c0_134, %c0_135, %c0_136], %892 {strides = array<i32>} : memref<1x4x4xf32, #tpu.memory_space<vmem>>, vector<1x4x4xf32>,
    return
  }
  func.func @transform_0(%arg0: i32) -> (i32, i32, i32) {
    %c0_i32 = arith.constant 0 : i32
    %c0_i32_0 = arith.constant 0 : i32
    %c0_i32_1 = arith.constant 0 : i32
    return %arg0, %c0_i32, %c0_i32_0 : i32, i32, i32
  }
  func.func @transform_1(%arg0: i32) -> i32 {
    %c0_i32 = arith.constant 0 : i32
    %c0_i32_0 = arith.constant 0 : i32
    return %c0_i32 : i32
  }
  func.func @transform_2(%arg0: i32) -> i32 {
    %c0_i32 = arith.constant 0 : i32
    %c0_i32_0 = arith.constant 0 : i32
    return %c0_i32 : i32
  }
  func.func @transform_3(%arg0: i32) -> (i32, i32, i32) {
    %c0_i32 = arith.constant 0 : i32
    %c0_i32_0 = arith.constant 0 : i32
    %c0_i32_1 = arith.constant 0 : i32
    %c0_i32_2 = arith.constant 0 : i32
    return %c0_i32, %c0_i32_0, %c0_i32_1 : i32, i32, i32
  }
  func.func @transform_4(%arg0: i32) -> (i32, i32, i32) {
    %c0_i32 = arith.constant 0 : i32
    %c0_i32_0 = arith.constant 0 : i32
    %c0_i32_1 = arith.constant 0 : i32
    %c0_i32_2 = arith.constant 0 : i32
    return %c0_i32, %c0_i32_0, %c0_i32_1 : i32, i32, i32
  }
  func.func @transform_5(%arg0: i32) -> (i32, i32, i32) {
    %c0_i32 = arith.constant 0 : i32
    %c0_i32_0 = arith.constant 0 : i32
    %c0_i32_1 = arith.constant 0 : i32
    %c0_i32_2 = arith.constant 0 : i32
    return %c0_i32, %c0_i32_0, %c0_i32_1 : i32, i32, i32
  }
  func.func @transform_6(%arg0: i32) -> (i32, i32, i32) {
    %c0_i32 = arith.constant 0 : i32
    %c0_i32_0 = arith.constant 0 : i32
    %c0_i32_1 = arith.constant 0 : i32
    %c0_i32_2 = arith.constant 0 : i32
    return %c0_i32, %c0_i32_0, %c0_i32_1 : i32, i32, i32
  }
  func.func @transform_7(%arg0: i32) -> (i32, i32) {
    %c0_i32 = arith.constant 0 : i32
    %c0_i32_0 = arith.constant 0 : i32
    %c0_i32_1 = arith.constant 0 : i32
    return %c0_i32, %c0_i32_0 : i32, i32
  }
  func.func @transform_8(%arg0: i32) -> (i32, i32) {
    %c0_i32 = arith.constant 0 : i32
    %c0_i32_0 = arith.constant 0 : i32
    %c0_i32_1 = arith.constant 0 : i32
    return %c0_i32, %c0_i32_0 : i32, i32
  }
  func.func @transform_9(%arg0: i32) -> (i32, i32) {
    %c0_i32 = arith.constant 0 : i32
    %c0_i32_0 = arith.constant 0 : i32
    %c0_i32_1 = arith.constant 0 : i32
    return %c0_i32, %c0_i32_0 : i32, i32
  }
  func.func @transform_10(%arg0: i32) -> (i32, i32) {
    %c0_i32 = arith.constant 0 : i32
    %c0_i32_0 = arith.constant 0 : i32
    %c0_i32_1 = arith.constant 0 : i32
    return %c0_i32, %c0_i32_0 : i32, i32
  }
  func.func @transform_11(%arg0: i32) -> (i32, i32, i32) {
    %c0_i32 = arith.constant 0 : i32
    %c0_i32_0 = arith.constant 0 : i32
    %c0_i32_1 = arith.constant 0 : i32
    return %arg0, %c0_i32, %c0_i32_0 : i32, i32, i32
  }
}

</mosaic_0001>

<llo_original>
// kernel: tpu_custom_call.1
$region0: #{tpu_custom_call.1}
  #allocation0 [shape = 'u32[]', space=smem, size = 0x4, offset = 0x4, fixed_abs, tag = 'smem constant byte address 0x4 - core index']
  #allocation1 [shape = 'u32[144,128]{1,0:T(1,128)}', space=vmem, size = 0x12000, scoped, tag = 'internal scratch']
  %s0 = inlined_call_operand.vmem [shape: f32[2,128,16], index: 0, kind: input, shape index: {}]
  %s1 = inlined_call_operand.vmem [shape: f32[144], index: 1, kind: input, shape index: {}]
  %s2 = inlined_call_operand.vmem [shape: f32[18], index: 2, kind: input, shape index: {}]
  %s3 = inlined_call_operand.vmem [shape: f32[3,128,1], index: 3, kind: input, shape index: {}]
  %s4 = inlined_call_operand.vmem [shape: f32[3,1,16], index: 4, kind: input, shape index: {}]
  %s5 = inlined_call_operand.vmem [shape: f32[3,16,1], index: 5, kind: input, shape index: {}]
  %s6 = inlined_call_operand.vmem [shape: f32[3,1,8], index: 6, kind: input, shape index: {}]
  %s7 = inlined_call_operand.vmem [shape: f32[16,8], index: 7, kind: input, shape index: {}]
  %s8 = inlined_call_operand.vmem [shape: f32[16,32], index: 8, kind: input, shape index: {}]
  %s9 = inlined_call_operand.vmem [shape: f32[8,4], index: 9, kind: input, shape index: {}]
  %s10 = inlined_call_operand.vmem [shape: f32[4,8], index: 10, kind: input, shape index: {}]
  %s11 = inlined_call_operand.hbm [shape: f32[2,4,4], index: 11, kind: output, shape index: {}]
  %s12 = sld [smem:[#allocation0]]
  $region85: #{tpu_custom_call.1} parent=0
    _
  %s14 = ssub.s32 1, %s12
  %s15 = scalar_select 0, %s14, %s12
  $region1: #{tpu_custom_call.1} parent=0
    #allocation2 [shape = 'u8[1024]{0}', space=smem, size = 0x400, scoped, tag = 'input window, operand 1, single buffered']
    #allocation3 [shape = 's32[2]{0}', space=sflag, size = 0x8, scoped, tag = 'scoped memory for tpu_custom_call.1']
    #allocation4 [shape = 's32[2]{0}', space=sflag, size = 0x8, scoped, tag = 'scoped memory for tpu_custom_call.1']
    #allocation5 [shape = 'u8[512]{0}', space=smem, size = 0x200, scoped, tag = 'input window, operand 2, single buffered']
    #allocation6 [shape = 's32[1]{0}', space=sflag, size = 0x4, scoped, tag = 'scoped memory for tpu_custom_call.1']
    #allocation7 [shape = 'u8[4096]{0}', space=vmem, size = 0x1000, scoped, tag = 'output window, operand 0']
    %16 = vsyncpa [#allocation4], 0
    %17 = vsyncpa [#allocation6], 0
    %18 = vsyncpa [#allocation3], 0
    %s19 = scalar_lea.sflag [#allocation3], 1
    %20 = vsyncpa %s19, 0
    loop: start=0, step=1, limit=4
    $region2: #{tpu_custom_call.1} parent=1 // loop_pre_header
      _
    $region3: #{tpu_custom_call.1} parent=1 // loop_header
      %s22 = sphi 0, %s26
      %p23 = scmp.ge.s32.totalorder %s22, 4
      %s32 = sphi 0, %s34
      %s35 = sphi 0, %s32
      %s36 = sphi 0, %s35
      %s52 = sphi 0, %s36
      %s56 = sphi 0, %s56
      %s58 = sphi 0, %s56
      %s59 = sphi 0, %s58
      %s73 = sphi 0, %s59
      %s77 = sphi 0, %s77
      %s79 = sphi 0, %s77
      %s80 = sphi 0, %s79
      %s94 = sphi 0, %s80
      %s98 = sphi 0, %s98
      %s100 = sphi 0, %s98
      %s101 = sphi 0, %s100
      %s115 = sphi 0, %s101
      %s119 = sphi 0, %s119
      %s121 = sphi 0, %s119
      %s122 = sphi 0, %s121
      %s136 = sphi 0, %s122
      %s140 = sphi 0, %s140
      %s142 = sphi 0, %s140
      %s143 = sphi 0, %s142
      %s157 = sphi 0, %s143
      %s161 = sphi 0, %s161
      %s163 = sphi 0, %s161
      %s164 = sphi 0, %s163
      %s178 = sphi 0, %s164
      %s182 = sphi 0, %s182
      %s184 = sphi 0, %s182
      %s185 = sphi 0, %s184
      %s199 = sphi 0, %s185
      %s203 = sphi 0, %s203
      %s205 = sphi 0, %s203
      %s206 = sphi 0, %s205
      %s220 = sphi 0, %s206
      %s224 = sphi 0, %s224
      %s226 = sphi 0, %s224
      %s227 = sphi 0, %s226
      %s241 = sphi 0, %s227
      %s245 = sphi 0, %s245
      %s247 = sphi 0, %s245
      %s248 = sphi 0, %s247
      %s262 = sphi 0, %s248
      %s268 = sphi 0, %s270
      %s271 = sphi 0, %s268
      %s272 = sphi 0, %s271
      %s288 = sphi 0, %s272
    $region4: #{tpu_custom_call.1} parent=1 // loop_header_branch
      %25 = sbr.rel (%p23) target = $region8
    $region5: #{tpu_custom_call.1} parent=1 // loop_body
      %s27 = ssub.s32 %s22, 1
      %s28 = ssub.s32 %s22, 2
      %s29 = sadd.s32 %s22, 1
      %s30 = ssub.s32 %s22, %s29
      %p31 = scmp.eq.s32.totalorder %s30, 0
      %s33 = sadd.s32 %s32, 1
      %s34 = scalar_select %p31, %s32, %s33
      %p37 = pneg %p31
      %p38 = scmp.eq.s32.totalorder %s22, 1
      %p39 = por %p37, %p38
      %p40 = scmp.ne.s32.totalorder %s32, %s35
      %p41 = scmp.eq.s32.totalorder %s22, 0
      %p42 = por %p40, %p41
      %p43 = scmp.ne.s32.totalorder %s32, %s35
      %p44 = scmp.eq.s32.totalorder %s27, 1
      %p45 = por %p43, %p44
      %p46 = scmp.ne.s32.totalorder %s35, %s36
      %p47 = scmp.eq.s32.totalorder %s27, 0
      %p48 = por %p46, %p47
      %p49 = scmp.ne.s32.totalorder %s35, %s36
      %p50 = scmp.eq.s32.totalorder %s28, 1
      %p51 = por %p49, %p50
      %p53 = scmp.ne.s32.totalorder %s36, %s52
      %p54 = scmp.eq.s32.totalorder %s28, 0
      %p55 = por %p53, %p54
      %s57 = sadd.s32 %s56, 1
      %p60 = scmp.eq.s32.totalorder %s22, 1
      %p61 = scmp.ne.s32.totalorder %s56, %s58
      %p62 = scmp.eq.s32.totalorder %s22, 0
      %p63 = por %p61, %p62
      %p64 = scmp.ne.s32.totalorder %s56, %s58
      %p65 = scmp.eq.s32.totalorder %s27, 1
      %p66 = por %p64, %p65
      %p67 = scmp.ne.s32.totalorder %s58, %s59
      %p68 = scmp.eq.s32.totalorder %s27, 0
      %p69 = por %p67, %p68
      %p70 = scmp.ne.s32.totalorder %s58, %s59
      %p71 = scmp.eq.s32.totalorder %s28, 1
      %p72 = por %p70, %p71
      %p74 = scmp.ne.s32.totalorder %s59, %s73
      %p75 = scmp.eq.s32.totalorder %s28, 0
      %p76 = por %p74, %p75
      %s78 = sadd.s32 %s77, 1
      %p81 = scmp.eq.s32.totalorder %s22, 1
      %p82 = scmp.ne.s32.totalorder %s77, %s79
      %p83 = scmp.eq.s32.totalorder %s22, 0
      %p84 = por %p82, %p83
      %p85 = scmp.ne.s32.totalorder %s77, %s79
      %p86 = scmp.eq.s32.totalorder %s27, 1
      %p87 = por %p85, %p86
      %p88 = scmp.ne.s32.totalorder %s79, %s80
      %p89 = scmp.eq.s32.totalorder %s27, 0
      %p90 = por %p88, %p89
      %p91 = scmp.ne.s32.totalorder %s79, %s80
      %p92 = scmp.eq.s32.totalorder %s28, 1
      %p93 = por %p91, %p92
      %p95 = scmp.ne.s32.totalorder %s80, %s94
      %p96 = scmp.eq.s32.totalorder %s28, 0
      %p97 = por %p95, %p96
      %s99 = sadd.s32 %s98, 1
      %p102 = scmp.eq.s32.totalorder %s22, 1
      %p103 = scmp.ne.s32.totalorder %s98, %s100
      %p104 = scmp.eq.s32.totalorder %s22, 0
      %p105 = por %p103, %p104
      %p106 = scmp.ne.s32.totalorder %s98, %s100
      %p107 = scmp.eq.s32.totalorder %s27, 1
      %p108 = por %p106, %p107
      %p109 = scmp.ne.s32.totalorder %s100, %s101
      %p110 = scmp.eq.s32.totalorder %s27, 0
      %p111 = por %p109, %p110
      %p112 = scmp.ne.s32.totalorder %s100, %s101
      %p113 = scmp.eq.s32.totalorder %s28, 1
      %p114 = por %p112, %p113
      %p116 = scmp.ne.s32.totalorder %s101, %s115
      %p117 = scmp.eq.s32.totalorder %s28, 0
      %p118 = por %p116, %p117
      %s120 = sadd.s32 %s119, 1
      %p123 = scmp.eq.s32.totalorder %s22, 1
      %p124 = scmp.ne.s32.totalorder %s119, %s121
      %p125 = scmp.eq.s32.totalorder %s22, 0
      %p126 = por %p124, %p125
      %p127 = scmp.ne.s32.totalorder %s119, %s121
      %p128 = scmp.eq.s32.totalorder %s27, 1
      %p129 = por %p127, %p128
      %p130 = scmp.ne.s32.totalorder %s121, %s122
      %p131 = scmp.eq.s32.totalorder %s27, 0
      %p132 = por %p130, %p131
      %p133 = scmp.ne.s32.totalorder %s121, %s122
      %p134 = scmp.eq.s32.totalorder %s28, 1
      %p135 = por %p133, %p134
      %p137 = scmp.ne.s32.totalorder %s122, %s136
      %p138 = scmp.eq.s32.totalorder %s28, 0
      %p139 = por %p137, %p138
      %s141 = sadd.s32 %s140, 1
      %p144 = scmp.eq.s32.totalorder %s22, 1
      %p145 = scmp.ne.s32.totalorder %s140, %s142
      %p146 = scmp.eq.s32.totalorder %s22, 0
      %p147 = por %p145, %p146
      %p148 = scmp.ne.s32.totalorder %s140, %s142
      %p149 = scmp.eq.s32.totalorder %s27, 1
      %p150 = por %p148, %p149
      %p151 = scmp.ne.s32.totalorder %s142, %s143
      %p152 = scmp.eq.s32.totalorder %s27, 0
      %p153 = por %p151, %p152
      %p154 = scmp.ne.s32.totalorder %s142, %s143
      %p155 = scmp.eq.s32.totalorder %s28, 1
      %p156 = por %p154, %p155
      %p158 = scmp.ne.s32.totalorder %s143, %s157
      %p159 = scmp.eq.s32.totalorder %s28, 0
      %p160 = por %p158, %p159
      %s162 = sadd.s32 %s161, 1
      %p165 = scmp.eq.s32.totalorder %s22, 1
      %p166 = scmp.ne.s32.totalorder %s161, %s163
      %p167 = scmp.eq.s32.totalorder %s22, 0
      %p168 = por %p166, %p167
      %p169 = scmp.ne.s32.totalorder %s161, %s163
      %p170 = scmp.eq.s32.totalorder %s27, 1
      %p171 = por %p169, %p170
      %p172 = scmp.ne.s32.totalorder %s163, %s164
      %p173 = scmp.eq.s32.totalorder %s27, 0
      %p174 = por %p172, %p173
      %p175 = scmp.ne.s32.totalorder %s163, %s164
      %p176 = scmp.eq.s32.totalorder %s28, 1
      %p177 = por %p175, %p176
      %p179 = scmp.ne.s32.totalorder %s164, %s178
      %p180 = scmp.eq.s32.totalorder %s28, 0
      %p181 = por %p179, %p180
      %s183 = sadd.s32 %s182, 1
      %p186 = scmp.eq.s32.totalorder %s22, 1
      %p187 = scmp.ne.s32.totalorder %s182, %s184
      %p188 = scmp.eq.s32.totalorder %s22, 0
      %p189 = por %p187, %p188
      %p190 = scmp.ne.s32.totalorder %s182, %s184
      %p191 = scmp.eq.s32.totalorder %s27, 1
      %p192 = por %p190, %p191
      %p193 = scmp.ne.s32.totalorder %s184, %s185
      %p194 = scmp.eq.s32.totalorder %s27, 0
      %p195 = por %p193, %p194
      %p196 = scmp.ne.s32.totalorder %s184, %s185
      %p197 = scmp.eq.s32.totalorder %s28, 1
      %p198 = por %p196, %p197
      %p200 = scmp.ne.s32.totalorder %s185, %s199
      %p201 = scmp.eq.s32.totalorder %s28, 0
      %p202 = por %p200, %p201
      %s204 = sadd.s32 %s203, 1
      %p207 = scmp.eq.s32.totalorder %s22, 1
      %p208 = scmp.ne.s32.totalorder %s203, %s205
      %p209 = scmp.eq.s32.totalorder %s22, 0
      %p210 = por %p208, %p209
      %p211 = scmp.ne.s32.totalorder %s203, %s205
      %p212 = scmp.eq.s32.totalorder %s27, 1
      %p213 = por %p211, %p212
      %p214 = scmp.ne.s32.totalorder %s205, %s206
      %p215 = scmp.eq.s32.totalorder %s27, 0
      %p216 = por %p214, %p215
      %p217 = scmp.ne.s32.totalorder %s205, %s206
      %p218 = scmp.eq.s32.totalorder %s28, 1
      %p219 = por %p217, %p218
      %p221 = scmp.ne.s32.totalorder %s206, %s220
      %p222 = scmp.eq.s32.totalorder %s28, 0
      %p223 = por %p221, %p222
      %s225 = sadd.s32 %s224, 1
      %p228 = scmp.eq.s32.totalorder %s22, 1
      %p229 = scmp.ne.s32.totalorder %s224, %s226
      %p230 = scmp.eq.s32.totalorder %s22, 0
      %p231 = por %p229, %p230
      %p232 = scmp.ne.s32.totalorder %s224, %s226
      %p233 = scmp.eq.s32.totalorder %s27, 1
      %p234 = por %p232, %p233
      %p235 = scmp.ne.s32.totalorder %s226, %s227
      %p236 = scmp.eq.s32.totalorder %s27, 0
      %p237 = por %p235, %p236
      %p238 = scmp.ne.s32.totalorder %s226, %s227
      %p239 = scmp.eq.s32.totalorder %s28, 1
      %p240 = por %p238, %p239
      %p242 = scmp.ne.s32.totalorder %s227, %s241
      %p243 = scmp.eq.s32.totalorder %s28, 0
      %p244 = por %p242, %p243
      %s246 = sadd.s32 %s245, 1
      %p249 = scmp.eq.s32.totalorder %s22, 1
      %p250 = scmp.ne.s32.totalorder %s245, %s247
      %p251 = scmp.eq.s32.totalorder %s22, 0
      %p252 = por %p250, %p251
      %p253 = scmp.ne.s32.totalorder %s245, %s247
      %p254 = scmp.eq.s32.totalorder %s27, 1
      %p255 = por %p253, %p254
      %p256 = scmp.ne.s32.totalorder %s247, %s248
      %p257 = scmp.eq.s32.totalorder %s27, 0
      %p258 = por %p256, %p257
      %p259 = scmp.ne.s32.totalorder %s247, %s248
      %p260 = scmp.eq.s32.totalorder %s28, 1
      %p261 = por %p259, %p260
      %p263 = scmp.ne.s32.totalorder %s248, %s262
      %p264 = scmp.eq.s32.totalorder %s28, 0
      %p265 = por %p263, %p264
      %s266 = ssub.s32 %s22, %s29
      %p267 = scmp.eq.s32.totalorder %s266, 0
      %s269 = sadd.s32 %s268, 1
      %s270 = scalar_select %p267, %s268, %s269
      %p273 = pneg %p267
      %p274 = scmp.eq.s32.totalorder %s22, 1
      %p275 = por %p273, %p274
      %p276 = scmp.ne.s32.totalorder %s268, %s271
      %p277 = scmp.eq.s32.totalorder %s22, 0
      %p278 = por %p276, %p277
      %p279 = scmp.ne.s32.totalorder %s268, %s271
      %p280 = scmp.eq.s32.totalorder %s27, 1
      %p281 = por %p279, %p280
      %p282 = scmp.ne.s32.totalorder %s271, %s272
      %p283 = scmp.eq.s32.totalorder %s27, 0
      %p284 = por %p282, %p283
      %p285 = scmp.ne.s32.totalorder %s271, %s272
      %p286 = scmp.eq.s32.totalorder %s28, 1
      %p287 = por %p285, %p286
      %p289 = scmp.ne.s32.totalorder %s272, %s288
      %p290 = scmp.eq.s32.totalorder %s28, 0
      %p291 = por %p289, %p290
      %p292 = scmp.le.s32.totalorder 1, %s22
      %p293 = scmp.lt.s32.totalorder %s22, 3
      %p294 = pnand %p292, %p293
      %p295 = pneg %p294
      // Predicated region
      $region9: #{tpu_custom_call.1} parent=5 // pred_check
        _
      $region10: #{tpu_custom_call.1} parent=5 // pred_check_branch
        %297 = sbr.rel (%p294) target = $region12
      $region11: #{tpu_custom_call.1} parent=5 // pred_region
        %s298 = ssub.s32 %s22, 1
        // Predicated region
        $region13: #{tpu_custom_call.1} parent=11 // pred_check
          %p299 = pneg %p69
        $region14: #{tpu_custom_call.1} parent=11 // pred_check_branch
          %301 = sbr.rel (%p299) target = $region16
        $region15: #{tpu_custom_call.1} parent=11 // pred_region
          %s303 = ssub.s32 32, 32
          %304 = vsyncadd [#allocation4], %s303
          %s306 = sshll.u32 %s1, 4
          %s307 = int_to_ptr.vmem [resolvable:$true] %s306
          %309 = dma.vmem_to_smem %s307, 32, [#allocation2], [#allocation4]
        $region16: #{tpu_custom_call.1} parent=11 // pred_fallthru
          _
        // Predicated region
        $region17: #{tpu_custom_call.1} parent=11 // pred_check
          %p310 = pneg %p90
        $region18: #{tpu_custom_call.1} parent=11 // pred_check_branch
          %312 = sbr.rel (%p310) target = $region20
        $region19: #{tpu_custom_call.1} parent=11 // pred_region
          %s314 = ssub.s32 16, 16
          %315 = vsyncadd [#allocation6], %s314
          %s317 = sshll.u32 %s2, 4
          %s318 = int_to_ptr.vmem [resolvable:$true] %s317
          %320 = dma.vmem_to_smem %s318, 16, [#allocation5], [#allocation6]
        $region20: #{tpu_custom_call.1} parent=11 // pred_fallthru
          _
        // Predicated region
        $region21: #{tpu_custom_call.1} parent=11 // pred_check
          %p321 = pneg %p111
        $region22: #{tpu_custom_call.1} parent=11 // pred_check_branch
          %323 = sbr.rel (%p321) target = $region24
        $region23: #{tpu_custom_call.1} parent=11 // pred_region
          _
        $region24: #{tpu_custom_call.1} parent=11 // pred_fallthru
          _
        // Predicated region
        $region25: #{tpu_custom_call.1} parent=11 // pred_check
          %p324 = pneg %p132
        $region26: #{tpu_custom_call.1} parent=11 // pred_check_branch
          %326 = sbr.rel (%p324) target = $region28
        $region27: #{tpu_custom_call.1} parent=11 // pred_region
          _
        $region28: #{tpu_custom_call.1} parent=11 // pred_fallthru
          _
        // Predicated region
        $region29: #{tpu_custom_call.1} parent=11 // pred_check
          %p327 = pneg %p153
        $region30: #{tpu_custom_call.1} parent=11 // pred_check_branch
          %329 = sbr.rel (%p327) target = $region32
        $region31: #{tpu_custom_call.1} parent=11 // pred_region
          _
        $region32: #{tpu_custom_call.1} parent=11 // pred_fallthru
          _
        // Predicated region
        $region33: #{tpu_custom_call.1} parent=11 // pred_check
          %p330 = pneg %p174
        $region34: #{tpu_custom_call.1} parent=11 // pred_check_branch
          %332 = sbr.rel (%p330) target = $region36
        $region35: #{tpu_custom_call.1} parent=11 // pred_region
          _
        $region36: #{tpu_custom_call.1} parent=11 // pred_fallthru
          _
        // Predicated region
        $region37: #{tpu_custom_call.1} parent=11 // pred_check
          %p333 = pneg %p195
        $region38: #{tpu_custom_call.1} parent=11 // pred_check_branch
          %335 = sbr.rel (%p333) target = $region40
        $region39: #{tpu_custom_call.1} parent=11 // pred_region
          _
        $region40: #{tpu_custom_call.1} parent=11 // pred_fallthru
          _
        // Predicated region
        $region41: #{tpu_custom_call.1} parent=11 // pred_check
          %p336 = pneg %p216
        $region42: #{tpu_custom_call.1} parent=11 // pred_check_branch
          %338 = sbr.rel (%p336) target = $region44
        $region43: #{tpu_custom_call.1} parent=11 // pred_region
          _
        $region44: #{tpu_custom_call.1} parent=11 // pred_fallthru
          _
        // Predicated region
        $region45: #{tpu_custom_call.1} parent=11 // pred_check
          %p339 = pneg %p237
        $region46: #{tpu_custom_call.1} parent=11 // pred_check_branch
          %341 = sbr.rel (%p339) target = $region48
        $region47: #{tpu_custom_call.1} parent=11 // pred_region
          _
        $region48: #{tpu_custom_call.1} parent=11 // pred_fallthru
          _
        // Predicated region
        $region49: #{tpu_custom_call.1} parent=11 // pred_check
          %p342 = pneg %p258
        $region50: #{tpu_custom_call.1} parent=11 // pred_check_branch
          %344 = sbr.rel (%p342) target = $region52
        $region51: #{tpu_custom_call.1} parent=11 // pred_region
          _
        $region52: #{tpu_custom_call.1} parent=11 // pred_fallthru
          _
      $region12: #{tpu_custom_call.1} parent=5 // pred_fallthru
        _
      %p345 = scmp.lt.s32.totalorder %s22, 2
      // Predicated region
      $region53: #{tpu_custom_call.1} parent=5 // pred_check
        %p346 = pneg %p345
      $region54: #{tpu_custom_call.1} parent=5 // pred_check_branch
        %348 = sbr.rel (%p346) target = $region56
      $region55: #{tpu_custom_call.1} parent=5 // pred_region
        // Predicated region
        $region57: #{tpu_custom_call.1} parent=55 // pred_check
          %p349 = pneg %p42
        $region58: #{tpu_custom_call.1} parent=55 // pred_check_branch
          %351 = sbr.rel (%p349) target = $region60
        $region59: #{tpu_custom_call.1} parent=55 // pred_region
          %p352 = scmp.lt.s32.totalorder %s22, 1
          %s353 = scalar_select %p352, %s22, 1
          %s354 = smul.addr %s353, 16
          %s355 = smul.addr %s354, 8
          %s356 = scalar_lea.vmem %s0, %s355
        $region60: #{tpu_custom_call.1} parent=55 // pred_fallthru
          _
      $region56: #{tpu_custom_call.1} parent=5 // pred_fallthru
        _
      %p357 = scmp.le.s32.totalorder 1, %s22
      %p358 = scmp.lt.s32.totalorder %s22, 3
      %p359 = pnand %p357, %p358
      %p360 = pneg %p359
      // Predicated region
      $region61: #{tpu_custom_call.1} parent=5 // pred_check
        _
      $region62: #{tpu_custom_call.1} parent=5 // pred_check_branch
        %362 = sbr.rel (%p359) target = $region64
      $region63: #{tpu_custom_call.1} parent=5 // pred_region
        %s363 = ssub.s32 %s22, 1
        // Predicated region
        $region65: #{tpu_custom_call.1} parent=63 // pred_check
          %p364 = pneg %p69
        $region66: #{tpu_custom_call.1} parent=63 // pred_check_branch
          %366 = sbr.rel (%p364) target = $region68
        $region67: #{tpu_custom_call.1} parent=63 // pred_region
          %367 = dma.done [#allocation4], 32
        $region68: #{tpu_custom_call.1} parent=63 // pred_fallthru
          _
        // Predicated region
        $region69: #{tpu_custom_call.1} parent=63 // pred_check
          %p368 = pneg %p90
        $region70: #{tpu_custom_call.1} parent=63 // pred_check_branch
          %370 = sbr.rel (%p368) target = $region72
        $region71: #{tpu_custom_call.1} parent=63 // pred_region
          %371 = dma.done [#allocation6], 16
        $region72: #{tpu_custom_call.1} parent=63 // pred_fallthru
          _
        %372 = sfence
        %p373 = scmp.lt.s32.totalorder %s27, 1
        %s374 = scalar_select %p373, %s27, 1
        %s375 = smul.addr %s374, 16
        %s376 = smul.addr %s375, 8
        %s377 = scalar_lea.vmem %s0, %s376
        %p378 = pneg %p48
        %p379 = pneg %p45
        %p380 = pneg %p69
        %p381 = pneg %p66
        %p382 = pneg %p90
        %p383 = pneg %p87
        %p384 = pneg %p111
        %p385 = pneg %p108
        %p386 = pneg %p132
        %p387 = pneg %p129
        %p388 = pneg %p153
        %p389 = pneg %p150
        %p390 = pneg %p174
        %p391 = pneg %p171
        %p392 = pneg %p195
        %p393 = pneg %p192
        %p394 = pneg %p216
        %p395 = pneg %p213
        %p396 = pneg %p237
        %p397 = pneg %p234
        %p398 = pneg %p258
        %p399 = pneg %p255
        %p400 = pneg %p284
        %p401 = pneg %p281
        %s402 = sand.u32 %s271, 1
        %s403 = scalar_lea.sflag [#allocation3], %s402
        %s404 = sand.u32 %s271, 1
        %s405 = smul.addr %s404, 4
        %s406 = scalar_lea.vmem [#allocation7], %s405
        %p407 = scmp.lt.s32.totalorder %s27, 1
        %s408 = scalar_select %p407, %s27, 1
        %s409 = smul.addr %s408, 16
        %s410 = smul.addr %s409, 8
        %s411 = scalar_lea.vmem %s0, %s410
        %s412 = sld [smem:[#allocation2]]
        %s413 = sld [smem:[#allocation2 + $0x1]]
        %s414 = sld [smem:[#allocation2 + $0x2]]
        %s415 = sld [smem:[#allocation2 + $0x3]]
        %s416 = sld [smem:[#allocation2 + $0x4]]
        %s417 = sld [smem:[#allocation2 + $0x5]]
        %s418 = sld [smem:[#allocation2 + $0x6]]
        %s419 = sld [smem:[#allocation2 + $0x7]]
        %s420 = sld [smem:[#allocation2 + $0x8]]
        %s421 = sld [smem:[#allocation2 + $0x9]]
        %s422 = sld [smem:[#allocation2 + $0xa]]
        %s423 = sld [smem:[#allocation2 + $0xb]]
        %s424 = sld [smem:[#allocation2 + $0xc]]
        %s425 = sld [smem:[#allocation2 + $0xd]]
        %s426 = sld [smem:[#allocation2 + $0xe]]
        %s427 = sld [smem:[#allocation2 + $0xf]]
        %s428 = sld [smem:[#allocation2 + $0x10]]
        %s429 = sld [smem:[#allocation2 + $0x11]]
        %s430 = sld [smem:[#allocation2 + $0x12]]
        %s431 = sld [smem:[#allocation2 + $0x13]]
        %s432 = sld [smem:[#allocation2 + $0x14]]
        %s433 = sld [smem:[#allocation2 + $0x15]]
        %s434 = sld [smem:[#allocation2 + $0x16]]
        %s435 = sld [smem:[#allocation2 + $0x17]]
        %s436 = sld [smem:[#allocation2 + $0x18]]
        %s437 = sld [smem:[#allocation2 + $0x19]]
        %s438 = sld [smem:[#allocation2 + $0x1a]]
        %s439 = sld [smem:[#allocation2 + $0x1b]]
        %s440 = sld [smem:[#allocation2 + $0x1c]]
        %s441 = sld [smem:[#allocation2 + $0x1d]]
        %s442 = sld [smem:[#allocation2 + $0x1e]]
        %s443 = sld [smem:[#allocation2 + $0x1f]]
        %s444 = sld [smem:[#allocation2 + $0x20]]
        %s445 = sld [smem:[#allocation2 + $0x21]]
        %s446 = sld [smem:[#allocation2 + $0x22]]
        %s447 = sld [smem:[#allocation2 + $0x23]]
        %s448 = sld [smem:[#allocation2 + $0x24]]
        %s449 = sld [smem:[#allocation2 + $0x25]]
        %s450 = sld [smem:[#allocation2 + $0x26]]
        %s451 = sld [smem:[#allocation2 + $0x27]]
        %s452 = sld [smem:[#allocation2 + $0x28]]
        %s453 = sld [smem:[#allocation2 + $0x29]]
        %s454 = sld [smem:[#allocation2 + $0x2a]]
        %s455 = sld [smem:[#allocation2 + $0x2b]]
        %s456 = sld [smem:[#allocation2 + $0x2c]]
        %s457 = sld [smem:[#allocation2 + $0x2d]]
        %s458 = sld [smem:[#allocation2 + $0x2e]]
        %s459 = sld [smem:[#allocation2 + $0x2f]]
        %s460 = sld [smem:[#allocation2 + $0x30]]
        %s461 = sld [smem:[#allocation2 + $0x31]]
        %s462 = sld [smem:[#allocation2 + $0x32]]
        %s463 = sld [smem:[#allocation2 + $0x33]]
        %s464 = sld [smem:[#allocation2 + $0x34]]
        %s465 = sld [smem:[#allocation2 + $0x35]]
        %s466 = sld [smem:[#allocation2 + $0x36]]
        %s467 = sld [smem:[#allocation2 + $0x37]]
        %s468 = sld [smem:[#allocation2 + $0x38]]
        %s469 = sld [smem:[#allocation2 + $0x39]]
        %s470 = sld [smem:[#allocation2 + $0x3a]]
        %s471 = sld [smem:[#allocation2 + $0x3b]]
        %s472 = sld [smem:[#allocation2 + $0x3c]]
        %s473 = sld [smem:[#allocation2 + $0x3d]]
        %s474 = sld [smem:[#allocation2 + $0x3e]]
        %s475 = sld [smem:[#allocation2 + $0x3f]]
        %s476 = sld [smem:[#allocation2 + $0x40]]
        %s477 = sld [smem:[#allocation2 + $0x41]]
        %s478 = sld [smem:[#allocation2 + $0x42]]
        %s479 = sld [smem:[#allocation2 + $0x43]]
        %s480 = sld [smem:[#allocation2 + $0x44]]
        %s481 = sld [smem:[#allocation2 + $0x45]]
        %s482 = sld [smem:[#allocation2 + $0x46]]
        %s483 = sld [smem:[#allocation2 + $0x47]]
        %s484 = sld [smem:[#allocation2 + $0x48]]
        %s485 = sld [smem:[#allocation2 + $0x49]]
        %s486 = sld [smem:[#allocation2 + $0x4a]]
        %s487 = sld [smem:[#allocation2 + $0x4b]]
        %s488 = sld [smem:[#allocation2 + $0x4c]]
        %s489 = sld [smem:[#allocation2 + $0x4d]]
        %s490 = sld [smem:[#allocation2 + $0x4e]]
        %s491 = sld [smem:[#allocation2 + $0x4f]]
        %s492 = sld [smem:[#allocation2 + $0x50]]
        %s493 = sld [smem:[#allocation2 + $0x51]]
        %s494 = sld [smem:[#allocation2 + $0x52]]
        %s495 = sld [smem:[#allocation2 + $0x53]]
        %s496 = sld [smem:[#allocation2 + $0x54]]
        %s497 = sld [smem:[#allocation2 + $0x55]]
        %s498 = sld [smem:[#allocation2 + $0x56]]
        %s499 = sld [smem:[#allocation2 + $0x57]]
        %s500 = sld [smem:[#allocation2 + $0x58]]
        %s501 = sld [smem:[#allocation2 + $0x59]]
        %s502 = sld [smem:[#allocation2 + $0x5a]]
        %s503 = sld [smem:[#allocation2 + $0x5b]]
        %s504 = sld [smem:[#allocation2 + $0x5c]]
        %s505 = sld [smem:[#allocation2 + $0x5d]]
        %s506 = sld [smem:[#allocation2 + $0x5e]]
        %s507 = sld [smem:[#allocation2 + $0x5f]]
        %s508 = sld [smem:[#allocation2 + $0x60]]
        %s509 = sld [smem:[#allocation2 + $0x61]]
        %s510 = sld [smem:[#allocation2 + $0x62]]
        %s511 = sld [smem:[#allocation2 + $0x63]]
        %s512 = sld [smem:[#allocation2 + $0x64]]
        %s513 = sld [smem:[#allocation2 + $0x65]]
        %s514 = sld [smem:[#allocation2 + $0x66]]
        %s515 = sld [smem:[#allocation2 + $0x67]]
        %s516 = sld [smem:[#allocation2 + $0x68]]
        %s517 = sld [smem:[#allocation2 + $0x69]]
        %s518 = sld [smem:[#allocation2 + $0x6a]]
        %s519 = sld [smem:[#allocation2 + $0x6b]]
        %s520 = sld [smem:[#allocation2 + $0x6c]]
        %s521 = sld [smem:[#allocation2 + $0x6d]]
        %s522 = sld [smem:[#allocation2 + $0x6e]]
        %s523 = sld [smem:[#allocation2 + $0x6f]]
        %s524 = sld [smem:[#allocation2 + $0x70]]
        %s525 = sld [smem:[#allocation2 + $0x71]]
        %s526 = sld [smem:[#allocation2 + $0x72]]
        %s527 = sld [smem:[#allocation2 + $0x73]]
        %s528 = sld [smem:[#allocation2 + $0x74]]
        %s529 = sld [smem:[#allocation2 + $0x75]]
        %s530 = sld [smem:[#allocation2 + $0x76]]
        %s531 = sld [smem:[#allocation2 + $0x77]]
        %s532 = sld [smem:[#allocation2 + $0x78]]
        %s533 = sld [smem:[#allocation2 + $0x79]]
        %s534 = sld [smem:[#allocation2 + $0x7a]]
        %s535 = sld [smem:[#allocation2 + $0x7b]]
        %s536 = sld [smem:[#allocation2 + $0x7c]]
        %s537 = sld [smem:[#allocation2 + $0x7d]]
        %s538 = sld [smem:[#allocation2 + $0x7e]]
        %s539 = sld [smem:[#allocation2 + $0x7f]]
        %s540 = sld [smem:[#allocation2 + $0x80]]
        %s541 = sld [smem:[#allocation2 + $0x81]]
        %s542 = sld [smem:[#allocation2 + $0x82]]
        %s543 = sld [smem:[#allocation2 + $0x83]]
        %s544 = sld [smem:[#allocation2 + $0x84]]
        %s545 = sld [smem:[#allocation2 + $0x85]]
        %s546 = sld [smem:[#allocation2 + $0x86]]
        %s547 = sld [smem:[#allocation2 + $0x87]]
        %s548 = sld [smem:[#allocation2 + $0x88]]
        %s549 = sld [smem:[#allocation2 + $0x89]]
        %s550 = sld [smem:[#allocation2 + $0x8a]]
        %s551 = sld [smem:[#allocation2 + $0x8b]]
        %s552 = sld [smem:[#allocation2 + $0x8c]]
        %s553 = sld [smem:[#allocation2 + $0x8d]]
        %s554 = sld [smem:[#allocation2 + $0x8e]]
        %s555 = sld [smem:[#allocation2 + $0x8f]]
        %s556 = sld [smem:[#allocation5]]
        %s557 = sld [smem:[#allocation5 + $0x1]]
        %s558 = sld [smem:[#allocation5 + $0x2]]
        %s559 = sld [smem:[#allocation5 + $0x3]]
        %s560 = sld [smem:[#allocation5 + $0x4]]
        %s561 = sld [smem:[#allocation5 + $0x5]]
        %s562 = sld [smem:[#allocation5 + $0x6]]
        %s563 = sld [smem:[#allocation5 + $0x7]]
        %s564 = sld [smem:[#allocation5 + $0x8]]
        %s565 = sld [smem:[#allocation5 + $0x9]]
        %s566 = sld [smem:[#allocation5 + $0xa]]
        %s567 = sld [smem:[#allocation5 + $0xb]]
        %s568 = sld [smem:[#allocation5 + $0xc]]
        %s569 = sld [smem:[#allocation5 + $0xd]]
        %s570 = sld [smem:[#allocation5 + $0xe]]
        %s571 = sld [smem:[#allocation5 + $0xf]]
        %s572 = sld [smem:[#allocation5 + $0x10]]
        %s573 = sld [smem:[#allocation5 + $0x11]]
        %v574 = vld [vmem:[%s3] sm:$0xff]
        %v575 = vld [vmem:[%s3 + $0x8] sm:$0xff]
        %v576 = vld [vmem:[%s3 + $0x10] sm:$0xff]
        %v577 = vld [vmem:[%s3 + $0x18] sm:$0xff]
        %v578 = vld [vmem:[%s3 + $0x20] sm:$0xff]
        %v579 = vld [vmem:[%s3 + $0x28] sm:$0xff]
        %v580 = vld [vmem:[%s3 + $0x30] sm:$0xff]
        %v581 = vld [vmem:[%s3 + $0x38] sm:$0xff]
        %v582 = vld [vmem:[%s3 + $0x40] sm:$0xff]
        %v583 = vld [vmem:[%s3 + $0x48] sm:$0xff]
        %v584 = vld [vmem:[%s3 + $0x50] sm:$0xff]
        %v585 = vld [vmem:[%s3 + $0x58] sm:$0xff]
        %v586 = vld [vmem:[%s3 + $0x60] sm:$0xff]
        %v587 = vld [vmem:[%s3 + $0x68] sm:$0xff]
        %v588 = vld [vmem:[%s3 + $0x70] sm:$0xff]
        %v589 = vld [vmem:[%s3 + $0x78] sm:$0xff]
        %v590 = vld [vmem:[%s4] sm:$0x1]
        %592 = vset.pattern.permute.xlu0 0
        %593 = vperm.xlu0 %592, %v574
        %v594 = vpop.permute.xlu0 %593
        %597 = vset.pattern.permute.xlu0 0
        %598 = vperm.xlu0 %597, %v575
        %v599 = vpop.permute.xlu0 %598
        %602 = vset.pattern.permute.xlu0 0
        %603 = vperm.xlu0 %602, %v576
        %v604 = vpop.permute.xlu0 %603
        %607 = vset.pattern.permute.xlu0 0
        %608 = vperm.xlu0 %607, %v577
        %v609 = vpop.permute.xlu0 %608
        %612 = vset.pattern.permute.xlu0 0
        %613 = vperm.xlu0 %612, %v578
        %v614 = vpop.permute.xlu0 %613
        %617 = vset.pattern.permute.xlu0 0
        %618 = vperm.xlu0 %617, %v579
        %v619 = vpop.permute.xlu0 %618
        %622 = vset.pattern.permute.xlu0 0
        %623 = vperm.xlu0 %622, %v580
        %v624 = vpop.permute.xlu0 %623
        %627 = vset.pattern.permute.xlu0 0
        %628 = vperm.xlu0 %627, %v581
        %v629 = vpop.permute.xlu0 %628
        %632 = vset.pattern.permute.xlu0 0
        %633 = vperm.xlu0 %632, %v582
        %v634 = vpop.permute.xlu0 %633
        %637 = vset.pattern.permute.xlu0 0
        %638 = vperm.xlu0 %637, %v583
        %v639 = vpop.permute.xlu0 %638
        %642 = vset.pattern.permute.xlu0 0
        %643 = vperm.xlu0 %642, %v584
        %v644 = vpop.permute.xlu0 %643
        %647 = vset.pattern.permute.xlu0 0
        %648 = vperm.xlu0 %647, %v585
        %v649 = vpop.permute.xlu0 %648
        %652 = vset.pattern.permute.xlu0 0
        %653 = vperm.xlu0 %652, %v586
        %v654 = vpop.permute.xlu0 %653
        %657 = vset.pattern.permute.xlu0 0
        %658 = vperm.xlu0 %657, %v587
        %v659 = vpop.permute.xlu0 %658
        %662 = vset.pattern.permute.xlu0 0
        %663 = vperm.xlu0 %662, %v588
        %v664 = vpop.permute.xlu0 %663
        %667 = vset.pattern.permute.xlu0 0
        %668 = vperm.xlu0 %667, %v589
        %v669 = vpop.permute.xlu0 %668
        %v672 = vlaneseq
        %v673 = vshrl.u32 %v672, 7
        %v674 = vsub.s32 0, %v673
        %v675 = vrot.slane %v590, %v674
        %v677 = vmul.f32 %v594, %v675
        %v678 = vmul.f32 %v599, %v675
        %v679 = vmul.f32 %v604, %v675
        %v680 = vmul.f32 %v609, %v675
        %v681 = vmul.f32 %v614, %v675
        %v682 = vmul.f32 %v619, %v675
        %v683 = vmul.f32 %v624, %v675
        %v684 = vmul.f32 %v629, %v675
        %v685 = vmul.f32 %v634, %v675
        %v686 = vmul.f32 %v639, %v675
        %v687 = vmul.f32 %v644, %v675
        %v688 = vmul.f32 %v649, %v675
        %v689 = vmul.f32 %v654, %v675
        %v690 = vmul.f32 %v659, %v675
        %v691 = vmul.f32 %v664, %v675
        %v692 = vmul.f32 %v669, %v675
        %s693 = scalar_lea.vmem %s4, 2
        %v694 = vld [vmem:[%s693] sm:$0x1]
        %v696 = vlaneseq
        %v697 = vshrl.u32 %v696, 7
        %v698 = vsub.s32 0, %v697
        %v699 = vrot.slane %v694, %v698
        %v701 = vmul.f32 %v594, %v699
        %v702 = vmul.f32 %v599, %v699
        %v703 = vmul.f32 %v604, %v699
        %v704 = vmul.f32 %v609, %v699
        %v705 = vmul.f32 %v614, %v699
        %v706 = vmul.f32 %v619, %v699
        %v707 = vmul.f32 %v624, %v699
        %v708 = vmul.f32 %v629, %v699
        %v709 = vmul.f32 %v634, %v699
        %v710 = vmul.f32 %v639, %v699
        %v711 = vmul.f32 %v644, %v699
        %v712 = vmul.f32 %v649, %v699
        %v713 = vmul.f32 %v654, %v699
        %v714 = vmul.f32 %v659, %v699
        %v715 = vmul.f32 %v664, %v699
        %v716 = vmul.f32 %v669, %v699
        %s717 = scalar_lea.vmem %s3, 256
        %v718 = vld [vmem:[%s717] sm:$0xff]
        %v719 = vld [vmem:[%s717 + $0x8] sm:$0xff]
        %v720 = vld [vmem:[%s717 + $0x10] sm:$0xff]
        %v721 = vld [vmem:[%s717 + $0x18] sm:$0xff]
        %v722 = vld [vmem:[%s717 + $0x20] sm:$0xff]
        %v723 = vld [vmem:[%s717 + $0x28] sm:$0xff]
        %v724 = vld [vmem:[%s717 + $0x30] sm:$0xff]
        %v725 = vld [vmem:[%s717 + $0x38] sm:$0xff]
        %v726 = vld [vmem:[%s717 + $0x40] sm:$0xff]
        %v727 = vld [vmem:[%s717 + $0x48] sm:$0xff]
        %v728 = vld [vmem:[%s717 + $0x50] sm:$0xff]
        %v729 = vld [vmem:[%s717 + $0x58] sm:$0xff]
        %v730 = vld [vmem:[%s717 + $0x60] sm:$0xff]
        %v731 = vld [vmem:[%s717 + $0x68] sm:$0xff]
        %v732 = vld [vmem:[%s717 + $0x70] sm:$0xff]
        %v733 = vld [vmem:[%s717 + $0x78] sm:$0xff]
        %735 = vset.pattern.permute.xlu0 0
        %736 = vperm.xlu0 %735, %v718
        %v737 = vpop.permute.xlu0 %736
        %740 = vset.pattern.permute.xlu0 0
        %741 = vperm.xlu0 %740, %v719
        %v742 = vpop.permute.xlu0 %741
        %745 = vset.pattern.permute.xlu0 0
        %746 = vperm.xlu0 %745, %v720
        %v747 = vpop.permute.xlu0 %746
        %750 = vset.pattern.permute.xlu0 0
        %751 = vperm.xlu0 %750, %v721
        %v752 = vpop.permute.xlu0 %751
        %755 = vset.pattern.permute.xlu0 0
        %756 = vperm.xlu0 %755, %v722
        %v757 = vpop.permute.xlu0 %756
        %760 = vset.pattern.permute.xlu0 0
        %761 = vperm.xlu0 %760, %v723
        %v762 = vpop.permute.xlu0 %761
        %765 = vset.pattern.permute.xlu0 0
        %766 = vperm.xlu0 %765, %v724
        %v767 = vpop.permute.xlu0 %766
        %770 = vset.pattern.permute.xlu0 0
        %771 = vperm.xlu0 %770, %v725
        %v772 = vpop.permute.xlu0 %771
        %775 = vset.pattern.permute.xlu0 0
        %776 = vperm.xlu0 %775, %v726
        %v777 = vpop.permute.xlu0 %776
        %780 = vset.pattern.permute.xlu0 0
        %781 = vperm.xlu0 %780, %v727
        %v782 = vpop.permute.xlu0 %781
        %785 = vset.pattern.permute.xlu0 0
        %786 = vperm.xlu0 %785, %v728
        %v787 = vpop.permute.xlu0 %786
        %790 = vset.pattern.permute.xlu0 0
        %791 = vperm.xlu0 %790, %v729
        %v792 = vpop.permute.xlu0 %791
        %795 = vset.pattern.permute.xlu0 0
        %796 = vperm.xlu0 %795, %v730
        %v797 = vpop.permute.xlu0 %796
        %800 = vset.pattern.permute.xlu0 0
        %801 = vperm.xlu0 %800, %v731
        %v802 = vpop.permute.xlu0 %801
        %805 = vset.pattern.permute.xlu0 0
        %806 = vperm.xlu0 %805, %v732
        %v807 = vpop.permute.xlu0 %806
        %810 = vset.pattern.permute.xlu0 0
        %811 = vperm.xlu0 %810, %v733
        %v812 = vpop.permute.xlu0 %811
        %v814 = vmul.f32 %v737, %v675
        %v815 = vmul.f32 %v742, %v675
        %v816 = vmul.f32 %v747, %v675
        %v817 = vmul.f32 %v752, %v675
        %v818 = vmul.f32 %v757, %v675
        %v819 = vmul.f32 %v762, %v675
        %v820 = vmul.f32 %v767, %v675
        %v821 = vmul.f32 %v772, %v675
        %v822 = vmul.f32 %v777, %v675
        %v823 = vmul.f32 %v782, %v675
        %v824 = vmul.f32 %v787, %v675
        %v825 = vmul.f32 %v792, %v675
        %v826 = vmul.f32 %v797, %v675
        %v827 = vmul.f32 %v802, %v675
        %v828 = vmul.f32 %v807, %v675
        %v829 = vmul.f32 %v812, %v675
        %v830 = vmul.f32 %v737, %v699
        %v831 = vmul.f32 %v742, %v699
        %v832 = vmul.f32 %v747, %v699
        %v833 = vmul.f32 %v752, %v699
        %v834 = vmul.f32 %v757, %v699
        %v835 = vmul.f32 %v762, %v699
        %v836 = vmul.f32 %v767, %v699
        %v837 = vmul.f32 %v772, %v699
        %v838 = vmul.f32 %v777, %v699
        %v839 = vmul.f32 %v782, %v699
        %v840 = vmul.f32 %v787, %v699
        %v841 = vmul.f32 %v792, %v699
        %v842 = vmul.f32 %v797, %v699
        %v843 = vmul.f32 %v802, %v699
        %v844 = vmul.f32 %v807, %v699
        %v845 = vmul.f32 %v812, %v699
        %v846 = vld [vmem:[%s5] sm:$0xff]
        %v847 = vld [vmem:[%s5 + $0x8] sm:$0xff]
        %v848 = vld [vmem:[%s6] sm:$0x1]
        %850 = vset.pattern.permute.xlu0 0
        %851 = vperm.xlu0 %850, %v846
        %v852 = vpop.permute.xlu0 %851
        %855 = vset.pattern.permute.xlu0 0
        %856 = vperm.xlu0 %855, %v847
        %v857 = vpop.permute.xlu0 %856
        %v860 = vlaneseq
        %v861 = vshrl.u32 %v860, 7
        %v862 = vsub.s32 0, %v861
        %v863 = vrot.slane %v848, %v862
        %v865 = vmul.f32 %v852, %v863
        %v866 = vmul.f32 %v857, %v863
        %s867 = scalar_lea.vmem %s6, 2
        %v868 = vld [vmem:[%s867] sm:$0x1]
        %v870 = vlaneseq
        %v871 = vshrl.u32 %v870, 7
        %v872 = vsub.s32 0, %v871
        %v873 = vrot.slane %v868, %v872
        %v875 = vmul.f32 %v852, %v873
        %v876 = vmul.f32 %v857, %v873
        %s877 = scalar_lea.vmem %s5, 32
        %v878 = vld [vmem:[%s877] sm:$0xff]
        %v879 = vld [vmem:[%s877 + $0x8] sm:$0xff]
        %881 = vset.pattern.permute.xlu0 0
        %882 = vperm.xlu0 %881, %v878
        %v883 = vpop.permute.xlu0 %882
        %886 = vset.pattern.permute.xlu0 0
        %887 = vperm.xlu0 %886, %v879
        %v888 = vpop.permute.xlu0 %887
        %v890 = vmul.f32 %v883, %v863
        %v891 = vmul.f32 %v888, %v863
        %v892 = vmul.f32 %v883, %v873
        %v893 = vmul.f32 %v888, %v873
        %v894 = vld [vmem:[%s7] sm:$0xff]
        %v895 = vld [vmem:[%s7 + $0x8] sm:$0xff]
        %v896 = vld [vmem:[%s8] sm:$0xff]
        %v897 = vld [vmem:[%s8 + $0x8] sm:$0xff]
        %v898 = vld [vmem:[%s9] sm:$0xff]
        %v899 = vld [vmem:[%s10] sm:$0xf]
        %v900 = vld [vmem:[%s411] sm:$0xff]
        %v901 = vld [vmem:[%s411 + $0x8] sm:$0xff]
        %v902 = vld [vmem:[%s411 + $0x10] sm:$0xff]
        %v903 = vld [vmem:[%s411 + $0x18] sm:$0xff]
        %v904 = vld [vmem:[%s411 + $0x20] sm:$0xff]
        %v905 = vld [vmem:[%s411 + $0x28] sm:$0xff]
        %v906 = vld [vmem:[%s411 + $0x30] sm:$0xff]
        %v907 = vld [vmem:[%s411 + $0x38] sm:$0xff]
        %v908 = vld [vmem:[%s411 + $0x40] sm:$0xff]
        %v909 = vld [vmem:[%s411 + $0x48] sm:$0xff]
        %v910 = vld [vmem:[%s411 + $0x50] sm:$0xff]
        %v911 = vld [vmem:[%s411 + $0x58] sm:$0xff]
        %v912 = vld [vmem:[%s411 + $0x60] sm:$0xff]
        %v913 = vld [vmem:[%s411 + $0x68] sm:$0xff]
        %v914 = vld [vmem:[%s411 + $0x70] sm:$0xff]
        %v915 = vld [vmem:[%s411 + $0x78] sm:$0xff]
        %v916 = vrot.slane %v900, 7
        %v917 = vrot.slane %v901, 7
        %v918 = vrot.slane %v902, 7
        %v919 = vrot.slane %v903, 7
        %v920 = vrot.slane %v904, 7
        %v921 = vrot.slane %v905, 7
        %v922 = vrot.slane %v906, 7
        %v923 = vrot.slane %v907, 7
        %v924 = vrot.slane %v908, 7
        %v925 = vrot.slane %v909, 7
        %v926 = vrot.slane %v910, 7
        %v927 = vrot.slane %v911, 7
        %v928 = vrot.slane %v912, 7
        %v929 = vrot.slane %v913, 7
        %v930 = vrot.slane %v914, 7
        %v931 = vrot.slane %v915, 7
        %v932 = vlaneseq
        %v933 = vshrl.u32 %v932, 7
        %vm934 = vcmp.lt.s32.totalorder %v933, 1
        %v935 = vsel %vm934, %v930, %v931
        %v936 = vsel %vm934, %v929, %v930
        %v937 = vsel %vm934, %v928, %v929
        %v938 = vsel %vm934, %v927, %v928
        %v939 = vsel %vm934, %v926, %v927
        %v940 = vsel %vm934, %v925, %v926
        %v941 = vsel %vm934, %v924, %v925
        %v942 = vsel %vm934, %v923, %v924
        %v943 = vsel %vm934, %v922, %v923
        %v944 = vsel %vm934, %v921, %v922
        %v945 = vsel %vm934, %v920, %v921
        %v946 = vsel %vm934, %v919, %v920
        %v947 = vsel %vm934, %v918, %v919
        %v948 = vsel %vm934, %v917, %v918
        %v949 = vsel %vm934, %v916, %v917
        %v950 = vsel %vm934, %v931, %v916
        %vm951 = vcmask 1047680
        %952 = vrot.lane.b32.xlu0 %v950, 16
        %v953 = vpop.permute.xlu0 %952
        %v954 = vsel %vm951, %v953, %v950
        %955 = vrot.lane.b32.xlu0 %v949, 16
        %v956 = vpop.permute.xlu0 %955
        %v957 = vsel %vm951, %v956, %v949
        %958 = vrot.lane.b32.xlu0 %v948, 16
        %v959 = vpop.permute.xlu0 %958
        %v960 = vsel %vm951, %v959, %v948
        %961 = vrot.lane.b32.xlu0 %v947, 16
        %v962 = vpop.permute.xlu0 %961
        %v963 = vsel %vm951, %v962, %v947
        %964 = vrot.lane.b32.xlu0 %v946, 16
        %v965 = vpop.permute.xlu0 %964
        %v966 = vsel %vm951, %v965, %v946
        %967 = vrot.lane.b32.xlu0 %v945, 16
        %v968 = vpop.permute.xlu0 %967
        %v969 = vsel %vm951, %v968, %v945
        %970 = vrot.lane.b32.xlu0 %v944, 16
        %v971 = vpop.permute.xlu0 %970
        %v972 = vsel %vm951, %v971, %v944
        %973 = vrot.lane.b32.xlu0 %v943, 16
        %v974 = vpop.permute.xlu0 %973
        %v975 = vsel %vm951, %v974, %v943
        %976 = vrot.lane.b32.xlu0 %v942, 16
        %v977 = vpop.permute.xlu0 %976
        %v978 = vsel %vm951, %v977, %v942
        %979 = vrot.lane.b32.xlu0 %v941, 16
        %v980 = vpop.permute.xlu0 %979
        %v981 = vsel %vm951, %v980, %v941
        %982 = vrot.lane.b32.xlu0 %v940, 16
        %v983 = vpop.permute.xlu0 %982
        %v984 = vsel %vm951, %v983, %v940
        %985 = vrot.lane.b32.xlu0 %v939, 16
        %v986 = vpop.permute.xlu0 %985
        %v987 = vsel %vm951, %v986, %v939
        %988 = vrot.lane.b32.xlu0 %v938, 16
        %v989 = vpop.permute.xlu0 %988
        %v990 = vsel %vm951, %v989, %v938
        %991 = vrot.lane.b32.xlu0 %v937, 16
        %v992 = vpop.permute.xlu0 %991
        %v993 = vsel %vm951, %v992, %v937
        %994 = vrot.lane.b32.xlu0 %v936, 16
        %v995 = vpop.permute.xlu0 %994
        %v996 = vsel %vm951, %v995, %v936
        %997 = vrot.lane.b32.xlu0 %v935, 16
        %v998 = vpop.permute.xlu0 %997
        %v999 = vsel %vm951, %v998, %v935
        %1000 = vrot.lane.b32.xlu0 %v954, 16
        %v1001 = vpop.permute.xlu0 %1000
        %1002 = vrot.lane.b32.xlu0 %v957, 16
        %v1003 = vpop.permute.xlu0 %1002
        %1004 = vrot.lane.b32.xlu0 %v960, 16
        %v1005 = vpop.permute.xlu0 %1004
        %1006 = vrot.lane.b32.xlu0 %v963, 16
        %v1007 = vpop.permute.xlu0 %1006
        %1008 = vrot.lane.b32.xlu0 %v966, 16
        %v1009 = vpop.permute.xlu0 %1008
        %1010 = vrot.lane.b32.xlu0 %v969, 16
        %v1011 = vpop.permute.xlu0 %1010
        %1012 = vrot.lane.b32.xlu0 %v972, 16
        %v1013 = vpop.permute.xlu0 %1012
        %1014 = vrot.lane.b32.xlu0 %v975, 16
        %v1015 = vpop.permute.xlu0 %1014
        %1016 = vrot.lane.b32.xlu0 %v978, 16
        %v1017 = vpop.permute.xlu0 %1016
        %1018 = vrot.lane.b32.xlu0 %v981, 16
        %v1019 = vpop.permute.xlu0 %1018
        %1020 = vrot.lane.b32.xlu0 %v984, 16
        %v1021 = vpop.permute.xlu0 %1020
        %1022 = vrot.lane.b32.xlu0 %v987, 16
        %v1023 = vpop.permute.xlu0 %1022
        %1024 = vrot.lane.b32.xlu0 %v990, 16
        %v1025 = vpop.permute.xlu0 %1024
        %1026 = vrot.lane.b32.xlu0 %v993, 16
        %v1027 = vpop.permute.xlu0 %1026
        %1028 = vrot.lane.b32.xlu0 %v996, 16
        %v1029 = vpop.permute.xlu0 %1028
        %1030 = vrot.lane.b32.xlu0 %v999, 16
        %v1031 = vpop.permute.xlu0 %1030
        %v1032 = vsel %vm951, %v1001, %v950
        %v1033 = vsel %vm951, %v1003, %v949
        %v1034 = vsel %vm951, %v1005, %v948
        %v1035 = vsel %vm951, %v1007, %v947
        %v1036 = vsel %vm951, %v1009, %v946
        %v1037 = vsel %vm951, %v1011, %v945
        %v1038 = vsel %vm951, %v1013, %v944
        %v1039 = vsel %vm951, %v1015, %v943
        %v1040 = vsel %vm951, %v1017, %v942
        %v1041 = vsel %vm951, %v1019, %v941
        %v1042 = vsel %vm951, %v1021, %v940
        %v1043 = vsel %vm951, %v1023, %v939
        %v1044 = vsel %vm951, %v1025, %v938
        %v1045 = vsel %vm951, %v1027, %v937
        %v1046 = vsel %vm951, %v1029, %v936
        %v1047 = vsel %vm951, %v1031, %v935
        %1064 = vrot.lane.b32.xlu0 %v677, 15
        %v1065 = vpop.permute.xlu0 %1064
        %1066 = vrot.lane.b32.xlu0 %v678, 15
        %v1067 = vpop.permute.xlu0 %1066
        %1068 = vrot.lane.b32.xlu0 %v679, 15
        %v1069 = vpop.permute.xlu0 %1068
        %1070 = vrot.lane.b32.xlu0 %v680, 15
        %v1071 = vpop.permute.xlu0 %1070
        %1072 = vrot.lane.b32.xlu0 %v681, 15
        %v1073 = vpop.permute.xlu0 %1072
        %1074 = vrot.lane.b32.xlu0 %v682, 15
        %v1075 = vpop.permute.xlu0 %1074
        %1076 = vrot.lane.b32.xlu0 %v683, 15
        %v1077 = vpop.permute.xlu0 %1076
        %1078 = vrot.lane.b32.xlu0 %v684, 15
        %v1079 = vpop.permute.xlu0 %1078
        %1080 = vrot.lane.b32.xlu0 %v685, 15
        %v1081 = vpop.permute.xlu0 %1080
        %1082 = vrot.lane.b32.xlu0 %v686, 15
        %v1083 = vpop.permute.xlu0 %1082
        %1084 = vrot.lane.b32.xlu0 %v687, 15
        %v1085 = vpop.permute.xlu0 %1084
        %1086 = vrot.lane.b32.xlu0 %v688, 15
        %v1087 = vpop.permute.xlu0 %1086
        %1088 = vrot.lane.b32.xlu0 %v689, 15
        %v1089 = vpop.permute.xlu0 %1088
        %1090 = vrot.lane.b32.xlu0 %v690, 15
        %v1091 = vpop.permute.xlu0 %1090
        %1092 = vrot.lane.b32.xlu0 %v691, 15
        %v1093 = vpop.permute.xlu0 %1092
        %1094 = vrot.lane.b32.xlu0 %v692, 15
        %v1095 = vpop.permute.xlu0 %1094
        %v1112 = vmul.f32 %v1032, %v1065
        %v1113 = vmul.f32 %v1033, %v1067
        %v1114 = vmul.f32 %v1034, %v1069
        %v1115 = vmul.f32 %v1035, %v1071
        %v1116 = vmul.f32 %v1036, %v1073
        %v1117 = vmul.f32 %v1037, %v1075
        %v1118 = vmul.f32 %v1038, %v1077
        %v1119 = vmul.f32 %v1039, %v1079
        %v1120 = vmul.f32 %v1040, %v1081
        %v1121 = vmul.f32 %v1041, %v1083
        %v1122 = vmul.f32 %v1042, %v1085
        %v1123 = vmul.f32 %v1043, %v1087
        %v1124 = vmul.f32 %v1044, %v1089
        %v1125 = vmul.f32 %v1045, %v1091
        %v1126 = vmul.f32 %v1046, %v1093
        %v1127 = vmul.f32 %v1047, %v1095
        %v1128 = vstv %s412
        %v1129 = vmul.f32 %v1128, %v1112
        %v1130 = vmul.f32 %v1128, %v1113
        %v1131 = vadd.f32 %v1129, 0.0
        %v1132 = vadd.f32 %v1130, 0.0
        %v1133 = vstv %s484
        %v1134 = vmul.f32 %v1133, %v1112
        %v1135 = vmul.f32 %v1133, %v1113
        %v1136 = vadd.f32 %v1134, 0.0
        %v1137 = vadd.f32 %v1135, 0.0
        %v1138 = vstv %s421
        %v1139 = vmul.f32 %v1138, %v1114
        %v1140 = vmul.f32 %v1138, %v1115
        %v1141 = vadd.f32 %v1131, %v1139
        %v1142 = vadd.f32 %v1132, %v1140
        %v1143 = vstv %s493
        %v1144 = vmul.f32 %v1143, %v1114
        %v1145 = vmul.f32 %v1143, %v1115
        %v1146 = vadd.f32 %v1136, %v1144
        %v1147 = vadd.f32 %v1137, %v1145
        %v1148 = vstv %s430
        %v1149 = vmul.f32 %v1148, %v1116
        %v1150 = vmul.f32 %v1148, %v1117
        %v1151 = vadd.f32 %v1141, %v1149
        %v1152 = vadd.f32 %v1142, %v1150
        %v1153 = vstv %s502
        %v1154 = vmul.f32 %v1153, %v1116
        %v1155 = vmul.f32 %v1153, %v1117
        %v1156 = vadd.f32 %v1146, %v1154
        %v1157 = vadd.f32 %v1147, %v1155
        %v1158 = vstv %s439
        %v1159 = vmul.f32 %v1158, %v1118
        %v1160 = vmul.f32 %v1158, %v1119
        %v1161 = vadd.f32 %v1151, %v1159
        %v1162 = vadd.f32 %v1152, %v1160
        %v1163 = vstv %s511
        %v1164 = vmul.f32 %v1163, %v1118
        %v1165 = vmul.f32 %v1163, %v1119
        %v1166 = vadd.f32 %v1156, %v1164
        %v1167 = vadd.f32 %v1157, %v1165
        %v1168 = vstv %s448
        %v1169 = vmul.f32 %v1168, %v1120
        %v1170 = vmul.f32 %v1168, %v1121
        %v1171 = vadd.f32 %v1161, %v1169
        %v1172 = vadd.f32 %v1162, %v1170
        %v1173 = vstv %s520
        %v1174 = vmul.f32 %v1173, %v1120
        %v1175 = vmul.f32 %v1173, %v1121
        %v1176 = vadd.f32 %v1166, %v1174
        %v1177 = vadd.f32 %v1167, %v1175
        %v1178 = vstv %s457
        %v1179 = vmul.f32 %v1178, %v1122
        %v1180 = vmul.f32 %v1178, %v1123
        %v1181 = vadd.f32 %v1171, %v1179
        %v1182 = vadd.f32 %v1172, %v1180
        %v1183 = vstv %s529
        %v1184 = vmul.f32 %v1183, %v1122
        %v1185 = vmul.f32 %v1183, %v1123
        %v1186 = vadd.f32 %v1176, %v1184
        %v1187 = vadd.f32 %v1177, %v1185
        %v1188 = vstv %s466
        %v1189 = vmul.f32 %v1188, %v1124
        %v1190 = vmul.f32 %v1188, %v1125
        %v1191 = vadd.f32 %v1181, %v1189
        %v1192 = vadd.f32 %v1182, %v1190
        %v1193 = vstv %s538
        %v1194 = vmul.f32 %v1193, %v1124
        %v1195 = vmul.f32 %v1193, %v1125
        %v1196 = vadd.f32 %v1186, %v1194
        %v1197 = vadd.f32 %v1187, %v1195
        %v1198 = vstv %s475
        %v1199 = vmul.f32 %v1198, %v1126
        %v1200 = vmul.f32 %v1198, %v1127
        %v1201 = vadd.f32 %v1191, %v1199
        %v1202 = vadd.f32 %v1192, %v1200
        %v1203 = vstv %s547
        %v1204 = vmul.f32 %v1203, %v1126
        %v1205 = vmul.f32 %v1203, %v1127
        %v1206 = vadd.f32 %v1196, %v1204
        %v1207 = vadd.f32 %v1197, %v1205
        %v1208 = vmul.f32 %v950, %v594
        %v1209 = vmul.f32 %v949, %v599
        %v1210 = vmul.f32 %v948, %v604
        %v1211 = vmul.f32 %v947, %v609
        %v1212 = vmul.f32 %v946, %v614
        %v1213 = vmul.f32 %v945, %v619
        %v1214 = vmul.f32 %v944, %v624
        %v1215 = vmul.f32 %v943, %v629
        %v1216 = vmul.f32 %v942, %v634
        %v1217 = vmul.f32 %v941, %v639
        %v1218 = vmul.f32 %v940, %v644
        %v1219 = vmul.f32 %v939, %v649
        %v1220 = vmul.f32 %v938, %v654
        %v1221 = vmul.f32 %v937, %v659
        %v1222 = vmul.f32 %v936, %v664
        %v1223 = vmul.f32 %v935, %v669
        %v1224 = vstv %s413
        %v1225 = vmul.f32 %v1224, %v1208
        %v1226 = vmul.f32 %v1224, %v1209
        %1229 = vrot.lane.b32.xlu0 %v1225, 15
        %v1230 = vpop.permute.xlu0 %1229
        %1231 = vrot.lane.b32.xlu0 %v1226, 15
        %v1232 = vpop.permute.xlu0 %1231
        %v1235 = vadd.f32 %v1201, %v1230
        %v1236 = vadd.f32 %v1202, %v1232
        %v1237 = vstv %s485
        %v1238 = vmul.f32 %v1237, %v1208
        %v1239 = vmul.f32 %v1237, %v1209
        %1242 = vrot.lane.b32.xlu0 %v1238, 15
        %v1243 = vpop.permute.xlu0 %1242
        %1244 = vrot.lane.b32.xlu0 %v1239, 15
        %v1245 = vpop.permute.xlu0 %1244
        %v1248 = vadd.f32 %v1206, %v1243
        %v1249 = vadd.f32 %v1207, %v1245
        %v1250 = vstv %s422
        %v1251 = vmul.f32 %v1250, %v1210
        %v1252 = vmul.f32 %v1250, %v1211
        %1255 = vrot.lane.b32.xlu0 %v1251, 15
        %v1256 = vpop.permute.xlu0 %1255
        %1257 = vrot.lane.b32.xlu0 %v1252, 15
        %v1258 = vpop.permute.xlu0 %1257
        %v1261 = vadd.f32 %v1235, %v1256
        %v1262 = vadd.f32 %v1236, %v1258
        %v1263 = vstv %s494
        %v1264 = vmul.f32 %v1263, %v1210
        %v1265 = vmul.f32 %v1263, %v1211
        %1268 = vrot.lane.b32.xlu0 %v1264, 15
        %v1269 = vpop.permute.xlu0 %1268
        %1270 = vrot.lane.b32.xlu0 %v1265, 15
        %v1271 = vpop.permute.xlu0 %1270
        %v1274 = vadd.f32 %v1248, %v1269
        %v1275 = vadd.f32 %v1249, %v1271
        %v1276 = vstv %s431
        %v1277 = vmul.f32 %v1276, %v1212
        %v1278 = vmul.f32 %v1276, %v1213
        %1281 = vrot.lane.b32.xlu0 %v1277, 15
        %v1282 = vpop.permute.xlu0 %1281
        %1283 = vrot.lane.b32.xlu0 %v1278, 15
        %v1284 = vpop.permute.xlu0 %1283
        %v1287 = vadd.f32 %v1261, %v1282
        %v1288 = vadd.f32 %v1262, %v1284
        %v1289 = vstv %s503
        %v1290 = vmul.f32 %v1289, %v1212
        %v1291 = vmul.f32 %v1289, %v1213
        %1294 = vrot.lane.b32.xlu0 %v1290, 15
        %v1295 = vpop.permute.xlu0 %1294
        %1296 = vrot.lane.b32.xlu0 %v1291, 15
        %v1297 = vpop.permute.xlu0 %1296
        %v1300 = vadd.f32 %v1274, %v1295
        %v1301 = vadd.f32 %v1275, %v1297
        %v1302 = vstv %s440
        %v1303 = vmul.f32 %v1302, %v1214
        %v1304 = vmul.f32 %v1302, %v1215
        %1307 = vrot.lane.b32.xlu0 %v1303, 15
        %v1308 = vpop.permute.xlu0 %1307
        %1309 = vrot.lane.b32.xlu0 %v1304, 15
        %v1310 = vpop.permute.xlu0 %1309
        %v1313 = vadd.f32 %v1287, %v1308
        %v1314 = vadd.f32 %v1288, %v1310
        %v1315 = vstv %s512
        %v1316 = vmul.f32 %v1315, %v1214
        %v1317 = vmul.f32 %v1315, %v1215
        %1320 = vrot.lane.b32.xlu0 %v1316, 15
        %v1321 = vpop.permute.xlu0 %1320
        %1322 = vrot.lane.b32.xlu0 %v1317, 15
        %v1323 = vpop.permute.xlu0 %1322
        %v1326 = vadd.f32 %v1300, %v1321
        %v1327 = vadd.f32 %v1301, %v1323
        %v1328 = vstv %s449
        %v1329 = vmul.f32 %v1328, %v1216
        %v1330 = vmul.f32 %v1328, %v1217
        %1333 = vrot.lane.b32.xlu0 %v1329, 15
        %v1334 = vpop.permute.xlu0 %1333
        %1335 = vrot.lane.b32.xlu0 %v1330, 15
        %v1336 = vpop.permute.xlu0 %1335
        %v1339 = vadd.f32 %v1313, %v1334
        %v1340 = vadd.f32 %v1314, %v1336
        %v1341 = vstv %s521
        %v1342 = vmul.f32 %v1341, %v1216
        %v1343 = vmul.f32 %v1341, %v1217
        %1346 = vrot.lane.b32.xlu0 %v1342, 15
        %v1347 = vpop.permute.xlu0 %1346
        %1348 = vrot.lane.b32.xlu0 %v1343, 15
        %v1349 = vpop.permute.xlu0 %1348
        %v1352 = vadd.f32 %v1326, %v1347
        %v1353 = vadd.f32 %v1327, %v1349
        %v1354 = vstv %s458
        %v1355 = vmul.f32 %v1354, %v1218
        %v1356 = vmul.f32 %v1354, %v1219
        %1359 = vrot.lane.b32.xlu0 %v1355, 15
        %v1360 = vpop.permute.xlu0 %1359
        %1361 = vrot.lane.b32.xlu0 %v1356, 15
        %v1362 = vpop.permute.xlu0 %1361
        %v1365 = vadd.f32 %v1339, %v1360
        %v1366 = vadd.f32 %v1340, %v1362
        %v1367 = vstv %s530
        %v1368 = vmul.f32 %v1367, %v1218
        %v1369 = vmul.f32 %v1367, %v1219
        %1372 = vrot.lane.b32.xlu0 %v1368, 15
        %v1373 = vpop.permute.xlu0 %1372
        %1374 = vrot.lane.b32.xlu0 %v1369, 15
        %v1375 = vpop.permute.xlu0 %1374
        %v1378 = vadd.f32 %v1352, %v1373
        %v1379 = vadd.f32 %v1353, %v1375
        %v1380 = vstv %s467
        %v1381 = vmul.f32 %v1380, %v1220
        %v1382 = vmul.f32 %v1380, %v1221
        %1385 = vrot.lane.b32.xlu0 %v1381, 15
        %v1386 = vpop.permute.xlu0 %1385
        %1387 = vrot.lane.b32.xlu0 %v1382, 15
        %v1388 = vpop.permute.xlu0 %1387
        %v1391 = vadd.f32 %v1365, %v1386
        %v1392 = vadd.f32 %v1366, %v1388
        %v1393 = vstv %s539
        %v1394 = vmul.f32 %v1393, %v1220
        %v1395 = vmul.f32 %v1393, %v1221
        %1398 = vrot.lane.b32.xlu0 %v1394, 15
        %v1399 = vpop.permute.xlu0 %1398
        %1400 = vrot.lane.b32.xlu0 %v1395, 15
        %v1401 = vpop.permute.xlu0 %1400
        %v1404 = vadd.f32 %v1378, %v1399
        %v1405 = vadd.f32 %v1379, %v1401
        %v1406 = vstv %s476
        %v1407 = vmul.f32 %v1406, %v1222
        %v1408 = vmul.f32 %v1406, %v1223
        %1411 = vrot.lane.b32.xlu0 %v1407, 15
        %v1412 = vpop.permute.xlu0 %1411
        %1413 = vrot.lane.b32.xlu0 %v1408, 15
        %v1414 = vpop.permute.xlu0 %1413
        %v1417 = vadd.f32 %v1391, %v1412
        %v1418 = vadd.f32 %v1392, %v1414
        %v1419 = vstv %s548
        %v1420 = vmul.f32 %v1419, %v1222
        %v1421 = vmul.f32 %v1419, %v1223
        %1424 = vrot.lane.b32.xlu0 %v1420, 15
        %v1425 = vpop.permute.xlu0 %1424
        %1426 = vrot.lane.b32.xlu0 %v1421, 15
        %v1427 = vpop.permute.xlu0 %1426
        %v1430 = vadd.f32 %v1404, %v1425
        %v1431 = vadd.f32 %v1405, %v1427
        %1448 = vrot.lane.b32.xlu0 %v701, 1
        %v1449 = vpop.permute.xlu0 %1448
        %1450 = vrot.lane.b32.xlu0 %v702, 1
        %v1451 = vpop.permute.xlu0 %1450
        %1452 = vrot.lane.b32.xlu0 %v703, 1
        %v1453 = vpop.permute.xlu0 %1452
        %1454 = vrot.lane.b32.xlu0 %v704, 1
        %v1455 = vpop.permute.xlu0 %1454
        %1456 = vrot.lane.b32.xlu0 %v705, 1
        %v1457 = vpop.permute.xlu0 %1456
        %1458 = vrot.lane.b32.xlu0 %v706, 1
        %v1459 = vpop.permute.xlu0 %1458
        %1460 = vrot.lane.b32.xlu0 %v707, 1
        %v1461 = vpop.permute.xlu0 %1460
        %1462 = vrot.lane.b32.xlu0 %v708, 1
        %v1463 = vpop.permute.xlu0 %1462
        %1464 = vrot.lane.b32.xlu0 %v709, 1
        %v1465 = vpop.permute.xlu0 %1464
        %1466 = vrot.lane.b32.xlu0 %v710, 1
        %v1467 = vpop.permute.xlu0 %1466
        %1468 = vrot.lane.b32.xlu0 %v711, 1
        %v1469 = vpop.permute.xlu0 %1468
        %1470 = vrot.lane.b32.xlu0 %v712, 1
        %v1471 = vpop.permute.xlu0 %1470
        %1472 = vrot.lane.b32.xlu0 %v713, 1
        %v1473 = vpop.permute.xlu0 %1472
        %1474 = vrot.lane.b32.xlu0 %v714, 1
        %v1475 = vpop.permute.xlu0 %1474
        %1476 = vrot.lane.b32.xlu0 %v715, 1
        %v1477 = vpop.permute.xlu0 %1476
        %1478 = vrot.lane.b32.xlu0 %v716, 1
        %v1479 = vpop.permute.xlu0 %1478
        %v1496 = vmul.f32 %v1032, %v1449
        %v1497 = vmul.f32 %v1033, %v1451
        %v1498 = vmul.f32 %v1034, %v1453
        %v1499 = vmul.f32 %v1035, %v1455
        %v1500 = vmul.f32 %v1036, %v1457
        %v1501 = vmul.f32 %v1037, %v1459
        %v1502 = vmul.f32 %v1038, %v1461
        %v1503 = vmul.f32 %v1039, %v1463
        %v1504 = vmul.f32 %v1040, %v1465
        %v1505 = vmul.f32 %v1041, %v1467
        %v1506 = vmul.f32 %v1042, %v1469
        %v1507 = vmul.f32 %v1043, %v1471
        %v1508 = vmul.f32 %v1044, %v1473
        %v1509 = vmul.f32 %v1045, %v1475
        %v1510 = vmul.f32 %v1046, %v1477
        %v1511 = vmul.f32 %v1047, %v1479
        %v1512 = vstv %s414
        %v1513 = vmul.f32 %v1512, %v1496
        %v1514 = vmul.f32 %v1512, %v1497
        %1517 = vrot.lane.b32.xlu0 %v1513, 14
        %v1518 = vpop.permute.xlu0 %1517
        %1519 = vrot.lane.b32.xlu0 %v1514, 14
        %v1520 = vpop.permute.xlu0 %1519
        %v1523 = vadd.f32 %v1417, %v1518
        %v1524 = vadd.f32 %v1418, %v1520
        %v1525 = vstv %s486
        %v1526 = vmul.f32 %v1525, %v1496
        %v1527 = vmul.f32 %v1525, %v1497
        %1530 = vrot.lane.b32.xlu0 %v1526, 14
        %v1531 = vpop.permute.xlu0 %1530
        %1532 = vrot.lane.b32.xlu0 %v1527, 14
        %v1533 = vpop.permute.xlu0 %1532
        %v1536 = vadd.f32 %v1430, %v1531
        %v1537 = vadd.f32 %v1431, %v1533
        %v1538 = vstv %s423
        %v1539 = vmul.f32 %v1538, %v1498
        %v1540 = vmul.f32 %v1538, %v1499
        %1543 = vrot.lane.b32.xlu0 %v1539, 14
        %v1544 = vpop.permute.xlu0 %1543
        %1545 = vrot.lane.b32.xlu0 %v1540, 14
        %v1546 = vpop.permute.xlu0 %1545
        %v1549 = vadd.f32 %v1523, %v1544
        %v1550 = vadd.f32 %v1524, %v1546
        %v1551 = vstv %s495
        %v1552 = vmul.f32 %v1551, %v1498
        %v1553 = vmul.f32 %v1551, %v1499
        %1556 = vrot.lane.b32.xlu0 %v1552, 14
        %v1557 = vpop.permute.xlu0 %1556
        %1558 = vrot.lane.b32.xlu0 %v1553, 14
        %v1559 = vpop.permute.xlu0 %1558
        %v1562 = vadd.f32 %v1536, %v1557
        %v1563 = vadd.f32 %v1537, %v1559
        %v1564 = vstv %s432
        %v1565 = vmul.f32 %v1564, %v1500
        %v1566 = vmul.f32 %v1564, %v1501
        %1569 = vrot.lane.b32.xlu0 %v1565, 14
        %v1570 = vpop.permute.xlu0 %1569
        %1571 = vrot.lane.b32.xlu0 %v1566, 14
        %v1572 = vpop.permute.xlu0 %1571
        %v1575 = vadd.f32 %v1549, %v1570
        %v1576 = vadd.f32 %v1550, %v1572
        %v1577 = vstv %s504
        %v1578 = vmul.f32 %v1577, %v1500
        %v1579 = vmul.f32 %v1577, %v1501
        %1582 = vrot.lane.b32.xlu0 %v1578, 14
        %v1583 = vpop.permute.xlu0 %1582
        %1584 = vrot.lane.b32.xlu0 %v1579, 14
        %v1585 = vpop.permute.xlu0 %1584
        %v1588 = vadd.f32 %v1562, %v1583
        %v1589 = vadd.f32 %v1563, %v1585
        %v1590 = vstv %s441
        %v1591 = vmul.f32 %v1590, %v1502
        %v1592 = vmul.f32 %v1590, %v1503
        %1595 = vrot.lane.b32.xlu0 %v1591, 14
        %v1596 = vpop.permute.xlu0 %1595
        %1597 = vrot.lane.b32.xlu0 %v1592, 14
        %v1598 = vpop.permute.xlu0 %1597
        %v1601 = vadd.f32 %v1575, %v1596
        %v1602 = vadd.f32 %v1576, %v1598
        %v1603 = vstv %s513
        %v1604 = vmul.f32 %v1603, %v1502
        %v1605 = vmul.f32 %v1603, %v1503
        %1608 = vrot.lane.b32.xlu0 %v1604, 14
        %v1609 = vpop.permute.xlu0 %1608
        %1610 = vrot.lane.b32.xlu0 %v1605, 14
        %v1611 = vpop.permute.xlu0 %1610
        %v1614 = vadd.f32 %v1588, %v1609
        %v1615 = vadd.f32 %v1589, %v1611
        %v1616 = vstv %s450
        %v1617 = vmul.f32 %v1616, %v1504
        %v1618 = vmul.f32 %v1616, %v1505
        %1621 = vrot.lane.b32.xlu0 %v1617, 14
        %v1622 = vpop.permute.xlu0 %1621
        %1623 = vrot.lane.b32.xlu0 %v1618, 14
        %v1624 = vpop.permute.xlu0 %1623
        %v1627 = vadd.f32 %v1601, %v1622
        %v1628 = vadd.f32 %v1602, %v1624
        %v1629 = vstv %s522
        %v1630 = vmul.f32 %v1629, %v1504
        %v1631 = vmul.f32 %v1629, %v1505
        %1634 = vrot.lane.b32.xlu0 %v1630, 14
        %v1635 = vpop.permute.xlu0 %1634
        %1636 = vrot.lane.b32.xlu0 %v1631, 14
        %v1637 = vpop.permute.xlu0 %1636
        %v1640 = vadd.f32 %v1614, %v1635
        %v1641 = vadd.f32 %v1615, %v1637
        %v1642 = vstv %s459
        %v1643 = vmul.f32 %v1642, %v1506
        %v1644 = vmul.f32 %v1642, %v1507
        %1647 = vrot.lane.b32.xlu0 %v1643, 14
        %v1648 = vpop.permute.xlu0 %1647
        %1649 = vrot.lane.b32.xlu0 %v1644, 14
        %v1650 = vpop.permute.xlu0 %1649
        %v1653 = vadd.f32 %v1627, %v1648
        %v1654 = vadd.f32 %v1628, %v1650
        %v1655 = vstv %s531
        %v1656 = vmul.f32 %v1655, %v1506
        %v1657 = vmul.f32 %v1655, %v1507
        %1660 = vrot.lane.b32.xlu0 %v1656, 14
        %v1661 = vpop.permute.xlu0 %1660
        %1662 = vrot.lane.b32.xlu0 %v1657, 14
        %v1663 = vpop.permute.xlu0 %1662
        %v1666 = vadd.f32 %v1640, %v1661
        %v1667 = vadd.f32 %v1641, %v1663
        %v1668 = vstv %s468
        %v1669 = vmul.f32 %v1668, %v1508
        %v1670 = vmul.f32 %v1668, %v1509
        %1673 = vrot.lane.b32.xlu0 %v1669, 14
        %v1674 = vpop.permute.xlu0 %1673
        %1675 = vrot.lane.b32.xlu0 %v1670, 14
        %v1676 = vpop.permute.xlu0 %1675
        %v1679 = vadd.f32 %v1653, %v1674
        %v1680 = vadd.f32 %v1654, %v1676
        %v1681 = vstv %s540
        %v1682 = vmul.f32 %v1681, %v1508
        %v1683 = vmul.f32 %v1681, %v1509
        %1686 = vrot.lane.b32.xlu0 %v1682, 14
        %v1687 = vpop.permute.xlu0 %1686
        %1688 = vrot.lane.b32.xlu0 %v1683, 14
        %v1689 = vpop.permute.xlu0 %1688
        %v1692 = vadd.f32 %v1666, %v1687
        %v1693 = vadd.f32 %v1667, %v1689
        %v1694 = vstv %s477
        %v1695 = vmul.f32 %v1694, %v1510
        %v1696 = vmul.f32 %v1694, %v1511
        %1699 = vrot.lane.b32.xlu0 %v1695, 14
        %v1700 = vpop.permute.xlu0 %1699
        %1701 = vrot.lane.b32.xlu0 %v1696, 14
        %v1702 = vpop.permute.xlu0 %1701
        %v1705 = vadd.f32 %v1679, %v1700
        %v1706 = vadd.f32 %v1680, %v1702
        %v1707 = vstv %s549
        %v1708 = vmul.f32 %v1707, %v1510
        %v1709 = vmul.f32 %v1707, %v1511
        %1712 = vrot.lane.b32.xlu0 %v1708, 14
        %v1713 = vpop.permute.xlu0 %1712
        %1714 = vrot.lane.b32.xlu0 %v1709, 14
        %v1715 = vpop.permute.xlu0 %1714
        %v1718 = vadd.f32 %v1692, %v1713
        %v1719 = vadd.f32 %v1693, %v1715
        %1720 = vrot.lane.b32.xlu0 %v900, 16
        %v1721 = vpop.permute.xlu0 %1720
        %v1722 = vsel %vm951, %v1721, %v900
        %1723 = vrot.lane.b32.xlu0 %v901, 16
        %v1724 = vpop.permute.xlu0 %1723
        %v1725 = vsel %vm951, %v1724, %v901
        %1726 = vrot.lane.b32.xlu0 %v902, 16
        %v1727 = vpop.permute.xlu0 %1726
        %v1728 = vsel %vm951, %v1727, %v902
        %1729 = vrot.lane.b32.xlu0 %v903, 16
        %v1730 = vpop.permute.xlu0 %1729
        %v1731 = vsel %vm951, %v1730, %v903
        %1732 = vrot.lane.b32.xlu0 %v904, 16
        %v1733 = vpop.permute.xlu0 %1732
        %v1734 = vsel %vm951, %v1733, %v904
        %1735 = vrot.lane.b32.xlu0 %v905, 16
        %v1736 = vpop.permute.xlu0 %1735
        %v1737 = vsel %vm951, %v1736, %v905
        %1738 = vrot.lane.b32.xlu0 %v906, 16
        %v1739 = vpop.permute.xlu0 %1738
        %v1740 = vsel %vm951, %v1739, %v906
        %1741 = vrot.lane.b32.xlu0 %v907, 16
        %v1742 = vpop.permute.xlu0 %1741
        %v1743 = vsel %vm951, %v1742, %v907
        %1744 = vrot.lane.b32.xlu0 %v908, 16
        %v1745 = vpop.permute.xlu0 %1744
        %v1746 = vsel %vm951, %v1745, %v908
        %1747 = vrot.lane.b32.xlu0 %v909, 16
        %v1748 = vpop.permute.xlu0 %1747
        %v1749 = vsel %vm951, %v1748, %v909
        %1750 = vrot.lane.b32.xlu0 %v910, 16
        %v1751 = vpop.permute.xlu0 %1750
        %v1752 = vsel %vm951, %v1751, %v910
        %1753 = vrot.lane.b32.xlu0 %v911, 16
        %v1754 = vpop.permute.xlu0 %1753
        %v1755 = vsel %vm951, %v1754, %v911
        %1756 = vrot.lane.b32.xlu0 %v912, 16
        %v1757 = vpop.permute.xlu0 %1756
        %v1758 = vsel %vm951, %v1757, %v912
        %1759 = vrot.lane.b32.xlu0 %v913, 16
        %v1760 = vpop.permute.xlu0 %1759
        %v1761 = vsel %vm951, %v1760, %v913
        %1762 = vrot.lane.b32.xlu0 %v914, 16
        %v1763 = vpop.permute.xlu0 %1762
        %v1764 = vsel %vm951, %v1763, %v914
        %1765 = vrot.lane.b32.xlu0 %v915, 16
        %v1766 = vpop.permute.xlu0 %1765
        %v1767 = vsel %vm951, %v1766, %v915
        %1768 = vrot.lane.b32.xlu0 %v1722, 16
        %v1769 = vpop.permute.xlu0 %1768
        %1770 = vrot.lane.b32.xlu0 %v1725, 16
        %v1771 = vpop.permute.xlu0 %1770
        %1772 = vrot.lane.b32.xlu0 %v1728, 16
        %v1773 = vpop.permute.xlu0 %1772
        %1774 = vrot.lane.b32.xlu0 %v1731, 16
        %v1775 = vpop.permute.xlu0 %1774
        %1776 = vrot.lane.b32.xlu0 %v1734, 16
        %v1777 = vpop.permute.xlu0 %1776
        %1778 = vrot.lane.b32.xlu0 %v1737, 16
        %v1779 = vpop.permute.xlu0 %1778
        %1780 = vrot.lane.b32.xlu0 %v1740, 16
        %v1781 = vpop.permute.xlu0 %1780
        %1782 = vrot.lane.b32.xlu0 %v1743, 16
        %v1783 = vpop.permute.xlu0 %1782
        %1784 = vrot.lane.b32.xlu0 %v1746, 16
        %v1785 = vpop.permute.xlu0 %1784
        %1786 = vrot.lane.b32.xlu0 %v1749, 16
        %v1787 = vpop.permute.xlu0 %1786
        %1788 = vrot.lane.b32.xlu0 %v1752, 16
        %v1789 = vpop.permute.xlu0 %1788
        %1790 = vrot.lane.b32.xlu0 %v1755, 16
        %v1791 = vpop.permute.xlu0 %1790
        %1792 = vrot.lane.b32.xlu0 %v1758, 16
        %v1793 = vpop.permute.xlu0 %1792
        %1794 = vrot.lane.b32.xlu0 %v1761, 16
        %v1795 = vpop.permute.xlu0 %1794
        %1796 = vrot.lane.b32.xlu0 %v1764, 16
        %v1797 = vpop.permute.xlu0 %1796
        %1798 = vrot.lane.b32.xlu0 %v1767, 16
        %v1799 = vpop.permute.xlu0 %1798
        %v1800 = vsel %vm951, %v1769, %v900
        %v1801 = vsel %vm951, %v1771, %v901
        %v1802 = vsel %vm951, %v1773, %v902
        %v1803 = vsel %vm951, %v1775, %v903
        %v1804 = vsel %vm951, %v1777, %v904
        %v1805 = vsel %vm951, %v1779, %v905
        %v1806 = vsel %vm951, %v1781, %v906
        %v1807 = vsel %vm951, %v1783, %v907
        %v1808 = vsel %vm951, %v1785, %v908
        %v1809 = vsel %vm951, %v1787, %v909
        %v1810 = vsel %vm951, %v1789, %v910
        %v1811 = vsel %vm951, %v1791, %v911
        %v1812 = vsel %vm951, %v1793, %v912
        %v1813 = vsel %vm951, %v1795, %v913
        %v1814 = vsel %vm951, %v1797, %v914
        %v1815 = vsel %vm951, %v1799, %v915
        %1816 = vrot.lane.b32.xlu0 %v675, 15
        %v1817 = vpop.permute.xlu0 %1816
        %v1819 = vmul.f32 %v1800, %v1817
        %v1820 = vmul.f32 %v1801, %v1817
        %v1821 = vmul.f32 %v1802, %v1817
        %v1822 = vmul.f32 %v1803, %v1817
        %v1823 = vmul.f32 %v1804, %v1817
        %v1824 = vmul.f32 %v1805, %v1817
        %v1825 = vmul.f32 %v1806, %v1817
        %v1826 = vmul.f32 %v1807, %v1817
        %v1827 = vmul.f32 %v1808, %v1817
        %v1828 = vmul.f32 %v1809, %v1817
        %v1829 = vmul.f32 %v1810, %v1817
        %v1830 = vmul.f32 %v1811, %v1817
        %v1831 = vmul.f32 %v1812, %v1817
        %v1832 = vmul.f32 %v1813, %v1817
        %v1833 = vmul.f32 %v1814, %v1817
        %v1834 = vmul.f32 %v1815, %v1817
        %v1835 = vstv %s415
        %v1836 = vmul.f32 %v1835, %v1819
        %v1837 = vmul.f32 %v1835, %v1820
        %v1838 = vadd.f32 %v1705, %v1836
        %v1839 = vadd.f32 %v1706, %v1837
        %v1840 = vstv %s487
        %v1841 = vmul.f32 %v1840, %v1819
        %v1842 = vmul.f32 %v1840, %v1820
        %v1843 = vadd.f32 %v1718, %v1841
        %v1844 = vadd.f32 %v1719, %v1842
        %v1845 = vstv %s424
        %v1846 = vmul.f32 %v1845, %v1821
        %v1847 = vmul.f32 %v1845, %v1822
        %v1848 = vadd.f32 %v1838, %v1846
        %v1849 = vadd.f32 %v1839, %v1847
        %v1850 = vstv %s496
        %v1851 = vmul.f32 %v1850, %v1821
        %v1852 = vmul.f32 %v1850, %v1822
        %v1853 = vadd.f32 %v1843, %v1851
        %v1854 = vadd.f32 %v1844, %v1852
        %v1855 = vstv %s433
        %v1856 = vmul.f32 %v1855, %v1823
        %v1857 = vmul.f32 %v1855, %v1824
        %v1858 = vadd.f32 %v1848, %v1856
        %v1859 = vadd.f32 %v1849, %v1857
        %v1860 = vstv %s505
        %v1861 = vmul.f32 %v1860, %v1823
        %v1862 = vmul.f32 %v1860, %v1824
        %v1863 = vadd.f32 %v1853, %v1861
        %v1864 = vadd.f32 %v1854, %v1862
        %v1865 = vstv %s442
        %v1866 = vmul.f32 %v1865, %v1825
        %v1867 = vmul.f32 %v1865, %v1826
        %v1868 = vadd.f32 %v1858, %v1866
        %v1869 = vadd.f32 %v1859, %v1867
        %v1870 = vstv %s514
        %v1871 = vmul.f32 %v1870, %v1825
        %v1872 = vmul.f32 %v1870, %v1826
        %v1873 = vadd.f32 %v1863, %v1871
        %v1874 = vadd.f32 %v1864, %v1872
        %v1875 = vstv %s451
        %v1876 = vmul.f32 %v1875, %v1827
        %v1877 = vmul.f32 %v1875, %v1828
        %v1878 = vadd.f32 %v1868, %v1876
        %v1879 = vadd.f32 %v1869, %v1877
        %v1880 = vstv %s523
        %v1881 = vmul.f32 %v1880, %v1827
        %v1882 = vmul.f32 %v1880, %v1828
        %v1883 = vadd.f32 %v1873, %v1881
        %v1884 = vadd.f32 %v1874, %v1882
        %v1885 = vstv %s460
        %v1886 = vmul.f32 %v1885, %v1829
        %v1887 = vmul.f32 %v1885, %v1830
        %v1888 = vadd.f32 %v1878, %v1886
        %v1889 = vadd.f32 %v1879, %v1887
        %v1890 = vstv %s532
        %v1891 = vmul.f32 %v1890, %v1829
        %v1892 = vmul.f32 %v1890, %v1830
        %v1893 = vadd.f32 %v1883, %v1891
        %v1894 = vadd.f32 %v1884, %v1892
        %v1895 = vstv %s469
        %v1896 = vmul.f32 %v1895, %v1831
        %v1897 = vmul.f32 %v1895, %v1832
        %v1898 = vadd.f32 %v1888, %v1896
        %v1899 = vadd.f32 %v1889, %v1897
        %v1900 = vstv %s541
        %v1901 = vmul.f32 %v1900, %v1831
        %v1902 = vmul.f32 %v1900, %v1832
        %v1903 = vadd.f32 %v1893, %v1901
        %v1904 = vadd.f32 %v1894, %v1902
        %v1905 = vstv %s478
        %v1906 = vmul.f32 %v1905, %v1833
        %v1907 = vmul.f32 %v1905, %v1834
        %v1908 = vadd.f32 %v1898, %v1906
        %v1909 = vadd.f32 %v1899, %v1907
        %v1910 = vstv %s550
        %v1911 = vmul.f32 %v1910, %v1833
        %v1912 = vmul.f32 %v1910, %v1834
        %v1913 = vadd.f32 %v1903, %v1911
        %v1914 = vadd.f32 %v1904, %v1912
        %v1915 = vstv %s416
        %v1916 = vmul.f32 %v1915, %v900
        %v1917 = vmul.f32 %v1915, %v901
        %1920 = vrot.lane.b32.xlu0 %v1916, 15
        %v1921 = vpop.permute.xlu0 %1920
        %1922 = vrot.lane.b32.xlu0 %v1917, 15
        %v1923 = vpop.permute.xlu0 %1922
        %v1926 = vadd.f32 %v1908, %v1921
        %v1927 = vadd.f32 %v1909, %v1923
        %v1928 = vstv %s488
        %v1929 = vmul.f32 %v1928, %v900
        %v1930 = vmul.f32 %v1928, %v901
        %1933 = vrot.lane.b32.xlu0 %v1929, 15
        %v1934 = vpop.permute.xlu0 %1933
        %1935 = vrot.lane.b32.xlu0 %v1930, 15
        %v1936 = vpop.permute.xlu0 %1935
        %v1939 = vadd.f32 %v1913, %v1934
        %v1940 = vadd.f32 %v1914, %v1936
        %v1941 = vstv %s425
        %v1942 = vmul.f32 %v1941, %v902
        %v1943 = vmul.f32 %v1941, %v903
        %1946 = vrot.lane.b32.xlu0 %v1942, 15
        %v1947 = vpop.permute.xlu0 %1946
        %1948 = vrot.lane.b32.xlu0 %v1943, 15
        %v1949 = vpop.permute.xlu0 %1948
        %v1952 = vadd.f32 %v1926, %v1947
        %v1953 = vadd.f32 %v1927, %v1949
        %v1954 = vstv %s497
        %v1955 = vmul.f32 %v1954, %v902
        %v1956 = vmul.f32 %v1954, %v903
        %1959 = vrot.lane.b32.xlu0 %v1955, 15
        %v1960 = vpop.permute.xlu0 %1959
        %1961 = vrot.lane.b32.xlu0 %v1956, 15
        %v1962 = vpop.permute.xlu0 %1961
        %v1965 = vadd.f32 %v1939, %v1960
        %v1966 = vadd.f32 %v1940, %v1962
        %v1967 = vstv %s434
        %v1968 = vmul.f32 %v1967, %v904
        %v1969 = vmul.f32 %v1967, %v905
        %1972 = vrot.lane.b32.xlu0 %v1968, 15
        %v1973 = vpop.permute.xlu0 %1972
        %1974 = vrot.lane.b32.xlu0 %v1969, 15
        %v1975 = vpop.permute.xlu0 %1974
        %v1978 = vadd.f32 %v1952, %v1973
        %v1979 = vadd.f32 %v1953, %v1975
        %v1980 = vstv %s506
        %v1981 = vmul.f32 %v1980, %v904
        %v1982 = vmul.f32 %v1980, %v905
        %1985 = vrot.lane.b32.xlu0 %v1981, 15
        %v1986 = vpop.permute.xlu0 %1985
        %1987 = vrot.lane.b32.xlu0 %v1982, 15
        %v1988 = vpop.permute.xlu0 %1987
        %v1991 = vadd.f32 %v1965, %v1986
        %v1992 = vadd.f32 %v1966, %v1988
        %v1993 = vstv %s443
        %v1994 = vmul.f32 %v1993, %v906
        %v1995 = vmul.f32 %v1993, %v907
        %1998 = vrot.lane.b32.xlu0 %v1994, 15
        %v1999 = vpop.permute.xlu0 %1998
        %2000 = vrot.lane.b32.xlu0 %v1995, 15
        %v2001 = vpop.permute.xlu0 %2000
        %v2004 = vadd.f32 %v1978, %v1999
        %v2005 = vadd.f32 %v1979, %v2001
        %v2006 = vstv %s515
        %v2007 = vmul.f32 %v2006, %v906
        %v2008 = vmul.f32 %v2006, %v907
        %2011 = vrot.lane.b32.xlu0 %v2007, 15
        %v2012 = vpop.permute.xlu0 %2011
        %2013 = vrot.lane.b32.xlu0 %v2008, 15
        %v2014 = vpop.permute.xlu0 %2013
        %v2017 = vadd.f32 %v1991, %v2012
        %v2018 = vadd.f32 %v1992, %v2014
        %v2019 = vstv %s452
        %v2020 = vmul.f32 %v2019, %v908
        %v2021 = vmul.f32 %v2019, %v909
        %2024 = vrot.lane.b32.xlu0 %v2020, 15
        %v2025 = vpop.permute.xlu0 %2024
        %2026 = vrot.lane.b32.xlu0 %v2021, 15
        %v2027 = vpop.permute.xlu0 %2026
        %v2030 = vadd.f32 %v2004, %v2025
        %v2031 = vadd.f32 %v2005, %v2027
        %v2032 = vstv %s524
        %v2033 = vmul.f32 %v2032, %v908
        %v2034 = vmul.f32 %v2032, %v909
        %2037 = vrot.lane.b32.xlu0 %v2033, 15
        %v2038 = vpop.permute.xlu0 %2037
        %2039 = vrot.lane.b32.xlu0 %v2034, 15
        %v2040 = vpop.permute.xlu0 %2039
        %v2043 = vadd.f32 %v2017, %v2038
        %v2044 = vadd.f32 %v2018, %v2040
        %v2045 = vstv %s461
        %v2046 = vmul.f32 %v2045, %v910
        %v2047 = vmul.f32 %v2045, %v911
        %2050 = vrot.lane.b32.xlu0 %v2046, 15
        %v2051 = vpop.permute.xlu0 %2050
        %2052 = vrot.lane.b32.xlu0 %v2047, 15
        %v2053 = vpop.permute.xlu0 %2052
        %v2056 = vadd.f32 %v2030, %v2051
        %v2057 = vadd.f32 %v2031, %v2053
        %v2058 = vstv %s533
        %v2059 = vmul.f32 %v2058, %v910
        %v2060 = vmul.f32 %v2058, %v911
        %2063 = vrot.lane.b32.xlu0 %v2059, 15
        %v2064 = vpop.permute.xlu0 %2063
        %2065 = vrot.lane.b32.xlu0 %v2060, 15
        %v2066 = vpop.permute.xlu0 %2065
        %v2069 = vadd.f32 %v2043, %v2064
        %v2070 = vadd.f32 %v2044, %v2066
        %v2071 = vstv %s470
        %v2072 = vmul.f32 %v2071, %v912
        %v2073 = vmul.f32 %v2071, %v913
        %2076 = vrot.lane.b32.xlu0 %v2072, 15
        %v2077 = vpop.permute.xlu0 %2076
        %2078 = vrot.lane.b32.xlu0 %v2073, 15
        %v2079 = vpop.permute.xlu0 %2078
        %v2082 = vadd.f32 %v2056, %v2077
        %v2083 = vadd.f32 %v2057, %v2079
        %v2084 = vstv %s542
        %v2085 = vmul.f32 %v2084, %v912
        %v2086 = vmul.f32 %v2084, %v913
        %2089 = vrot.lane.b32.xlu0 %v2085, 15
        %v2090 = vpop.permute.xlu0 %2089
        %2091 = vrot.lane.b32.xlu0 %v2086, 15
        %v2092 = vpop.permute.xlu0 %2091
        %v2095 = vadd.f32 %v2069, %v2090
        %v2096 = vadd.f32 %v2070, %v2092
        %v2097 = vstv %s479
        %v2098 = vmul.f32 %v2097, %v914
        %v2099 = vmul.f32 %v2097, %v915
        %2102 = vrot.lane.b32.xlu0 %v2098, 15
        %v2103 = vpop.permute.xlu0 %2102
        %2104 = vrot.lane.b32.xlu0 %v2099, 15
        %v2105 = vpop.permute.xlu0 %2104
        %v2108 = vadd.f32 %v2082, %v2103
        %v2109 = vadd.f32 %v2083, %v2105
        %v2110 = vstv %s551
        %v2111 = vmul.f32 %v2110, %v914
        %v2112 = vmul.f32 %v2110, %v915
        %2115 = vrot.lane.b32.xlu0 %v2111, 15
        %v2116 = vpop.permute.xlu0 %2115
        %2117 = vrot.lane.b32.xlu0 %v2112, 15
        %v2118 = vpop.permute.xlu0 %2117
        %v2121 = vadd.f32 %v2095, %v2116
        %v2122 = vadd.f32 %v2096, %v2118
        %2123 = vrot.lane.b32.xlu0 %v699, 1
        %v2124 = vpop.permute.xlu0 %2123
        %v2126 = vmul.f32 %v1800, %v2124
        %v2127 = vmul.f32 %v1801, %v2124
        %v2128 = vmul.f32 %v1802, %v2124
        %v2129 = vmul.f32 %v1803, %v2124
        %v2130 = vmul.f32 %v1804, %v2124
        %v2131 = vmul.f32 %v1805, %v2124
        %v2132 = vmul.f32 %v1806, %v2124
        %v2133 = vmul.f32 %v1807, %v2124
        %v2134 = vmul.f32 %v1808, %v2124
        %v2135 = vmul.f32 %v1809, %v2124
        %v2136 = vmul.f32 %v1810, %v2124
        %v2137 = vmul.f32 %v1811, %v2124
        %v2138 = vmul.f32 %v1812, %v2124
        %v2139 = vmul.f32 %v1813, %v2124
        %v2140 = vmul.f32 %v1814, %v2124
        %v2141 = vmul.f32 %v1815, %v2124
        %v2142 = vstv %s417
        %v2143 = vmul.f32 %v2142, %v2126
        %v2144 = vmul.f32 %v2142, %v2127
        %2147 = vrot.lane.b32.xlu0 %v2143, 14
        %v2148 = vpop.permute.xlu0 %2147
        %2149 = vrot.lane.b32.xlu0 %v2144, 14
        %v2150 = vpop.permute.xlu0 %2149
        %v2153 = vadd.f32 %v2108, %v2148
        %v2154 = vadd.f32 %v2109, %v2150
        %v2155 = vstv %s489
        %v2156 = vmul.f32 %v2155, %v2126
        %v2157 = vmul.f32 %v2155, %v2127
        %2160 = vrot.lane.b32.xlu0 %v2156, 14
        %v2161 = vpop.permute.xlu0 %2160
        %2162 = vrot.lane.b32.xlu0 %v2157, 14
        %v2163 = vpop.permute.xlu0 %2162
        %v2166 = vadd.f32 %v2121, %v2161
        %v2167 = vadd.f32 %v2122, %v2163
        %v2168 = vstv %s426
        %v2169 = vmul.f32 %v2168, %v2128
        %v2170 = vmul.f32 %v2168, %v2129
        %2173 = vrot.lane.b32.xlu0 %v2169, 14
        %v2174 = vpop.permute.xlu0 %2173
        %2175 = vrot.lane.b32.xlu0 %v2170, 14
        %v2176 = vpop.permute.xlu0 %2175
        %v2179 = vadd.f32 %v2153, %v2174
        %v2180 = vadd.f32 %v2154, %v2176
        %v2181 = vstv %s498
        %v2182 = vmul.f32 %v2181, %v2128
        %v2183 = vmul.f32 %v2181, %v2129
        %2186 = vrot.lane.b32.xlu0 %v2182, 14
        %v2187 = vpop.permute.xlu0 %2186
        %2188 = vrot.lane.b32.xlu0 %v2183, 14
        %v2189 = vpop.permute.xlu0 %2188
        %v2192 = vadd.f32 %v2166, %v2187
        %v2193 = vadd.f32 %v2167, %v2189
        %v2194 = vstv %s435
        %v2195 = vmul.f32 %v2194, %v2130
        %v2196 = vmul.f32 %v2194, %v2131
        %2199 = vrot.lane.b32.xlu0 %v2195, 14
        %v2200 = vpop.permute.xlu0 %2199
        %2201 = vrot.lane.b32.xlu0 %v2196, 14
        %v2202 = vpop.permute.xlu0 %2201
        %v2205 = vadd.f32 %v2179, %v2200
        %v2206 = vadd.f32 %v2180, %v2202
        %v2207 = vstv %s507
        %v2208 = vmul.f32 %v2207, %v2130
        %v2209 = vmul.f32 %v2207, %v2131
        %2212 = vrot.lane.b32.xlu0 %v2208, 14
        %v2213 = vpop.permute.xlu0 %2212
        %2214 = vrot.lane.b32.xlu0 %v2209, 14
        %v2215 = vpop.permute.xlu0 %2214
        %v2218 = vadd.f32 %v2192, %v2213
        %v2219 = vadd.f32 %v2193, %v2215
        %v2220 = vstv %s444
        %v2221 = vmul.f32 %v2220, %v2132
        %v2222 = vmul.f32 %v2220, %v2133
        %2225 = vrot.lane.b32.xlu0 %v2221, 14
        %v2226 = vpop.permute.xlu0 %2225
        %2227 = vrot.lane.b32.xlu0 %v2222, 14
        %v2228 = vpop.permute.xlu0 %2227
        %v2231 = vadd.f32 %v2205, %v2226
        %v2232 = vadd.f32 %v2206, %v2228
        %v2233 = vstv %s516
        %v2234 = vmul.f32 %v2233, %v2132
        %v2235 = vmul.f32 %v2233, %v2133
        %2238 = vrot.lane.b32.xlu0 %v2234, 14
        %v2239 = vpop.permute.xlu0 %2238
        %2240 = vrot.lane.b32.xlu0 %v2235, 14
        %v2241 = vpop.permute.xlu0 %2240
        %v2244 = vadd.f32 %v2218, %v2239
        %v2245 = vadd.f32 %v2219, %v2241
        %v2246 = vstv %s453
        %v2247 = vmul.f32 %v2246, %v2134
        %v2248 = vmul.f32 %v2246, %v2135
        %2251 = vrot.lane.b32.xlu0 %v2247, 14
        %v2252 = vpop.permute.xlu0 %2251
        %2253 = vrot.lane.b32.xlu0 %v2248, 14
        %v2254 = vpop.permute.xlu0 %2253
        %v2257 = vadd.f32 %v2231, %v2252
        %v2258 = vadd.f32 %v2232, %v2254
        %v2259 = vstv %s525
        %v2260 = vmul.f32 %v2259, %v2134
        %v2261 = vmul.f32 %v2259, %v2135
        %2264 = vrot.lane.b32.xlu0 %v2260, 14
        %v2265 = vpop.permute.xlu0 %2264
        %2266 = vrot.lane.b32.xlu0 %v2261, 14
        %v2267 = vpop.permute.xlu0 %2266
        %v2270 = vadd.f32 %v2244, %v2265
        %v2271 = vadd.f32 %v2245, %v2267
        %v2272 = vstv %s462
        %v2273 = vmul.f32 %v2272, %v2136
        %v2274 = vmul.f32 %v2272, %v2137
        %2277 = vrot.lane.b32.xlu0 %v2273, 14
        %v2278 = vpop.permute.xlu0 %2277
        %2279 = vrot.lane.b32.xlu0 %v2274, 14
        %v2280 = vpop.permute.xlu0 %2279
        %v2283 = vadd.f32 %v2257, %v2278
        %v2284 = vadd.f32 %v2258, %v2280
        %v2285 = vstv %s534
        %v2286 = vmul.f32 %v2285, %v2136
        %v2287 = vmul.f32 %v2285, %v2137
        %2290 = vrot.lane.b32.xlu0 %v2286, 14
        %v2291 = vpop.permute.xlu0 %2290
        %2292 = vrot.lane.b32.xlu0 %v2287, 14
        %v2293 = vpop.permute.xlu0 %2292
        %v2296 = vadd.f32 %v2270, %v2291
        %v2297 = vadd.f32 %v2271, %v2293
        %v2298 = vstv %s471
        %v2299 = vmul.f32 %v2298, %v2138
        %v2300 = vmul.f32 %v2298, %v2139
        %2303 = vrot.lane.b32.xlu0 %v2299, 14
        %v2304 = vpop.permute.xlu0 %2303
        %2305 = vrot.lane.b32.xlu0 %v2300, 14
        %v2306 = vpop.permute.xlu0 %2305
        %v2309 = vadd.f32 %v2283, %v2304
        %v2310 = vadd.f32 %v2284, %v2306
        %v2311 = vstv %s543
        %v2312 = vmul.f32 %v2311, %v2138
        %v2313 = vmul.f32 %v2311, %v2139
        %2316 = vrot.lane.b32.xlu0 %v2312, 14
        %v2317 = vpop.permute.xlu0 %2316
        %2318 = vrot.lane.b32.xlu0 %v2313, 14
        %v2319 = vpop.permute.xlu0 %2318
        %v2322 = vadd.f32 %v2296, %v2317
        %v2323 = vadd.f32 %v2297, %v2319
        %v2324 = vstv %s480
        %v2325 = vmul.f32 %v2324, %v2140
        %v2326 = vmul.f32 %v2324, %v2141
        %2329 = vrot.lane.b32.xlu0 %v2325, 14
        %v2330 = vpop.permute.xlu0 %2329
        %2331 = vrot.lane.b32.xlu0 %v2326, 14
        %v2332 = vpop.permute.xlu0 %2331
        %v2335 = vadd.f32 %v2309, %v2330
        %v2336 = vadd.f32 %v2310, %v2332
        %v2337 = vstv %s552
        %v2338 = vmul.f32 %v2337, %v2140
        %v2339 = vmul.f32 %v2337, %v2141
        %2342 = vrot.lane.b32.xlu0 %v2338, 14
        %v2343 = vpop.permute.xlu0 %2342
        %2344 = vrot.lane.b32.xlu0 %v2339, 14
        %v2345 = vpop.permute.xlu0 %2344
        %v2348 = vadd.f32 %v2322, %v2343
        %v2349 = vadd.f32 %v2323, %v2345
        %v2350 = vrot.slane %v900, 1
        %v2351 = vrot.slane %v901, 1
        %v2352 = vrot.slane %v902, 1
        %v2353 = vrot.slane %v903, 1
        %v2354 = vrot.slane %v904, 1
        %v2355 = vrot.slane %v905, 1
        %v2356 = vrot.slane %v906, 1
        %v2357 = vrot.slane %v907, 1
        %v2358 = vrot.slane %v908, 1
        %v2359 = vrot.slane %v909, 1
        %v2360 = vrot.slane %v910, 1
        %v2361 = vrot.slane %v911, 1
        %v2362 = vrot.slane %v912, 1
        %v2363 = vrot.slane %v913, 1
        %v2364 = vrot.slane %v914, 1
        %v2365 = vrot.slane %v915, 1
        %vm2366 = vcmp.lt.s32.totalorder %v933, 7
        %v2367 = vsel %vm2366, %v2364, %v2365
        %v2368 = vsel %vm2366, %v2363, %v2364
        %v2369 = vsel %vm2366, %v2362, %v2363
        %v2370 = vsel %vm2366, %v2361, %v2362
        %v2371 = vsel %vm2366, %v2360, %v2361
        %v2372 = vsel %vm2366, %v2359, %v2360
        %v2373 = vsel %vm2366, %v2358, %v2359
        %v2374 = vsel %vm2366, %v2357, %v2358
        %v2375 = vsel %vm2366, %v2356, %v2357
        %v2376 = vsel %vm2366, %v2355, %v2356
        %v2377 = vsel %vm2366, %v2354, %v2355
        %v2378 = vsel %vm2366, %v2353, %v2354
        %v2379 = vsel %vm2366, %v2352, %v2353
        %v2380 = vsel %vm2366, %v2351, %v2352
        %v2381 = vsel %vm2366, %v2350, %v2351
        %v2382 = vsel %vm2366, %v2365, %v2350
        %2383 = vrot.lane.b32.xlu0 %v2381, 16
        %v2384 = vpop.permute.xlu0 %2383
        %v2385 = vsel %vm951, %v2384, %v2381
        %2386 = vrot.lane.b32.xlu0 %v2380, 16
        %v2387 = vpop.permute.xlu0 %2386
        %v2388 = vsel %vm951, %v2387, %v2380
        %2389 = vrot.lane.b32.xlu0 %v2379, 16
        %v2390 = vpop.permute.xlu0 %2389
        %v2391 = vsel %vm951, %v2390, %v2379
        %2392 = vrot.lane.b32.xlu0 %v2378, 16
        %v2393 = vpop.permute.xlu0 %2392
        %v2394 = vsel %vm951, %v2393, %v2378
        %2395 = vrot.lane.b32.xlu0 %v2377, 16
        %v2396 = vpop.permute.xlu0 %2395
        %v2397 = vsel %vm951, %v2396, %v2377
        %2398 = vrot.lane.b32.xlu0 %v2376, 16
        %v2399 = vpop.permute.xlu0 %2398
        %v2400 = vsel %vm951, %v2399, %v2376
        %2401 = vrot.lane.b32.xlu0 %v2375, 16
        %v2402 = vpop.permute.xlu0 %2401
        %v2403 = vsel %vm951, %v2402, %v2375
        %2404 = vrot.lane.b32.xlu0 %v2374, 16
        %v2405 = vpop.permute.xlu0 %2404
        %v2406 = vsel %vm951, %v2405, %v2374
        %2407 = vrot.lane.b32.xlu0 %v2373, 16
        %v2408 = vpop.permute.xlu0 %2407
        %v2409 = vsel %vm951, %v2408, %v2373
        %2410 = vrot.lane.b32.xlu0 %v2372, 16
        %v2411 = vpop.permute.xlu0 %2410
        %v2412 = vsel %vm951, %v2411, %v2372
        %2413 = vrot.lane.b32.xlu0 %v2371, 16
        %v2414 = vpop.permute.xlu0 %2413
        %v2415 = vsel %vm951, %v2414, %v2371
        %2416 = vrot.lane.b32.xlu0 %v2370, 16
        %v2417 = vpop.permute.xlu0 %2416
        %v2418 = vsel %vm951, %v2417, %v2370
        %2419 = vrot.lane.b32.xlu0 %v2369, 16
        %v2420 = vpop.permute.xlu0 %2419
        %v2421 = vsel %vm951, %v2420, %v2369
        %2422 = vrot.lane.b32.xlu0 %v2368, 16
        %v2423 = vpop.permute.xlu0 %2422
        %v2424 = vsel %vm951, %v2423, %v2368
        %2425 = vrot.lane.b32.xlu0 %v2367, 16
        %v2426 = vpop.permute.xlu0 %2425
        %v2427 = vsel %vm951, %v2426, %v2367
        %2428 = vrot.lane.b32.xlu0 %v2382, 16
        %v2429 = vpop.permute.xlu0 %2428
        %v2430 = vsel %vm951, %v2429, %v2382
        %2431 = vrot.lane.b32.xlu0 %v2385, 16
        %v2432 = vpop.permute.xlu0 %2431
        %2433 = vrot.lane.b32.xlu0 %v2388, 16
        %v2434 = vpop.permute.xlu0 %2433
        %2435 = vrot.lane.b32.xlu0 %v2391, 16
        %v2436 = vpop.permute.xlu0 %2435
        %2437 = vrot.lane.b32.xlu0 %v2394, 16
        %v2438 = vpop.permute.xlu0 %2437
        %2439 = vrot.lane.b32.xlu0 %v2397, 16
        %v2440 = vpop.permute.xlu0 %2439
        %2441 = vrot.lane.b32.xlu0 %v2400, 16
        %v2442 = vpop.permute.xlu0 %2441
        %2443 = vrot.lane.b32.xlu0 %v2403, 16
        %v2444 = vpop.permute.xlu0 %2443
        %2445 = vrot.lane.b32.xlu0 %v2406, 16
        %v2446 = vpop.permute.xlu0 %2445
        %2447 = vrot.lane.b32.xlu0 %v2409, 16
        %v2448 = vpop.permute.xlu0 %2447
        %2449 = vrot.lane.b32.xlu0 %v2412, 16
        %v2450 = vpop.permute.xlu0 %2449
        %2451 = vrot.lane.b32.xlu0 %v2415, 16
        %v2452 = vpop.permute.xlu0 %2451
        %2453 = vrot.lane.b32.xlu0 %v2418, 16
        %v2454 = vpop.permute.xlu0 %2453
        %2455 = vrot.lane.b32.xlu0 %v2421, 16
        %v2456 = vpop.permute.xlu0 %2455
        %2457 = vrot.lane.b32.xlu0 %v2424, 16
        %v2458 = vpop.permute.xlu0 %2457
        %2459 = vrot.lane.b32.xlu0 %v2427, 16
        %v2460 = vpop.permute.xlu0 %2459
        %2461 = vrot.lane.b32.xlu0 %v2430, 16
        %v2462 = vpop.permute.xlu0 %2461
        %v2463 = vsel %vm951, %v2432, %v2381
        %v2464 = vsel %vm951, %v2434, %v2380
        %v2465 = vsel %vm951, %v2436, %v2379
        %v2466 = vsel %vm951, %v2438, %v2378
        %v2467 = vsel %vm951, %v2440, %v2377
        %v2468 = vsel %vm951, %v2442, %v2376
        %v2469 = vsel %vm951, %v2444, %v2375
        %v2470 = vsel %vm951, %v2446, %v2374
        %v2471 = vsel %vm951, %v2448, %v2373
        %v2472 = vsel %vm951, %v2450, %v2372
        %v2473 = vsel %vm951, %v2452, %v2371
        %v2474 = vsel %vm951, %v2454, %v2370
        %v2475 = vsel %vm951, %v2456, %v2369
        %v2476 = vsel %vm951, %v2458, %v2368
        %v2477 = vsel %vm951, %v2460, %v2367
        %v2478 = vsel %vm951, %v2462, %v2382
        %2495 = vrot.lane.b32.xlu0 %v814, 15
        %v2496 = vpop.permute.xlu0 %2495
        %2497 = vrot.lane.b32.xlu0 %v815, 15
        %v2498 = vpop.permute.xlu0 %2497
        %2499 = vrot.lane.b32.xlu0 %v816, 15
        %v2500 = vpop.permute.xlu0 %2499
        %2501 = vrot.lane.b32.xlu0 %v817, 15
        %v2502 = vpop.permute.xlu0 %2501
        %2503 = vrot.lane.b32.xlu0 %v818, 15
        %v2504 = vpop.permute.xlu0 %2503
        %2505 = vrot.lane.b32.xlu0 %v819, 15
        %v2506 = vpop.permute.xlu0 %2505
        %2507 = vrot.lane.b32.xlu0 %v820, 15
        %v2508 = vpop.permute.xlu0 %2507
        %2509 = vrot.lane.b32.xlu0 %v821, 15
        %v2510 = vpop.permute.xlu0 %2509
        %2511 = vrot.lane.b32.xlu0 %v822, 15
        %v2512 = vpop.permute.xlu0 %2511
        %2513 = vrot.lane.b32.xlu0 %v823, 15
        %v2514 = vpop.permute.xlu0 %2513
        %2515 = vrot.lane.b32.xlu0 %v824, 15
        %v2516 = vpop.permute.xlu0 %2515
        %2517 = vrot.lane.b32.xlu0 %v825, 15
        %v2518 = vpop.permute.xlu0 %2517
        %2519 = vrot.lane.b32.xlu0 %v826, 15
        %v2520 = vpop.permute.xlu0 %2519
        %2521 = vrot.lane.b32.xlu0 %v827, 15
        %v2522 = vpop.permute.xlu0 %2521
        %2523 = vrot.lane.b32.xlu0 %v828, 15
        %v2524 = vpop.permute.xlu0 %2523
        %2525 = vrot.lane.b32.xlu0 %v829, 15
        %v2526 = vpop.permute.xlu0 %2525
        %v2543 = vmul.f32 %v2463, %v2496
        %v2544 = vmul.f32 %v2464, %v2498
        %v2545 = vmul.f32 %v2465, %v2500
        %v2546 = vmul.f32 %v2466, %v2502
        %v2547 = vmul.f32 %v2467, %v2504
        %v2548 = vmul.f32 %v2468, %v2506
        %v2549 = vmul.f32 %v2469, %v2508
        %v2550 = vmul.f32 %v2470, %v2510
        %v2551 = vmul.f32 %v2471, %v2512
        %v2552 = vmul.f32 %v2472, %v2514
        %v2553 = vmul.f32 %v2473, %v2516
        %v2554 = vmul.f32 %v2474, %v2518
        %v2555 = vmul.f32 %v2475, %v2520
        %v2556 = vmul.f32 %v2476, %v2522
        %v2557 = vmul.f32 %v2477, %v2524
        %v2558 = vmul.f32 %v2478, %v2526
        %v2559 = vstv %s418
        %v2560 = vmul.f32 %v2559, %v2543
        %v2561 = vmul.f32 %v2559, %v2544
        %v2562 = vadd.f32 %v2335, %v2560
        %v2563 = vadd.f32 %v2336, %v2561
        %v2564 = vstv %s490
        %v2565 = vmul.f32 %v2564, %v2543
        %v2566 = vmul.f32 %v2564, %v2544
        %v2567 = vadd.f32 %v2348, %v2565
        %v2568 = vadd.f32 %v2349, %v2566
        %v2569 = vstv %s427
        %v2570 = vmul.f32 %v2569, %v2545
        %v2571 = vmul.f32 %v2569, %v2546
        %v2572 = vadd.f32 %v2562, %v2570
        %v2573 = vadd.f32 %v2563, %v2571
        %v2574 = vstv %s499
        %v2575 = vmul.f32 %v2574, %v2545
        %v2576 = vmul.f32 %v2574, %v2546
        %v2577 = vadd.f32 %v2567, %v2575
        %v2578 = vadd.f32 %v2568, %v2576
        %v2579 = vstv %s436
        %v2580 = vmul.f32 %v2579, %v2547
        %v2581 = vmul.f32 %v2579, %v2548
        %v2582 = vadd.f32 %v2572, %v2580
        %v2583 = vadd.f32 %v2573, %v2581
        %v2584 = vstv %s508
        %v2585 = vmul.f32 %v2584, %v2547
        %v2586 = vmul.f32 %v2584, %v2548
        %v2587 = vadd.f32 %v2577, %v2585
        %v2588 = vadd.f32 %v2578, %v2586
        %v2589 = vstv %s445
        %v2590 = vmul.f32 %v2589, %v2549
        %v2591 = vmul.f32 %v2589, %v2550
        %v2592 = vadd.f32 %v2582, %v2590
        %v2593 = vadd.f32 %v2583, %v2591
        %v2594 = vstv %s517
        %v2595 = vmul.f32 %v2594, %v2549
        %v2596 = vmul.f32 %v2594, %v2550
        %v2597 = vadd.f32 %v2587, %v2595
        %v2598 = vadd.f32 %v2588, %v2596
        %v2599 = vstv %s454
        %v2600 = vmul.f32 %v2599, %v2551
        %v2601 = vmul.f32 %v2599, %v2552
        %v2602 = vadd.f32 %v2592, %v2600
        %v2603 = vadd.f32 %v2593, %v2601
        %v2604 = vstv %s526
        %v2605 = vmul.f32 %v2604, %v2551
        %v2606 = vmul.f32 %v2604, %v2552
        %v2607 = vadd.f32 %v2597, %v2605
        %v2608 = vadd.f32 %v2598, %v2606
        %v2609 = vstv %s463
        %v2610 = vmul.f32 %v2609, %v2553
        %v2611 = vmul.f32 %v2609, %v2554
        %v2612 = vadd.f32 %v2602, %v2610
        %v2613 = vadd.f32 %v2603, %v2611
        %v2614 = vstv %s535
        %v2615 = vmul.f32 %v2614, %v2553
        %v2616 = vmul.f32 %v2614, %v2554
        %v2617 = vadd.f32 %v2607, %v2615
        %v2618 = vadd.f32 %v2608, %v2616
        %v2619 = vstv %s472
        %v2620 = vmul.f32 %v2619, %v2555
        %v2621 = vmul.f32 %v2619, %v2556
        %v2622 = vadd.f32 %v2612, %v2620
        %v2623 = vadd.f32 %v2613, %v2621
        %v2624 = vstv %s544
        %v2625 = vmul.f32 %v2624, %v2555
        %v2626 = vmul.f32 %v2624, %v2556
        %v2627 = vadd.f32 %v2617, %v2625
        %v2628 = vadd.f32 %v2618, %v2626
        %v2629 = vstv %s481
        %v2630 = vmul.f32 %v2629, %v2557
        %v2631 = vmul.f32 %v2629, %v2558
        %v2632 = vadd.f32 %v2622, %v2630
        %v2633 = vadd.f32 %v2623, %v2631
        %v2634 = vstv %s553
        %v2635 = vmul.f32 %v2634, %v2557
        %v2636 = vmul.f32 %v2634, %v2558
        %v2637 = vadd.f32 %v2627, %v2635
        %v2638 = vadd.f32 %v2628, %v2636
        %v2639 = vmul.f32 %v2381, %v737
        %v2640 = vmul.f32 %v2380, %v742
        %v2641 = vmul.f32 %v2379, %v747
        %v2642 = vmul.f32 %v2378, %v752
        %v2643 = vmul.f32 %v2377, %v757
        %v2644 = vmul.f32 %v2376, %v762
        %v2645 = vmul.f32 %v2375, %v767
        %v2646 = vmul.f32 %v2374, %v772
        %v2647 = vmul.f32 %v2373, %v777
        %v2648 = vmul.f32 %v2372, %v782
        %v2649 = vmul.f32 %v2371, %v787
        %v2650 = vmul.f32 %v2370, %v792
        %v2651 = vmul.f32 %v2369, %v797
        %v2652 = vmul.f32 %v2368, %v802
        %v2653 = vmul.f32 %v2367, %v807
        %v2654 = vmul.f32 %v2382, %v812
        %v2655 = vstv %s419
        %v2656 = vmul.f32 %v2655, %v2639
        %v2657 = vmul.f32 %v2655, %v2640
        %2660 = vrot.lane.b32.xlu0 %v2656, 15
        %v2661 = vpop.permute.xlu0 %2660
        %2662 = vrot.lane.b32.xlu0 %v2657, 15
        %v2663 = vpop.permute.xlu0 %2662
        %v2666 = vadd.f32 %v2632, %v2661
        %v2667 = vadd.f32 %v2633, %v2663
        %v2668 = vstv %s491
        %v2669 = vmul.f32 %v2668, %v2639
        %v2670 = vmul.f32 %v2668, %v2640
        %2673 = vrot.lane.b32.xlu0 %v2669, 15
        %v2674 = vpop.permute.xlu0 %2673
        %2675 = vrot.lane.b32.xlu0 %v2670, 15
        %v2676 = vpop.permute.xlu0 %2675
        %v2679 = vadd.f32 %v2637, %v2674
        %v2680 = vadd.f32 %v2638, %v2676
        %v2681 = vstv %s428
        %v2682 = vmul.f32 %v2681, %v2641
        %v2683 = vmul.f32 %v2681, %v2642
        %2686 = vrot.lane.b32.xlu0 %v2682, 15
        %v2687 = vpop.permute.xlu0 %2686
        %2688 = vrot.lane.b32.xlu0 %v2683, 15
        %v2689 = vpop.permute.xlu0 %2688
        %v2692 = vadd.f32 %v2666, %v2687
        %v2693 = vadd.f32 %v2667, %v2689
        %v2694 = vstv %s500
        %v2695 = vmul.f32 %v2694, %v2641
        %v2696 = vmul.f32 %v2694, %v2642
        %2699 = vrot.lane.b32.xlu0 %v2695, 15
        %v2700 = vpop.permute.xlu0 %2699
        %2701 = vrot.lane.b32.xlu0 %v2696, 15
        %v2702 = vpop.permute.xlu0 %2701
        %v2705 = vadd.f32 %v2679, %v2700
        %v2706 = vadd.f32 %v2680, %v2702
        %v2707 = vstv %s437
        %v2708 = vmul.f32 %v2707, %v2643
        %v2709 = vmul.f32 %v2707, %v2644
        %2712 = vrot.lane.b32.xlu0 %v2708, 15
        %v2713 = vpop.permute.xlu0 %2712
        %2714 = vrot.lane.b32.xlu0 %v2709, 15
        %v2715 = vpop.permute.xlu0 %2714
        %v2718 = vadd.f32 %v2692, %v2713
        %v2719 = vadd.f32 %v2693, %v2715
        %v2720 = vstv %s509
        %v2721 = vmul.f32 %v2720, %v2643
        %v2722 = vmul.f32 %v2720, %v2644
        %2725 = vrot.lane.b32.xlu0 %v2721, 15
        %v2726 = vpop.permute.xlu0 %2725
        %2727 = vrot.lane.b32.xlu0 %v2722, 15
        %v2728 = vpop.permute.xlu0 %2727
        %v2731 = vadd.f32 %v2705, %v2726
        %v2732 = vadd.f32 %v2706, %v2728
        %v2733 = vstv %s446
        %v2734 = vmul.f32 %v2733, %v2645
        %v2735 = vmul.f32 %v2733, %v2646
        %2738 = vrot.lane.b32.xlu0 %v2734, 15
        %v2739 = vpop.permute.xlu0 %2738
        %2740 = vrot.lane.b32.xlu0 %v2735, 15
        %v2741 = vpop.permute.xlu0 %2740
        %v2744 = vadd.f32 %v2718, %v2739
        %v2745 = vadd.f32 %v2719, %v2741
        %v2746 = vstv %s518
        %v2747 = vmul.f32 %v2746, %v2645
        %v2748 = vmul.f32 %v2746, %v2646
        %2751 = vrot.lane.b32.xlu0 %v2747, 15
        %v2752 = vpop.permute.xlu0 %2751
        %2753 = vrot.lane.b32.xlu0 %v2748, 15
        %v2754 = vpop.permute.xlu0 %2753
        %v2757 = vadd.f32 %v2731, %v2752
        %v2758 = vadd.f32 %v2732, %v2754
        %v2759 = vstv %s455
        %v2760 = vmul.f32 %v2759, %v2647
        %v2761 = vmul.f32 %v2759, %v2648
        %2764 = vrot.lane.b32.xlu0 %v2760, 15
        %v2765 = vpop.permute.xlu0 %2764
        %2766 = vrot.lane.b32.xlu0 %v2761, 15
        %v2767 = vpop.permute.xlu0 %2766
        %v2770 = vadd.f32 %v2744, %v2765
        %v2771 = vadd.f32 %v2745, %v2767
        %v2772 = vstv %s527
        %v2773 = vmul.f32 %v2772, %v2647
        %v2774 = vmul.f32 %v2772, %v2648
        %2777 = vrot.lane.b32.xlu0 %v2773, 15
        %v2778 = vpop.permute.xlu0 %2777
        %2779 = vrot.lane.b32.xlu0 %v2774, 15
        %v2780 = vpop.permute.xlu0 %2779
        %v2783 = vadd.f32 %v2757, %v2778
        %v2784 = vadd.f32 %v2758, %v2780
        %v2785 = vstv %s464
        %v2786 = vmul.f32 %v2785, %v2649
        %v2787 = vmul.f32 %v2785, %v2650
        %2790 = vrot.lane.b32.xlu0 %v2786, 15
        %v2791 = vpop.permute.xlu0 %2790
        %2792 = vrot.lane.b32.xlu0 %v2787, 15
        %v2793 = vpop.permute.xlu0 %2792
        %v2796 = vadd.f32 %v2770, %v2791
        %v2797 = vadd.f32 %v2771, %v2793
        %v2798 = vstv %s536
        %v2799 = vmul.f32 %v2798, %v2649
        %v2800 = vmul.f32 %v2798, %v2650
        %2803 = vrot.lane.b32.xlu0 %v2799, 15
        %v2804 = vpop.permute.xlu0 %2803
        %2805 = vrot.lane.b32.xlu0 %v2800, 15
        %v2806 = vpop.permute.xlu0 %2805
        %v2809 = vadd.f32 %v2783, %v2804
        %v2810 = vadd.f32 %v2784, %v2806
        %v2811 = vstv %s473
        %v2812 = vmul.f32 %v2811, %v2651
        %v2813 = vmul.f32 %v2811, %v2652
        %2816 = vrot.lane.b32.xlu0 %v2812, 15
        %v2817 = vpop.permute.xlu0 %2816
        %2818 = vrot.lane.b32.xlu0 %v2813, 15
        %v2819 = vpop.permute.xlu0 %2818
        %v2822 = vadd.f32 %v2796, %v2817
        %v2823 = vadd.f32 %v2797, %v2819
        %v2824 = vstv %s545
        %v2825 = vmul.f32 %v2824, %v2651
        %v2826 = vmul.f32 %v2824, %v2652
        %2829 = vrot.lane.b32.xlu0 %v2825, 15
        %v2830 = vpop.permute.xlu0 %2829
        %2831 = vrot.lane.b32.xlu0 %v2826, 15
        %v2832 = vpop.permute.xlu0 %2831
        %v2835 = vadd.f32 %v2809, %v2830
        %v2836 = vadd.f32 %v2810, %v2832
        %v2837 = vstv %s482
        %v2838 = vmul.f32 %v2837, %v2653
        %v2839 = vmul.f32 %v2837, %v2654
        %2842 = vrot.lane.b32.xlu0 %v2838, 15
        %v2843 = vpop.permute.xlu0 %2842
        %2844 = vrot.lane.b32.xlu0 %v2839, 15
        %v2845 = vpop.permute.xlu0 %2844
        %v2848 = vadd.f32 %v2822, %v2843
        %v2849 = vadd.f32 %v2823, %v2845
        %v2850 = vstv %s554
        %v2851 = vmul.f32 %v2850, %v2653
        %v2852 = vmul.f32 %v2850, %v2654
        %2855 = vrot.lane.b32.xlu0 %v2851, 15
        %v2856 = vpop.permute.xlu0 %2855
        %2857 = vrot.lane.b32.xlu0 %v2852, 15
        %v2858 = vpop.permute.xlu0 %2857
        %v2861 = vadd.f32 %v2835, %v2856
        %v2862 = vadd.f32 %v2836, %v2858
        %2879 = vrot.lane.b32.xlu0 %v830, 1
        %v2880 = vpop.permute.xlu0 %2879
        %2881 = vrot.lane.b32.xlu0 %v831, 1
        %v2882 = vpop.permute.xlu0 %2881
        %2883 = vrot.lane.b32.xlu0 %v832, 1
        %v2884 = vpop.permute.xlu0 %2883
        %2885 = vrot.lane.b32.xlu0 %v833, 1
        %v2886 = vpop.permute.xlu0 %2885
        %2887 = vrot.lane.b32.xlu0 %v834, 1
        %v2888 = vpop.permute.xlu0 %2887
        %2889 = vrot.lane.b32.xlu0 %v835, 1
        %v2890 = vpop.permute.xlu0 %2889
        %2891 = vrot.lane.b32.xlu0 %v836, 1
        %v2892 = vpop.permute.xlu0 %2891
        %2893 = vrot.lane.b32.xlu0 %v837, 1
        %v2894 = vpop.permute.xlu0 %2893
        %2895 = vrot.lane.b32.xlu0 %v838, 1
        %v2896 = vpop.permute.xlu0 %2895
        %2897 = vrot.lane.b32.xlu0 %v839, 1
        %v2898 = vpop.permute.xlu0 %2897
        %2899 = vrot.lane.b32.xlu0 %v840, 1
        %v2900 = vpop.permute.xlu0 %2899
        %2901 = vrot.lane.b32.xlu0 %v841, 1
        %v2902 = vpop.permute.xlu0 %2901
        %2903 = vrot.lane.b32.xlu0 %v842, 1
        %v2904 = vpop.permute.xlu0 %2903
        %2905 = vrot.lane.b32.xlu0 %v843, 1
        %v2906 = vpop.permute.xlu0 %2905
        %2907 = vrot.lane.b32.xlu0 %v844, 1
        %v2908 = vpop.permute.xlu0 %2907
        %2909 = vrot.lane.b32.xlu0 %v845, 1
        %v2910 = vpop.permute.xlu0 %2909
        %v2927 = vmul.f32 %v2463, %v2880
        %v2928 = vmul.f32 %v2464, %v2882
        %v2929 = vmul.f32 %v2465, %v2884
        %v2930 = vmul.f32 %v2466, %v2886
        %v2931 = vmul.f32 %v2467, %v2888
        %v2932 = vmul.f32 %v2468, %v2890
        %v2933 = vmul.f32 %v2469, %v2892
        %v2934 = vmul.f32 %v2470, %v2894
        %v2935 = vmul.f32 %v2471, %v2896
        %v2936 = vmul.f32 %v2472, %v2898
        %v2937 = vmul.f32 %v2473, %v2900
        %v2938 = vmul.f32 %v2474, %v2902
        %v2939 = vmul.f32 %v2475, %v2904
        %v2940 = vmul.f32 %v2476, %v2906
        %v2941 = vmul.f32 %v2477, %v2908
        %v2942 = vmul.f32 %v2478, %v2910
        %v2943 = vstv %s420
        %v2944 = vmul.f32 %v2943, %v2927
        %v2945 = vmul.f32 %v2943, %v2928
        %2948 = vrot.lane.b32.xlu0 %v2944, 14
        %v2949 = vpop.permute.xlu0 %2948
        %2950 = vrot.lane.b32.xlu0 %v2945, 14
        %v2951 = vpop.permute.xlu0 %2950
        %v2954 = vadd.f32 %v2848, %v2949
        %v2955 = vadd.f32 %v2849, %v2951
        %v2956 = vstv %s492
        %v2957 = vmul.f32 %v2956, %v2927
        %v2958 = vmul.f32 %v2956, %v2928
        %2961 = vrot.lane.b32.xlu0 %v2957, 14
        %v2962 = vpop.permute.xlu0 %2961
        %2963 = vrot.lane.b32.xlu0 %v2958, 14
        %v2964 = vpop.permute.xlu0 %2963
        %v2967 = vadd.f32 %v2861, %v2962
        %v2968 = vadd.f32 %v2862, %v2964
        %v2969 = vstv %s429
        %v2970 = vmul.f32 %v2969, %v2929
        %v2971 = vmul.f32 %v2969, %v2930
        %2974 = vrot.lane.b32.xlu0 %v2970, 14
        %v2975 = vpop.permute.xlu0 %2974
        %2976 = vrot.lane.b32.xlu0 %v2971, 14
        %v2977 = vpop.permute.xlu0 %2976
        %v2980 = vadd.f32 %v2954, %v2975
        %v2981 = vadd.f32 %v2955, %v2977
        %v2982 = vstv %s501
        %v2983 = vmul.f32 %v2982, %v2929
        %v2984 = vmul.f32 %v2982, %v2930
        %2987 = vrot.lane.b32.xlu0 %v2983, 14
        %v2988 = vpop.permute.xlu0 %2987
        %2989 = vrot.lane.b32.xlu0 %v2984, 14
        %v2990 = vpop.permute.xlu0 %2989
        %v2993 = vadd.f32 %v2967, %v2988
        %v2994 = vadd.f32 %v2968, %v2990
        %v2995 = vstv %s438
        %v2996 = vmul.f32 %v2995, %v2931
        %v2997 = vmul.f32 %v2995, %v2932
        %3000 = vrot.lane.b32.xlu0 %v2996, 14
        %v3001 = vpop.permute.xlu0 %3000
        %3002 = vrot.lane.b32.xlu0 %v2997, 14
        %v3003 = vpop.permute.xlu0 %3002
        %v3006 = vadd.f32 %v2980, %v3001
        %v3007 = vadd.f32 %v2981, %v3003
        %v3008 = vstv %s510
        %v3009 = vmul.f32 %v3008, %v2931
        %v3010 = vmul.f32 %v3008, %v2932
        %3013 = vrot.lane.b32.xlu0 %v3009, 14
        %v3014 = vpop.permute.xlu0 %3013
        %3015 = vrot.lane.b32.xlu0 %v3010, 14
        %v3016 = vpop.permute.xlu0 %3015
        %v3019 = vadd.f32 %v2993, %v3014
        %v3020 = vadd.f32 %v2994, %v3016
        %v3021 = vstv %s447
        %v3022 = vmul.f32 %v3021, %v2933
        %v3023 = vmul.f32 %v3021, %v2934
        %3026 = vrot.lane.b32.xlu0 %v3022, 14
        %v3027 = vpop.permute.xlu0 %3026
        %3028 = vrot.lane.b32.xlu0 %v3023, 14
        %v3029 = vpop.permute.xlu0 %3028
        %v3032 = vadd.f32 %v3006, %v3027
        %v3033 = vadd.f32 %v3007, %v3029
        %v3034 = vstv %s519
        %v3035 = vmul.f32 %v3034, %v2933
        %v3036 = vmul.f32 %v3034, %v2934
        %3039 = vrot.lane.b32.xlu0 %v3035, 14
        %v3040 = vpop.permute.xlu0 %3039
        %3041 = vrot.lane.b32.xlu0 %v3036, 14
        %v3042 = vpop.permute.xlu0 %3041
        %v3045 = vadd.f32 %v3019, %v3040
        %v3046 = vadd.f32 %v3020, %v3042
        %v3047 = vstv %s456
        %v3048 = vmul.f32 %v3047, %v2935
        %v3049 = vmul.f32 %v3047, %v2936
        %3052 = vrot.lane.b32.xlu0 %v3048, 14
        %v3053 = vpop.permute.xlu0 %3052
        %3054 = vrot.lane.b32.xlu0 %v3049, 14
        %v3055 = vpop.permute.xlu0 %3054
        %v3058 = vadd.f32 %v3032, %v3053
        %v3059 = vadd.f32 %v3033, %v3055
        %v3060 = vstv %s528
        %v3061 = vmul.f32 %v3060, %v2935
        %v3062 = vmul.f32 %v3060, %v2936
        %3065 = vrot.lane.b32.xlu0 %v3061, 14
        %v3066 = vpop.permute.xlu0 %3065
        %3067 = vrot.lane.b32.xlu0 %v3062, 14
        %v3068 = vpop.permute.xlu0 %3067
        %v3071 = vadd.f32 %v3045, %v3066
        %v3072 = vadd.f32 %v3046, %v3068
        %v3073 = vstv %s465
        %v3074 = vmul.f32 %v3073, %v2937
        %v3075 = vmul.f32 %v3073, %v2938
        %3078 = vrot.lane.b32.xlu0 %v3074, 14
        %v3079 = vpop.permute.xlu0 %3078
        %3080 = vrot.lane.b32.xlu0 %v3075, 14
        %v3081 = vpop.permute.xlu0 %3080
        %v3084 = vadd.f32 %v3058, %v3079
        %v3085 = vadd.f32 %v3059, %v3081
        %v3086 = vstv %s537
        %v3087 = vmul.f32 %v3086, %v2937
        %v3088 = vmul.f32 %v3086, %v2938
        %3091 = vrot.lane.b32.xlu0 %v3087, 14
        %v3092 = vpop.permute.xlu0 %3091
        %3093 = vrot.lane.b32.xlu0 %v3088, 14
        %v3094 = vpop.permute.xlu0 %3093
        %v3097 = vadd.f32 %v3071, %v3092
        %v3098 = vadd.f32 %v3072, %v3094
        %v3099 = vstv %s474
        %v3100 = vmul.f32 %v3099, %v2939
        %v3101 = vmul.f32 %v3099, %v2940
        %3104 = vrot.lane.b32.xlu0 %v3100, 14
        %v3105 = vpop.permute.xlu0 %3104
        %3106 = vrot.lane.b32.xlu0 %v3101, 14
        %v3107 = vpop.permute.xlu0 %3106
        %v3110 = vadd.f32 %v3084, %v3105
        %v3111 = vadd.f32 %v3085, %v3107
        %v3112 = vstv %s546
        %v3113 = vmul.f32 %v3112, %v2939
        %v3114 = vmul.f32 %v3112, %v2940
        %3117 = vrot.lane.b32.xlu0 %v3113, 14
        %v3118 = vpop.permute.xlu0 %3117
        %3119 = vrot.lane.b32.xlu0 %v3114, 14
        %v3120 = vpop.permute.xlu0 %3119
        %v3123 = vadd.f32 %v3097, %v3118
        %v3124 = vadd.f32 %v3098, %v3120
        %v3125 = vstv %s483
        %v3126 = vmul.f32 %v3125, %v2941
        %v3127 = vmul.f32 %v3125, %v2942
        %3130 = vrot.lane.b32.xlu0 %v3126, 14
        %v3131 = vpop.permute.xlu0 %3130
        %3132 = vrot.lane.b32.xlu0 %v3127, 14
        %v3133 = vpop.permute.xlu0 %3132
        %v3136 = vadd.f32 %v3110, %v3131
        %v3137 = vadd.f32 %v3111, %v3133
        %v3138 = vstv %s555
        %v3139 = vmul.f32 %v3138, %v2941
        %v3140 = vmul.f32 %v3138, %v2942
        %3143 = vrot.lane.b32.xlu0 %v3139, 14
        %v3144 = vpop.permute.xlu0 %3143
        %3145 = vrot.lane.b32.xlu0 %v3140, 14
        %v3146 = vpop.permute.xlu0 %3145
        %v3149 = vadd.f32 %v3123, %v3144
        %v3150 = vadd.f32 %v3124, %v3146
        %vm3151 = vcmp.gt.f32.partialorder %v3136, 0.0
        %vm3152 = vcmp.gt.f32.partialorder %v3137, 0.0
        %vm3153 = vcmp.gt.f32.partialorder %v3149, 0.0
        %vm3154 = vcmp.gt.f32.partialorder %v3150, 0.0
        %v3155 = vmul.f32 %v3136, 0.2
        %v3156 = vmul.f32 %v3137, 0.2
        %v3157 = vmul.f32 %v3149, 0.2
        %v3158 = vmul.f32 %v3150, 0.2
        %v3159 = vsel %vm3151, %v3136, %v3155
        %v3160 = vsel %vm3152, %v3137, %v3156
        %v3161 = vsel %vm3153, %v3149, %v3157
        %v3162 = vsel %vm3154, %v3150, %v3158
        %3167 = vrot.lane.b32.xlu0 %v3159, 113
        %v3168 = vpop.permute.xlu0 %3167
        %3169 = vrot.lane.b32.xlu0 %v3160, 113
        %v3170 = vpop.permute.xlu0 %3169
        %3171 = vrot.lane.b32.xlu0 %v3161, 113
        %v3172 = vpop.permute.xlu0 %3171
        %3173 = vrot.lane.b32.xlu0 %v3162, 113
        %v3174 = vpop.permute.xlu0 %3173
        %3179 = vrot.lane.b32.xlu0 %v3168, 16
        %v3180 = vpop.permute.xlu0 %3179
        %v3181 = vsel %vm951, %v3180, %v3168
        %3182 = vrot.lane.b32.xlu0 %v3170, 16
        %v3183 = vpop.permute.xlu0 %3182
        %v3184 = vsel %vm951, %v3183, %v3170
        %3185 = vrot.lane.b32.xlu0 %v3172, 16
        %v3186 = vpop.permute.xlu0 %3185
        %v3187 = vsel %vm951, %v3186, %v3172
        %3188 = vrot.lane.b32.xlu0 %v3174, 16
        %v3189 = vpop.permute.xlu0 %3188
        %v3190 = vsel %vm951, %v3189, %v3174
        %3191 = vrot.lane.b32.xlu0 %v3181, 16
        %v3192 = vpop.permute.xlu0 %3191
        %3193 = vrot.lane.b32.xlu0 %v3184, 16
        %v3194 = vpop.permute.xlu0 %3193
        %3195 = vrot.lane.b32.xlu0 %v3187, 16
        %v3196 = vpop.permute.xlu0 %3195
        %3197 = vrot.lane.b32.xlu0 %v3190, 16
        %v3198 = vpop.permute.xlu0 %3197
        %v3199 = vsel %vm951, %v3192, %v3168
        %v3200 = vsel %vm951, %v3194, %v3170
        %v3201 = vsel %vm951, %v3196, %v3172
        %v3202 = vsel %vm951, %v3198, %v3174
        %3207 = vrot.lane.b32.xlu0 %v3199, 14
        %v3208 = vpop.permute.xlu0 %3207
        %3209 = vrot.lane.b32.xlu0 %v3200, 14
        %v3210 = vpop.permute.xlu0 %3209
        %3211 = vrot.lane.b32.xlu0 %v3201, 14
        %v3212 = vpop.permute.xlu0 %3211
        %3213 = vrot.lane.b32.xlu0 %v3202, 14
        %v3214 = vpop.permute.xlu0 %3213
        %v3219 = vmax.f32 %v3159, %v3208
        %v3220 = vmax.f32 %v3160, %v3210
        %v3221 = vmax.f32 %v3161, %v3212
        %v3222 = vmax.f32 %v3162, %v3214
        %3227 = vrot.lane.b32.xlu0 %v3219, 113
        %v3228 = vpop.permute.xlu0 %3227
        %3229 = vrot.lane.b32.xlu0 %v3220, 113
        %v3230 = vpop.permute.xlu0 %3229
        %3231 = vrot.lane.b32.xlu0 %v3221, 113
        %v3232 = vpop.permute.xlu0 %3231
        %3233 = vrot.lane.b32.xlu0 %v3222, 113
        %v3234 = vpop.permute.xlu0 %3233
        %v3239 = vrot.slane %v3228, 1
        %v3240 = vrot.slane %v3230, 1
        %v3241 = vrot.slane %v3232, 1
        %v3242 = vrot.slane %v3234, 1
        %v3243 = vsel %vm2366, %v3241, %v3242
        %v3244 = vsel %vm2366, %v3240, %v3241
        %v3245 = vsel %vm2366, %v3239, %v3240
        %v3246 = vsel %vm2366, %v3242, %v3239
        %3251 = vrot.lane.b32.xlu0 %v3245, 15
        %v3252 = vpop.permute.xlu0 %3251
        %3253 = vrot.lane.b32.xlu0 %v3244, 15
        %v3254 = vpop.permute.xlu0 %3253
        %3255 = vrot.lane.b32.xlu0 %v3243, 15
        %v3256 = vpop.permute.xlu0 %3255
        %3257 = vrot.lane.b32.xlu0 %v3246, 15
        %v3258 = vpop.permute.xlu0 %3257
        %v3263 = vmax.f32 %v3219, %v3252
        %v3264 = vmax.f32 %v3220, %v3254
        %v3265 = vmax.f32 %v3221, %v3256
        %v3266 = vmax.f32 %v3222, %v3258
        %3271 = vrot.lane.b32.xlu0 %v3263, 113
        %v3272 = vpop.permute.xlu0 %3271
        %3273 = vrot.lane.b32.xlu0 %v3264, 113
        %v3274 = vpop.permute.xlu0 %3273
        %3275 = vrot.lane.b32.xlu0 %v3265, 113
        %v3276 = vpop.permute.xlu0 %3275
        %3277 = vrot.lane.b32.xlu0 %v3266, 113
        %v3278 = vpop.permute.xlu0 %3277
        %vm3279 = vcmask 130048
        %v3280 = vsel %vm3279, %v3272, 0
        %v3282 = vsel %vm3279, %v3274, 0
        %v3284 = vsel %vm3279, %v3276, 0
        %v3286 = vsel %vm3279, %v3278, 0
        %3288 = vmatprep.subr.mxu0 0.0
        %3289 = vmatpush1.msra.mxu0 %v894
        %3290 = vmatprep.subr.mxu0 0.0
        %3291 = vmatpush1.msra.mxu0 %v895
        %3292 = vmatprep.subr.mxu0 0.0
        %3293 = vmatpush1.msra.mxu0 0.0
        %3294 = vmatprep.subr.mxu0 0.0
        %3295 = vmatpush1.msra.mxu0 0.0
        %3296 = vmatprep.subr.mxu0 0.0
        %3297 = vmatpush1.msra.mxu0 0.0
        %3298 = vmatprep.subr.mxu0 0.0
        %3299 = vmatpush1.msra.mxu0 0.0
        %3300 = vmatprep.subr.mxu0 0.0
        %3301 = vmatpush1.msra.mxu0 0.0
        %3302 = vmatprep.subr.mxu0 0.0
        %3303 = vmatpush1.msra.mxu0 0.0
        %3304 = vmatprep.subr.mxu0 0.0
        %3305 = vmatpush1.msra.mxu0 0.0
        %3306 = vmatprep.subr.mxu0 0.0
        %3307 = vmatpush1.msra.mxu0 0.0
        %3308 = vmatprep.subr.mxu0 0.0
        %3309 = vmatpush1.msra.mxu0 0.0
        %3310 = vmatprep.subr.mxu0 0.0
        %3311 = vmatpush1.msra.mxu0 0.0
        %3312 = vmatprep.subr.mxu0 0.0
        %3313 = vmatpush1.msra.mxu0 0.0
        %3314 = vmatprep.subr.mxu0 0.0
        %3315 = vmatpush1.msra.mxu0 0.0
        %3316 = vmatprep.subr.mxu0 0.0
        %3317 = vmatpush1.msra.mxu0 0.0
        %3318 = vmatprep.subr.mxu0 0.0
        %3319 = vmatpush1.msra.mxu0 0.0
        %3320 = vmatprep.subr.mxu0 0.0
        %3321 = vmatpush1.msra.mxu0 0.0
        %3322 = vmatprep.subr.mxu0 0.0
        %3323 = vmatpush1.msra.mxu0 0.0
        %3324 = vmatprep.subr.mxu0 0.0
        %3325 = vmatpush1.msra.mxu0 0.0
        %3326 = vmatprep.subr.mxu0 0.0
        %3327 = vmatpush1.msra.mxu0 0.0
        %3328 = vmatprep.subr.mxu0 0.0
        %3329 = vmatpush1.msra.mxu0 0.0
        %3330 = vmatprep.subr.mxu0 0.0
        %3331 = vmatpush1.msra.mxu0 0.0
        %3332 = vmatprep.subr.mxu0 0.0
        %3333 = vmatpush1.msra.mxu0 0.0
        %3334 = vmatprep.subr.mxu0 0.0
        %3335 = vmatpush1.msra.mxu0 0.0
        %3336 = vmatprep.subr.mxu0 0.0
        %3337 = vmatpush1.msra.mxu0 0.0
        %3338 = vmatprep.subr.mxu0 0.0
        %3339 = vmatpush1.msra.mxu0 0.0
        %3340 = vmatprep.subr.mxu0 0.0
        %3341 = vmatpush1.msra.mxu0 0.0
        %3342 = vmatprep.subr.mxu0 0.0
        %3343 = vmatpush1.msra.mxu0 0.0
        %3344 = vmatprep.subr.mxu0 0.0
        %3345 = vmatpush1.msra.mxu0 0.0
        %3346 = vmatprep.subr.mxu0 0.0
        %3347 = vmatpush1.msra.mxu0 0.0
        %3348 = vmatprep.subr.mxu0 0.0
        %3349 = vmatpush1.msra.mxu0 0.0
        %3350 = vmatprep.subr.mxu0 0.0
        %3351 = vmatpush1.msra.mxu0 0.0
        %3352 = vmatprep.mubr.f32.mxu0 0.0
        %3353 = vmatmul.mubr.f32.gmra.mrb[0].mxu0 %v3280
        %v3354 = vpop.f32.mrb[0].mxu0
        %v3355 = vadd.f32 0.0, %v3354
        %v3356 = vpop.f32.mrb[0].mxu0
        %3357 = vmatprep.mubr.f32.mxu0 0.0
        %3358 = vmatmul.mubr.f32.gmra.mrb[0].mxu0 %v3282
        %v3359 = vpop.f32.mrb[0].mxu0
        %v3360 = vadd.f32 0.0, %v3359
        %v3361 = vpop.f32.mrb[0].mxu0
        %3362 = vmatprep.mubr.f32.mxu0 0.0
        %3363 = vmatmul.mubr.f32.gmra.mrb[0].mxu0 %v3284
        %v3364 = vpop.f32.mrb[0].mxu0
        %v3365 = vadd.f32 0.0, %v3364
        %v3366 = vpop.f32.mrb[0].mxu0
        %3367 = vmatprep.mubr.f32.mxu0 0.0
        %3368 = vmatmul.mubr.f32.gmra.mrb[0].mxu0 %v3286
        %v3369 = vpop.f32.mrb[0].mxu0
        %v3370 = vadd.f32 0.0, %v3369
        %v3371 = vpop.f32.mrb[0].mxu0
        %3372 = vdwg.mxu0
        %vm3373 = vcmask 261120
        %v3375 = vsel %vm3373, %v896, 0
        %v3378 = vsel %vm3373, %v897, 0
        %3380 = vmatprep.subr.mxu0 0.0
        %3381 = vmatpush1.msra.mxu0 %v3355
        %3382 = vmatprep.subr.mxu0 0.0
        %3383 = vmatpush1.msra.mxu0 %v3360
        %3384 = vmatprep.subr.mxu0 0.0
        %3385 = vmatpush1.msra.mxu0 %v3365
        %3386 = vmatprep.subr.mxu0 0.0
        %3387 = vmatpush1.msra.mxu0 %v3370
        %3388 = vmatprep.subr.mxu0 0.0
        %3389 = vmatpush1.msra.mxu0 0.0
        %3390 = vmatprep.subr.mxu0 0.0
        %3391 = vmatpush1.msra.mxu0 0.0
        %3392 = vmatprep.subr.mxu0 0.0
        %3393 = vmatpush1.msra.mxu0 0.0
        %3394 = vmatprep.subr.mxu0 0.0
        %3395 = vmatpush1.msra.mxu0 0.0
        %3396 = vmatprep.subr.mxu0 0.0
        %3397 = vmatpush1.msra.mxu0 0.0
        %3398 = vmatprep.subr.mxu0 0.0
        %3399 = vmatpush1.msra.mxu0 0.0
        %3400 = vmatprep.subr.mxu0 0.0
        %3401 = vmatpush1.msra.mxu0 0.0
        %3402 = vmatprep.subr.mxu0 0.0
        %3403 = vmatpush1.msra.mxu0 0.0
        %3404 = vmatprep.subr.mxu0 0.0
        %3405 = vmatpush1.msra.mxu0 0.0
        %3406 = vmatprep.subr.mxu0 0.0
        %3407 = vmatpush1.msra.mxu0 0.0
        %3408 = vmatprep.subr.mxu0 0.0
        %3409 = vmatpush1.msra.mxu0 0.0
        %3410 = vmatprep.subr.mxu0 0.0
        %3411 = vmatpush1.msra.mxu0 0.0
        %3412 = vmatprep.subr.mxu0 0.0
        %3413 = vmatpush1.msra.mxu0 0.0
        %3414 = vmatprep.subr.mxu0 0.0
        %3415 = vmatpush1.msra.mxu0 0.0
        %3416 = vmatprep.subr.mxu0 0.0
        %3417 = vmatpush1.msra.mxu0 0.0
        %3418 = vmatprep.subr.mxu0 0.0
        %3419 = vmatpush1.msra.mxu0 0.0
        %3420 = vmatprep.subr.mxu0 0.0
        %3421 = vmatpush1.msra.mxu0 0.0
        %3422 = vmatprep.subr.mxu0 0.0
        %3423 = vmatpush1.msra.mxu0 0.0
        %3424 = vmatprep.subr.mxu0 0.0
        %3425 = vmatpush1.msra.mxu0 0.0
        %3426 = vmatprep.subr.mxu0 0.0
        %3427 = vmatpush1.msra.mxu0 0.0
        %3428 = vmatprep.subr.mxu0 0.0
        %3429 = vmatpush1.msra.mxu0 0.0
        %3430 = vmatprep.subr.mxu0 0.0
        %3431 = vmatpush1.msra.mxu0 0.0
        %3432 = vmatprep.subr.mxu0 0.0
        %3433 = vmatpush1.msra.mxu0 0.0
        %3434 = vmatprep.subr.mxu0 0.0
        %3435 = vmatpush1.msra.mxu0 0.0
        %3436 = vmatprep.subr.mxu0 0.0
        %3437 = vmatpush1.msra.mxu0 0.0
        %3438 = vmatprep.subr.mxu0 0.0
        %3439 = vmatpush1.msra.mxu0 0.0
        %3440 = vmatprep.subr.mxu0 0.0
        %3441 = vmatpush1.msra.mxu0 0.0
        %3442 = vmatprep.subr.mxu0 0.0
        %3443 = vmatpush1.msra.mxu0 0.0
        %3444 = vmatprep.mubr.f32.mxu0 0.0
        %3445 = vmatmul.mubr.f32.gmra.mrb[0].mxu0 %v3375
        %v3446 = vpop.f32.mrb[0].mxu0
        %v3447 = vadd.f32 0.0, %v3446
        %v3448 = vpop.f32.mrb[0].mxu0
        %3449 = vmatprep.mubr.f32.mxu0 0.0
        %3450 = vmatmul.mubr.f32.gmra.mrb[0].mxu0 %v3378
        %v3451 = vpop.f32.mrb[0].mxu0
        %v3452 = vadd.f32 0.0, %v3451
        %v3453 = vpop.f32.mrb[0].mxu0
        %3454 = vdwg.mxu0
        %v3455 = vrot.slane %v3447, 7
        %v3456 = vrot.slane %v3452, 7
        %v3457 = vsel %vm934, %v3455, %v3456
        %v3458 = vsel %vm934, %v3456, %v3455
        %vm3459 = vcmask 1047616
        %3460 = vrot.lane.b32.xlu0 %v3458, 8
        %v3461 = vpop.permute.xlu0 %3460
        %v3462 = vsel %vm3459, %v3461, %v3458
        %3463 = vrot.lane.b32.xlu0 %v3457, 8
        %v3464 = vpop.permute.xlu0 %3463
        %v3465 = vsel %vm3459, %v3464, %v3457
        %3466 = vrot.lane.b32.xlu0 %v3462, 8
        %v3467 = vpop.permute.xlu0 %3466
        %3468 = vrot.lane.b32.xlu0 %v3465, 8
        %v3469 = vpop.permute.xlu0 %3468
        %v3470 = vsel %vm3459, %v3467, %v3458
        %v3471 = vsel %vm3459, %v3469, %v3457
        %3474 = vrot.lane.b32.xlu0 %v865, 7
        %v3475 = vpop.permute.xlu0 %3474
        %3476 = vrot.lane.b32.xlu0 %v866, 7
        %v3477 = vpop.permute.xlu0 %3476
        %v3480 = vmul.f32 %v3470, %v3475
        %v3481 = vmul.f32 %v3471, %v3477
        %v3482 = vstv %s556
        %v3483 = vmul.f32 %v3482, %v3480
        %v3484 = vadd.f32 %v3483, 0.0
        %v3485 = vstv %s565
        %v3486 = vmul.f32 %v3485, %v3481
        %v3487 = vadd.f32 %v3484, %v3486
        %v3488 = vmul.f32 %v3458, %v852
        %v3489 = vmul.f32 %v3457, %v857
        %v3490 = vstv %s557
        %v3491 = vmul.f32 %v3490, %v3488
        %3493 = vrot.lane.b32.xlu0 %v3491, 7
        %v3494 = vpop.permute.xlu0 %3493
        %v3496 = vadd.f32 %v3487, %v3494
        %v3497 = vstv %s566
        %v3498 = vmul.f32 %v3497, %v3489
        %3500 = vrot.lane.b32.xlu0 %v3498, 7
        %v3501 = vpop.permute.xlu0 %3500
        %v3503 = vadd.f32 %v3496, %v3501
        %3506 = vrot.lane.b32.xlu0 %v875, 1
        %v3507 = vpop.permute.xlu0 %3506
        %3508 = vrot.lane.b32.xlu0 %v876, 1
        %v3509 = vpop.permute.xlu0 %3508
        %v3512 = vmul.f32 %v3470, %v3507
        %v3513 = vmul.f32 %v3471, %v3509
        %v3514 = vstv %s558
        %v3515 = vmul.f32 %v3514, %v3512
        %3517 = vrot.lane.b32.xlu0 %v3515, 6
        %v3518 = vpop.permute.xlu0 %3517
        %v3520 = vadd.f32 %v3503, %v3518
        %v3521 = vstv %s567
        %v3522 = vmul.f32 %v3521, %v3513
        %3524 = vrot.lane.b32.xlu0 %v3522, 6
        %v3525 = vpop.permute.xlu0 %3524
        %v3527 = vadd.f32 %v3520, %v3525
        %3528 = vrot.lane.b32.xlu0 %v3447, 8
        %v3529 = vpop.permute.xlu0 %3528
        %v3530 = vsel %vm3459, %v3529, %v3447
        %3531 = vrot.lane.b32.xlu0 %v3452, 8
        %v3532 = vpop.permute.xlu0 %3531
        %v3533 = vsel %vm3459, %v3532, %v3452
        %3534 = vrot.lane.b32.xlu0 %v3530, 8
        %v3535 = vpop.permute.xlu0 %3534
        %3536 = vrot.lane.b32.xlu0 %v3533, 8
        %v3537 = vpop.permute.xlu0 %3536
        %v3538 = vsel %vm3459, %v3535, %v3447
        %v3539 = vsel %vm3459, %v3537, %v3452
        %3540 = vrot.lane.b32.xlu0 %v863, 7
        %v3541 = vpop.permute.xlu0 %3540
        %v3543 = vmul.f32 %v3538, %v3541
        %v3544 = vmul.f32 %v3539, %v3541
        %v3545 = vstv %s559
        %v3546 = vmul.f32 %v3545, %v3543
        %v3547 = vadd.f32 %v3527, %v3546
        %v3548 = vstv %s568
        %v3549 = vmul.f32 %v3548, %v3544
        %v3550 = vadd.f32 %v3547, %v3549
        %v3551 = vstv %s560
        %v3552 = vmul.f32 %v3551, %v3447
        %3554 = vrot.lane.b32.xlu0 %v3552, 7
        %v3555 = vpop.permute.xlu0 %3554
        %v3557 = vadd.f32 %v3550, %v3555
        %v3558 = vstv %s569
        %v3559 = vmul.f32 %v3558, %v3452
        %3561 = vrot.lane.b32.xlu0 %v3559, 7
        %v3562 = vpop.permute.xlu0 %3561
        %v3564 = vadd.f32 %v3557, %v3562
        %3565 = vrot.lane.b32.xlu0 %v873, 1
        %v3566 = vpop.permute.xlu0 %3565
        %v3568 = vmul.f32 %v3538, %v3566
        %v3569 = vmul.f32 %v3539, %v3566
        %v3570 = vstv %s561
        %v3571 = vmul.f32 %v3570, %v3568
        %3573 = vrot.lane.b32.xlu0 %v3571, 6
        %v3574 = vpop.permute.xlu0 %3573
        %v3576 = vadd.f32 %v3564, %v3574
        %v3577 = vstv %s570
        %v3578 = vmul.f32 %v3577, %v3569
        %3580 = vrot.lane.b32.xlu0 %v3578, 6
        %v3581 = vpop.permute.xlu0 %3580
        %v3583 = vadd.f32 %v3576, %v3581
        %v3584 = vrot.slane %v3447, 1
        %v3585 = vrot.slane %v3452, 1
        %v3586 = vsel %vm2366, %v3584, %v3585
        %v3587 = vsel %vm2366, %v3585, %v3584
        %3588 = vrot.lane.b32.xlu0 %v3586, 8
        %v3589 = vpop.permute.xlu0 %3588
        %v3590 = vsel %vm3459, %v3589, %v3586
        %3591 = vrot.lane.b32.xlu0 %v3587, 8
        %v3592 = vpop.permute.xlu0 %3591
        %v3593 = vsel %vm3459, %v3592, %v3587
        %3594 = vrot.lane.b32.xlu0 %v3590, 8
        %v3595 = vpop.permute.xlu0 %3594
        %3596 = vrot.lane.b32.xlu0 %v3593, 8
        %v3597 = vpop.permute.xlu0 %3596
        %v3598 = vsel %vm3459, %v3595, %v3586
        %v3599 = vsel %vm3459, %v3597, %v3587
        %3602 = vrot.lane.b32.xlu0 %v890, 7
        %v3603 = vpop.permute.xlu0 %3602
        %3604 = vrot.lane.b32.xlu0 %v891, 7
        %v3605 = vpop.permute.xlu0 %3604
        %v3608 = vmul.f32 %v3598, %v3603
        %v3609 = vmul.f32 %v3599, %v3605
        %v3610 = vstv %s562
        %v3611 = vmul.f32 %v3610, %v3608
        %v3612 = vadd.f32 %v3583, %v3611
        %v3613 = vstv %s571
        %v3614 = vmul.f32 %v3613, %v3609
        %v3615 = vadd.f32 %v3612, %v3614
        %v3616 = vmul.f32 %v3586, %v883
        %v3617 = vmul.f32 %v3587, %v888
        %v3618 = vstv %s563
        %v3619 = vmul.f32 %v3618, %v3616
        %3621 = vrot.lane.b32.xlu0 %v3619, 7
        %v3622 = vpop.permute.xlu0 %3621
        %v3624 = vadd.f32 %v3615, %v3622
        %v3625 = vstv %s572
        %v3626 = vmul.f32 %v3625, %v3617
        %3628 = vrot.lane.b32.xlu0 %v3626, 7
        %v3629 = vpop.permute.xlu0 %3628
        %v3631 = vadd.f32 %v3624, %v3629
        %3634 = vrot.lane.b32.xlu0 %v892, 1
        %v3635 = vpop.permute.xlu0 %3634
        %3636 = vrot.lane.b32.xlu0 %v893, 1
        %v3637 = vpop.permute.xlu0 %3636
        %v3640 = vmul.f32 %v3598, %v3635
        %v3641 = vmul.f32 %v3599, %v3637
        %v3642 = vstv %s564
        %v3643 = vmul.f32 %v3642, %v3640
        %3645 = vrot.lane.b32.xlu0 %v3643, 6
        %v3646 = vpop.permute.xlu0 %3645
        %v3648 = vadd.f32 %v3631, %v3646
        %v3649 = vstv %s573
        %v3650 = vmul.f32 %v3649, %v3641
        %3652 = vrot.lane.b32.xlu0 %v3650, 6
        %v3653 = vpop.permute.xlu0 %3652
        %v3655 = vadd.f32 %v3648, %v3653
        %vm3656 = vcmp.gt.f32.partialorder %v3655, 0.0
        %v3657 = vmul.f32 %v3655, 0.2
        %v3658 = vsel %vm3656, %v3655, %v3657
        %3660 = vrot.lane.b32.xlu0 %v3658, 121
        %v3661 = vpop.permute.xlu0 %3660
        %3663 = vrot.lane.b32.xlu0 %v3661, 8
        %v3664 = vpop.permute.xlu0 %3663
        %v3665 = vsel %vm3459, %v3664, %v3661
        %3666 = vrot.lane.b32.xlu0 %v3665, 8
        %v3667 = vpop.permute.xlu0 %3666
        %v3668 = vsel %vm3459, %v3667, %v3661
        %3670 = vrot.lane.b32.xlu0 %v3668, 6
        %v3671 = vpop.permute.xlu0 %3670
        %v3673 = vmax.f32 %v3658, %v3671
        %3675 = vrot.lane.b32.xlu0 %v3673, 121
        %v3676 = vpop.permute.xlu0 %3675
        %v3678 = vrot.slane %v3676, 1
        %3680 = vrot.lane.b32.xlu0 %v3678, 7
        %v3681 = vpop.permute.xlu0 %3680
        %v3683 = vmax.f32 %v3673, %v3681
        %3685 = vrot.lane.b32.xlu0 %v3683, 121
        %v3686 = vpop.permute.xlu0 %3685
        %vm3687 = vcmask 64512
        %v3688 = vsel %vm3687, %v3686, 0
        %3690 = vmatprep.subr.mxu0 0.0
        %3691 = vmatpush1.msra.mxu0 %v898
        %3692 = vmatprep.subr.mxu0 0.0
        %3693 = vmatpush1.msra.mxu0 0.0
        %3694 = vmatprep.subr.mxu0 0.0
        %3695 = vmatpush1.msra.mxu0 0.0
        %3696 = vmatprep.subr.mxu0 0.0
        %3697 = vmatpush1.msra.mxu0 0.0
        %3698 = vmatprep.subr.mxu0 0.0
        %3699 = vmatpush1.msra.mxu0 0.0
        %3700 = vmatprep.subr.mxu0 0.0
        %3701 = vmatpush1.msra.mxu0 0.0
        %3702 = vmatprep.subr.mxu0 0.0
        %3703 = vmatpush1.msra.mxu0 0.0
        %3704 = vmatprep.subr.mxu0 0.0
        %3705 = vmatpush1.msra.mxu0 0.0
        %3706 = vmatprep.subr.mxu0 0.0
        %3707 = vmatpush1.msra.mxu0 0.0
        %3708 = vmatprep.subr.mxu0 0.0
        %3709 = vmatpush1.msra.mxu0 0.0
        %3710 = vmatprep.subr.mxu0 0.0
        %3711 = vmatpush1.msra.mxu0 0.0
        %3712 = vmatprep.subr.mxu0 0.0
        %3713 = vmatpush1.msra.mxu0 0.0
        %3714 = vmatprep.subr.mxu0 0.0
        %3715 = vmatpush1.msra.mxu0 0.0
        %3716 = vmatprep.subr.mxu0 0.0
        %3717 = vmatpush1.msra.mxu0 0.0
        %3718 = vmatprep.subr.mxu0 0.0
        %3719 = vmatpush1.msra.mxu0 0.0
        %3720 = vmatprep.subr.mxu0 0.0
        %3721 = vmatpush1.msra.mxu0 0.0
        %3722 = vmatprep.subr.mxu0 0.0
        %3723 = vmatpush1.msra.mxu0 0.0
        %3724 = vmatprep.subr.mxu0 0.0
        %3725 = vmatpush1.msra.mxu0 0.0
        %3726 = vmatprep.subr.mxu0 0.0
        %3727 = vmatpush1.msra.mxu0 0.0
        %3728 = vmatprep.subr.mxu0 0.0
        %3729 = vmatpush1.msra.mxu0 0.0
        %3730 = vmatprep.subr.mxu0 0.0
        %3731 = vmatpush1.msra.mxu0 0.0
        %3732 = vmatprep.subr.mxu0 0.0
        %3733 = vmatpush1.msra.mxu0 0.0
        %3734 = vmatprep.subr.mxu0 0.0
        %3735 = vmatpush1.msra.mxu0 0.0
        %3736 = vmatprep.subr.mxu0 0.0
        %3737 = vmatpush1.msra.mxu0 0.0
        %3738 = vmatprep.subr.mxu0 0.0
        %3739 = vmatpush1.msra.mxu0 0.0
        %3740 = vmatprep.subr.mxu0 0.0
        %3741 = vmatpush1.msra.mxu0 0.0
        %3742 = vmatprep.subr.mxu0 0.0
        %3743 = vmatpush1.msra.mxu0 0.0
        %3744 = vmatprep.subr.mxu0 0.0
        %3745 = vmatpush1.msra.mxu0 0.0
        %3746 = vmatprep.subr.mxu0 0.0
        %3747 = vmatpush1.msra.mxu0 0.0
        %3748 = vmatprep.subr.mxu0 0.0
        %3749 = vmatpush1.msra.mxu0 0.0
        %3750 = vmatprep.subr.mxu0 0.0
        %3751 = vmatpush1.msra.mxu0 0.0
        %3752 = vmatprep.subr.mxu0 0.0
        %3753 = vmatpush1.msra.mxu0 0.0
        %3754 = vmatprep.mubr.f32.mxu0 0.0
        %3755 = vmatmul.mubr.f32.gmra.mrb[0].mxu0 %v3688
        %v3756 = vpop.f32.mrb[0].mxu0
        %v3757 = vadd.f32 0.0, %v3756
        %v3758 = vpop.f32.mrb[0].mxu0
        %3759 = vdwg.mxu0
        %v3761 = vsel %vm3687, %v899, 0
        %3763 = vmatprep.subr.mxu0 0.0
        %3764 = vmatpush1.msra.mxu0 %v3757
        %3765 = vmatprep.subr.mxu0 0.0
        %3766 = vmatpush1.msra.mxu0 0.0
        %3767 = vmatprep.subr.mxu0 0.0
        %3768 = vmatpush1.msra.mxu0 0.0
        %3769 = vmatprep.subr.mxu0 0.0
        %3770 = vmatpush1.msra.mxu0 0.0
        %3771 = vmatprep.subr.mxu0 0.0
        %3772 = vmatpush1.msra.mxu0 0.0
        %3773 = vmatprep.subr.mxu0 0.0
        %3774 = vmatpush1.msra.mxu0 0.0
        %3775 = vmatprep.subr.mxu0 0.0
        %3776 = vmatpush1.msra.mxu0 0.0
        %3777 = vmatprep.subr.mxu0 0.0
        %3778 = vmatpush1.msra.mxu0 0.0
        %3779 = vmatprep.subr.mxu0 0.0
        %3780 = vmatpush1.msra.mxu0 0.0
        %3781 = vmatprep.subr.mxu0 0.0
        %3782 = vmatpush1.msra.mxu0 0.0
        %3783 = vmatprep.subr.mxu0 0.0
        %3784 = vmatpush1.msra.mxu0 0.0
        %3785 = vmatprep.subr.mxu0 0.0
        %3786 = vmatpush1.msra.mxu0 0.0
        %3787 = vmatprep.subr.mxu0 0.0
        %3788 = vmatpush1.msra.mxu0 0.0
        %3789 = vmatprep.subr.mxu0 0.0
        %3790 = vmatpush1.msra.mxu0 0.0
        %3791 = vmatprep.subr.mxu0 0.0
        %3792 = vmatpush1.msra.mxu0 0.0
        %3793 = vmatprep.subr.mxu0 0.0
        %3794 = vmatpush1.msra.mxu0 0.0
        %3795 = vmatprep.subr.mxu0 0.0
        %3796 = vmatpush1.msra.mxu0 0.0
        %3797 = vmatprep.subr.mxu0 0.0
        %3798 = vmatpush1.msra.mxu0 0.0
        %3799 = vmatprep.subr.mxu0 0.0
        %3800 = vmatpush1.msra.mxu0 0.0
        %3801 = vmatprep.subr.mxu0 0.0
        %3802 = vmatpush1.msra.mxu0 0.0
        %3803 = vmatprep.subr.mxu0 0.0
        %3804 = vmatpush1.msra.mxu0 0.0
        %3805 = vmatprep.subr.mxu0 0.0
        %3806 = vmatpush1.msra.mxu0 0.0
        %3807 = vmatprep.subr.mxu0 0.0
        %3808 = vmatpush1.msra.mxu0 0.0
        %3809 = vmatprep.subr.mxu0 0.0
        %3810 = vmatpush1.msra.mxu0 0.0
        %3811 = vmatprep.subr.mxu0 0.0
        %3812 = vmatpush1.msra.mxu0 0.0
        %3813 = vmatprep.subr.mxu0 0.0
        %3814 = vmatpush1.msra.mxu0 0.0
        %3815 = vmatprep.subr.mxu0 0.0
        %3816 = vmatpush1.msra.mxu0 0.0
        %3817 = vmatprep.subr.mxu0 0.0
        %3818 = vmatpush1.msra.mxu0 0.0
        %3819 = vmatprep.subr.mxu0 0.0
        %3820 = vmatpush1.msra.mxu0 0.0
        %3821 = vmatprep.subr.mxu0 0.0
        %3822 = vmatpush1.msra.mxu0 0.0
        %3823 = vmatprep.subr.mxu0 0.0
        %3824 = vmatpush1.msra.mxu0 0.0
        %3825 = vmatprep.subr.mxu0 0.0
        %3826 = vmatpush1.msra.mxu0 0.0
        %3827 = vmatprep.mubr.f32.mxu0 0.0
        %3828 = vmatmul.mubr.f32.gmra.mrb[0].mxu0 %v3761
        %v3829 = vpop.f32.mrb[0].mxu0
        %v3830 = vadd.f32 0.0, %v3829
        %v3831 = vpop.f32.mrb[0].mxu0
        %3832 = vdwg.mxu0
        %vm3833 = vcmask 27648
        %3834 = vst.msk [vmem:[%s406] sm:$0xf] %vm3833, %v3830
        %s3835 = sand.u32 %s271, 1
        %s3836 = scalar_lea.sflag [#allocation3], %s3835
        %s3837 = sand.u32 %s271, 1
        %s3838 = smul.addr %s3837, 4
        %s3839 = scalar_lea.vmem [#allocation7], %s3838
        // Predicated region
        $region73: #{tpu_custom_call.1} parent=63 // pred_check
          %p3840 = pneg %p281
        $region74: #{tpu_custom_call.1} parent=63 // pred_check_branch
          %3842 = sbr.rel (%p3840) target = $region76
        $region75: #{tpu_custom_call.1} parent=63 // pred_region
          %s3844 = ssub.s32 64, 64
          %3845 = vsyncadd %s3836, %s3844
          %s3846 = smul.addr %s27, 64
          %s3847 = scalar_lea.hbm %s11, %s3846
          %s3849 = sshll.u32 %s3839, 4
          %s3850 = int_to_ptr.vmem [resolvable:$true] %s3849
          %3852 = dma.vmem_to_hbm [thread:$0]  %s3850, 64, %s3847, %s3836
        $region76: #{tpu_custom_call.1} parent=63 // pred_fallthru
          _
      $region64: #{tpu_custom_call.1} parent=5 // pred_fallthru
        _
      %p3853 = scmp.le.s32.totalorder 2, %s22
      // Predicated region
      $region77: #{tpu_custom_call.1} parent=5 // pred_check
        %p3854 = pneg %p3853
      $region78: #{tpu_custom_call.1} parent=5 // pred_check_branch
        %3856 = sbr.rel (%p3854) target = $region80
      $region79: #{tpu_custom_call.1} parent=5 // pred_region
        %s3857 = ssub.s32 %s22, 2
        // Predicated region
        $region81: #{tpu_custom_call.1} parent=79 // pred_check
          %p3858 = pneg %p287
        $region82: #{tpu_custom_call.1} parent=79 // pred_check_branch
          %3860 = sbr.rel (%p3858) target = $region84
        $region83: #{tpu_custom_call.1} parent=79 // pred_region
          %s3861 = sand.u32 %s272, 1
          %s3862 = scalar_lea.sflag [#allocation3], %s3861
          %s3863 = sand.u32 %s272, 1
          %s3864 = smul.addr %s3863, 4
          %s3865 = scalar_lea.vmem [#allocation7], %s3864
          %3866 = dma.done %s3862, 64
        $region84: #{tpu_custom_call.1} parent=79 // pred_fallthru
          _
      $region80: #{tpu_custom_call.1} parent=5 // pred_fallthru
        _
    $region6: #{tpu_custom_call.1} parent=1 // loop_footer
      %s26 = sadd.s32 1, %s22
    $region7: #{tpu_custom_call.1} parent=1 // loop_footer_branch
      %21 = sbr.rel target = $region3
    $region8: #{tpu_custom_call.1} parent=1 // loop_exit
      _
    %3867 = vsyncpa [#allocation3], 1
    %s3868 = scalar_lea.sflag [#allocation3], 1
    %3869 = vsyncpa %s3868, 1
    %3870 = vsyncpa [#allocation4], 1
    %s3871 = scalar_lea.sflag [#allocation4], 1
    %3872 = vsyncpa %s3871, 1
    %3873 = vsyncpa [#allocation6], 1

</llo_original>
